<compile_context>
chip_gen: v7x
topology: tpu7x:2x2x1
jax: 0.10.0
libtpu: 0.0.40
codegen_flags: <defaults>
</compile_context>

<pallas_src>
import jax
import jax.numpy as jnp
from jax.experimental import pallas as pl
from jax.experimental.pallas import tpu as pltpu


def make_emg_kernel(num_layers, input_size, hidden_size, time_chunk, seq_len):
    H, L, Tc, I, S = hidden_size, num_layers, time_chunk, input_size, seq_len
    LH = L * H
    n_w = 4 * L                        # per layer: w_in, b_in, w_h, b_h
    needs_mask = (S % Tc) != 0         # padded timesteps exist in the last chunk

    def kernel(*args):
        x_ref = args[0]                # (TB, Tc, I)
        w_refs = args[1:1 + n_w]
        out_ref = args[1 + n_w]        # (TB, Tc, LH)
        con_ref = args[2 + n_w]        # (TB, LH) resident output block
        m_carry = args[3 + n_w]        # (TB, LH) VMEM scratch (packed m state)
        c_carry = args[4 + n_w]        # (TB, LH) VMEM scratch (packed c state)

        t = pl.program_id(1)

        @pl.when(t == 0)
        def _():
            # hidden=None in the PyTorch forward -> zero-initialized (m, c).
            m_carry[...] = jnp.zeros_like(m_carry)
            c_carry[...] = jnp.zeros_like(c_carry)

        # Weights: loaded once per chunk (constant index maps -> DMA'd once).
        Ws = [w_refs[i][...] for i in range(n_w)]

        # Carried state -> registers for the whole chunk (single VMEM load
        # here, single store at the end; no per-step round trips).
        m_all = m_carry[...]
        c_all = c_carry[...]
        m = [m_all[:, l * H:(l + 1) * H] for l in range(L)]
        c = [c_all[:, l * H:(l + 1) * H] for l in range(L)]

        x_blk = x_ref[...]             # (TB, Tc, I)
        TB = x_blk.shape[0]

        # ---- hoisted layer-0 input transform (no recurrent dependence):
        # all Tc timesteps in one MXU matmul with real row utilization.
        w_in0, b_in0 = Ws[0], Ws[1]
        x2d = x_blk.reshape(TB * Tc, I).astype(w_in0.dtype)
        ti0_all = (jnp.dot(x2d, w_in0, preferred_element_type=jnp.float32)
                   + b_in0).reshape(TB, Tc, H)

        outs = []
        for tt in range(Tc):           # unrolled recurrent time loop
            prev_out = None
            for l in range(L):
                if l == 0:
                    ti = ti0_all[:, tt, :]
                else:
                    w_in, b_in = Ws[4 * l], Ws[4 * l + 1]
                    ti = jnp.dot(prev_out.astype(w_in.dtype), w_in,
                                 preferred_element_type=jnp.float32) + b_in
                w_h, b_h = Ws[4 * l + 2], Ws[4 * l + 3]
                gates = jnp.dot(m[l].astype(w_h.dtype), w_h,
                                preferred_element_type=jnp.float32) + b_h
                retain = jax.nn.sigmoid(gates[:, :H])
                merge = jax.nn.sigmoid(gates[:, H:])
                c_next = jnp.tanh(c[l] + retain * ti)
                # == (1 - merge) * ti + merge * c_next, one fewer VPU op.
                m_next = ti + merge * (c_next - ti)
                if needs_mask:
                    # Padded (t*Tc+tt >= S) steps must not advance the state,
                    # otherwise the carried state / final `con` would be wrong.
                    keep = (t * Tc + tt < S).astype(jnp.float32)
                    m_next = keep * m_next + (1.0 - keep) * m[l]
                    c_next = keep * c_next + (1.0 - keep) * c[l]
                m[l], c[l] = m_next, c_next
                prev_out = m_next
            outs.append(jnp.concatenate(m, axis=-1))       # (TB, LH)

        # One lane-dense store per chunk for this chunk's per-step outputs.
        out_ref[...] = jnp.stack(outs, axis=1).astype(out_ref.dtype)

        # Carry the packed state to the next time chunk.
        m_carry[...] = jnp.concatenate(m, axis=-1)
        c_carry[...] = jnp.concatenate(c, axis=-1)

        # Final cell state written exactly once, on the last time chunk.
        @pl.when(t == pl.num_programs(1) - 1)
        def _():
            con_ref[...] = c_carry[...].astype(con_ref.dtype)

    return kernel


def _round_up(n, m):
    return ((n + m - 1) // m) * m


def _pick_batch_tile(B):
    """Batch tile: 8-aligned (sublane), as close to 128 MXU rows as useful,
    and >= 2 tiles for larger batches so v7x's two TensorCores both get work.
    Tiny batches run as a single (possibly ragged) tile."""
    if B <= 8:
        return B
    if B <= 16:
        return 8
    return min(_round_up((B + 1) // 2, 8), 128)


def _pick_time_chunk(S, TB, I, LH):
    """Timesteps per grid step: >= 8 to amortize per-step pipeline overhead,
    a multiple of 8 (legal block dim) unless it covers all of S, and small
    enough that double-buffered x/out blocks stay a few MiB."""
    if S <= 16:
        return S
    tc = 16
    while tc > 8 and 4 * TB * tc * (I + LH) > (8 << 20):
        tc -= 8
    return tc


def emg_forward(x, params, hidden_size, num_layers, compute_dtype=jnp.float32):
    """x: (batch, seq, input_size) float32.  Returns (final_output, mem, con)
    like EMG.forward (final_output and mem are the same tensor)."""
    B, S, I = x.shape
    H, L = hidden_size, num_layers
    LH = L * H

    TB = _pick_batch_tile(B)
    Tc = _pick_time_chunk(S, TB, I, LH)
    nb, nt = pl.cdiv(B, TB), pl.cdiv(S, Tc)
    B_pad, S_pad = nb * TB, nt * Tc
    if (B_pad, S_pad) != (B, S):
        x = jnp.pad(x, ((0, B_pad - B), (0, S_pad - S), (0, 0)))

    # Flatten per-layer params; matmul weights optionally cast (bf16 gives
    # v6e/v7x MXU peak), biases stay f32 (added post f32-accumulated dot).
    flat_w = []
    for (w_in, b_in, w_h, b_h) in params:
        flat_w += [w_in.astype(compute_dtype), b_in.astype(jnp.float32),
                   w_h.astype(compute_dtype), b_h.astype(jnp.float32)]

    in_specs = [pl.BlockSpec((TB, Tc, I), lambda b, t: (b, t, 0))]
    in_specs += [pl.BlockSpec(w.shape, lambda b, t: (0, 0)) for w in flat_w]

    out_shape = (
        jax.ShapeDtypeStruct((B_pad, S_pad, LH), jnp.float32),  # packed m(t)
        jax.ShapeDtypeStruct((B_pad, LH), jnp.float32),         # final packed c
    )
    out_specs = (
        pl.BlockSpec((TB, Tc, LH), lambda b, t: (b, t, 0)),
        pl.BlockSpec((TB, LH), lambda b, t: (b, 0)),
    )

    # Advisory cost estimate so XLA schedules sensibly around the call.
    w_elems = sum(int(w.size) for w in flat_w)
    flops = (2 * B * S * (I * H + 2 * H * H)
             + 2 * B * S * (L - 1) * (H * H + 2 * H * H)
             + 8 * B * S * L * H)
    cost = pl.CostEstimate(
        flops=int(flops),
        transcendentals=int(3 * B * S * L * H),
        bytes_accessed=int(4 * (B * S * I + B * S * LH + B * LH) + 4 * w_elems))

    # VMEM budget: double-buffered x/out blocks + weights + carry scratch.
    blk_bytes = 4 * TB * Tc * (I + LH)
    need = 2 * blk_bytes + 2 * 4 * w_elems + 3 * 4 * TB * LH
    vmem_limit = int(min(max(2 * need, 32 << 20), 64 << 20))

    out_bsl, con = pl.pallas_call(
        make_emg_kernel(L, I, H, Tc, S),
        out_shape=out_shape,
        grid=(nb, nt),
        in_specs=in_specs,
        out_specs=out_specs,
        scratch_shapes=[pltpu.VMEM((TB, LH), jnp.float32),   # packed m carry
                        pltpu.VMEM((TB, LH), jnp.float32)],  # packed c carry
        compiler_params=pltpu.CompilerParams(
            dimension_semantics=("parallel", "arbitrary"),
            vmem_limit_bytes=vmem_limit),
        cost_estimate=cost,
    )(x, *flat_w)

    output = out_bsl[:B, :S].reshape(B, S, L, H)      # metadata-only reshape
    con_bl = con[:B].reshape(B, L, H)
    # TODO(synk): callers that only need the final state should use con_bl and
    # skip this (B, S, L, H) broadcast (it is an extra HBM pass).
    con_exp = jnp.broadcast_to(con_bl[:, None], (B, S, L, H))
    return output, output, con_exp


def init_params(key, input_size, hidden_size, num_layers):
    """Deterministic xavier_uniform weights / zero biases (matches init_weights)."""
    params = []
    for l in range(num_layers):
        in_dim = input_size if l == 0 else hidden_size
        key, k1, k2 = jax.random.split(key, 3)
        bi = (6.0 / (in_dim + hidden_size)) ** 0.5
        w_in = jax.random.uniform(k1, (in_dim, hidden_size), jnp.float32, -bi, bi)
        b_in = jnp.zeros((1, hidden_size), jnp.float32)
        bh = (6.0 / (hidden_size + 2 * hidden_size)) ** 0.5
        w_h = jax.random.uniform(k2, (hidden_size, 2 * hidden_size),
                                 jnp.float32, -bh, bh)
        b_h = jnp.zeros((1, 2 * hidden_size), jnp.float32)
        params.append((w_in, b_in, w_h, b_h))
    return params


def emg_reference(x, params, hidden_size, num_layers):
    """Pure-JAX reference mirroring the PyTorch EMGCell math line-by-line."""
    B, S, _ = x.shape
    H, L = hidden_size, num_layers
    m = [jnp.zeros((B, H), jnp.float32) for _ in range(L)]
    c = [jnp.zeros((B, H), jnp.float32) for _ in range(L)]
    outs = []
    for t in range(S):
        inp = x[:, t, :]
        layer_out = []
        for l in range(L):
            w_in, b_in, w_h, b_h = params[l]
            ti = inp @ w_in + b_in
            gates = m[l] @ w_h + b_h
            retain = jax.nn.sigmoid(gates[:, :H])
            merge = jax.nn.sigmoid(gates[:, H:])
            c_next = jnp.tanh(c[l] + retain * ti)
            m_next = (1.0 - merge) * ti + merge * c_next
            m[l], c[l] = m_next, c_next
            inp = m_next
            layer_out.append(m_next)
        outs.append(jnp.stack(layer_out, axis=1))
    output = jnp.stack(outs, axis=1)                      # (B, S, L, H)
    con = jnp.broadcast_to(jnp.stack(c, axis=1)[:, None], output.shape)
    return output, output, con


if __name__ == "__main__":
    batch, seq_len = 2, 8
    input_size, hidden_size, num_layers = 16, 32, 2

    key = jax.random.PRNGKey(0)
    key, kx = jax.random.split(key)
    x = jax.random.normal(kx, (batch, seq_len, input_size), jnp.float32)
    params = init_params(key, input_size, hidden_size, num_layers)

    final_out, mem, con = emg_forward(x, params, hidden_size, num_layers)
    jax.block_until_ready((final_out, mem, con))

    ref_out, ref_mem, ref_con = emg_reference(x, params, hidden_size, num_layers)
    assert final_out.shape == (batch, seq_len, num_layers, hidden_size)
    assert con.shape == (batch, seq_len, num_layers, hidden_size)
    assert jnp.allclose(final_out, ref_out, atol=1e-5, rtol=1e-5)
    assert jnp.allclose(mem, ref_mem, atol=1e-5, rtol=1e-5)
    assert jnp.allclose(con, ref_con, atol=1e-5, rtol=1e-5)

    print("KERNEL_OK")
</pallas_src>

<mosaic_0001>
module attributes {stable_mosaic.version = 11 : i64} {
  func.func @kernel(%arg0: i32, %arg1: i32, %arg2: memref<2x8x16xf32, #tpu.memory_space<vmem>>, %arg3: memref<16x32xf32, #tpu.memory_space<vmem>>, %arg4: memref<1x32xf32, #tpu.memory_space<vmem>>, %arg5: memref<32x64xf32, #tpu.memory_space<vmem>>, %arg6: memref<1x64xf32, #tpu.memory_space<vmem>>, %arg7: memref<32x32xf32, #tpu.memory_space<vmem>>, %arg8: memref<1x32xf32, #tpu.memory_space<vmem>>, %arg9: memref<32x64xf32, #tpu.memory_space<vmem>>, %arg10: memref<1x64xf32, #tpu.memory_space<vmem>>, %arg11: memref<2x8x64xf32, #tpu.memory_space<vmem>>, %arg12: memref<2x64xf32, #tpu.memory_space<vmem>>, %arg13: memref<2x64xf32, #tpu.memory_space<vmem>>, %arg14: memref<2x64xf32, #tpu.memory_space<vmem>>) attributes {dimension_semantics = [#tpu.dimension_semantics<parallel>, #tpu.dimension_semantics<arbitrary>], iteration_bounds = array<i64: 1, 1>, scalar_prefetch = 0 : i64, scratch_operands = 2 : i64, tpu.core_type = #tpu.core_type<tc>, window_params = [{transform_indices = @transform_0, window_bounds = array<i64: 2, 8, 16>}, {pipeline_mode = #tpu.pipeline_mode<synchronous>, transform_indices = @transform_1, window_bounds = array<i64: 16, 32>}, {pipeline_mode = #tpu.pipeline_mode<synchronous>, transform_indices = @transform_2, window_bounds = array<i64: 1, 32>}, {pipeline_mode = #tpu.pipeline_mode<synchronous>, transform_indices = @transform_3, window_bounds = array<i64: 32, 64>}, {pipeline_mode = #tpu.pipeline_mode<synchronous>, transform_indices = @transform_4, window_bounds = array<i64: 1, 64>}, {pipeline_mode = #tpu.pipeline_mode<synchronous>, transform_indices = @transform_5, window_bounds = array<i64: 32, 32>}, {pipeline_mode = #tpu.pipeline_mode<synchronous>, transform_indices = @transform_6, window_bounds = array<i64: 1, 32>}, {pipeline_mode = #tpu.pipeline_mode<synchronous>, transform_indices = @transform_7, window_bounds = array<i64: 32, 64>}, {pipeline_mode = #tpu.pipeline_mode<synchronous>, transform_indices = @transform_8, window_bounds = array<i64: 1, 64>}, {transform_indices = @transform_9, window_bounds = array<i64: 2, 8, 64>}, {transform_indices = @transform_10, window_bounds = array<i64: 2, 64>}]} {
    %c0_i32 = arith.constant 0 : i32
    %0 = arith.cmpi eq, %arg1, %c0_i32 : i32
    %1 = arith.extui %0 : i1 to i32
    %c0_i32_0 = arith.constant 0 : i32
    %2 = arith.cmpi ne, %1, %c0_i32_0 : i32
    scf.if %2 {
      %cst_88 = arith.constant 0.000000e+00 : f32
      %424 = vector.broadcast %cst_88 : f32 to vector<2x64xf32>
      %c0_89 = arith.constant 0 : index
      %c0_90 = arith.constant 0 : index
      %425 = vector.load %arg13[%c0_89, %c0_90] : memref<2x64xf32, #tpu.memory_space<vmem>>, vector<2x64xf32>
      tpu.vector_store %arg13[%c0_89, %c0_90], %424 {strides = array<i32>} : memref<2x64xf32, #tpu.memory_space<vmem>>, vector<2x64xf32>,
      %cst_91 = arith.constant 0.000000e+00 : f32
      %426 = vector.broadcast %cst_91 : f32 to vector<2x64xf32>
      %c0_92 = arith.constant 0 : index
      %c0_93 = arith.constant 0 : index
      %427 = vector.load %arg14[%c0_92, %c0_93] : memref<2x64xf32, #tpu.memory_space<vmem>>, vector<2x64xf32>
      tpu.vector_store %arg14[%c0_92, %c0_93], %426 {strides = array<i32>} : memref<2x64xf32, #tpu.memory_space<vmem>>, vector<2x64xf32>,
    } else {
    }
    %c0 = arith.constant 0 : index
    %c0_1 = arith.constant 0 : index
    %3 = vector.load %arg3[%c0, %c0_1] : memref<16x32xf32, #tpu.memory_space<vmem>>, vector<16x32xf32>
    %c0_2 = arith.constant 0 : index
    %c0_3 = arith.constant 0 : index
    %4 = vector.load %arg4[%c0_2, %c0_3] : memref<1x32xf32, #tpu.memory_space<vmem>>, vector<1x32xf32>
    %c0_4 = arith.constant 0 : index
    %c0_5 = arith.constant 0 : index
    %5 = vector.load %arg5[%c0_4, %c0_5] : memref<32x64xf32, #tpu.memory_space<vmem>>, vector<32x64xf32>
    %c0_6 = arith.constant 0 : index
    %c0_7 = arith.constant 0 : index
    %6 = vector.load %arg6[%c0_6, %c0_7] : memref<1x64xf32, #tpu.memory_space<vmem>>, vector<1x64xf32>
    %c0_8 = arith.constant 0 : index
    %c0_9 = arith.constant 0 : index
    %7 = vector.load %arg7[%c0_8, %c0_9] : memref<32x32xf32, #tpu.memory_space<vmem>>, vector<32x32xf32>
    %c0_10 = arith.constant 0 : index
    %c0_11 = arith.constant 0 : index
    %8 = vector.load %arg8[%c0_10, %c0_11] : memref<1x32xf32, #tpu.memory_space<vmem>>, vector<1x32xf32>
    %c0_12 = arith.constant 0 : index
    %c0_13 = arith.constant 0 : index
    %9 = vector.load %arg9[%c0_12, %c0_13] : memref<32x64xf32, #tpu.memory_space<vmem>>, vector<32x64xf32>
    %c0_14 = arith.constant 0 : index
    %c0_15 = arith.constant 0 : index
    %10 = vector.load %arg10[%c0_14, %c0_15] : memref<1x64xf32, #tpu.memory_space<vmem>>, vector<1x64xf32>
    %c0_16 = arith.constant 0 : index
    %c0_17 = arith.constant 0 : index
    %11 = vector.load %arg13[%c0_16, %c0_17] : memref<2x64xf32, #tpu.memory_space<vmem>>, vector<2x64xf32>
    %c0_18 = arith.constant 0 : index
    %c0_19 = arith.constant 0 : index
    %12 = vector.load %arg14[%c0_18, %c0_19] : memref<2x64xf32, #tpu.memory_space<vmem>>, vector<2x64xf32>
    %13 = vector.extract_strided_slice %11 {offsets = [0, 0], sizes = [2, 32], strides = [1, 1]} : vector<2x64xf32> to vector<2x32xf32>
    %14 = vector.extract_strided_slice %11 {offsets = [0, 32], sizes = [2, 32], strides = [1, 1]} : vector<2x64xf32> to vector<2x32xf32>
    %15 = vector.extract_strided_slice %12 {offsets = [0, 0], sizes = [2, 32], strides = [1, 1]} : vector<2x64xf32> to vector<2x32xf32>
    %16 = vector.extract_strided_slice %12 {offsets = [0, 32], sizes = [2, 32], strides = [1, 1]} : vector<2x64xf32> to vector<2x32xf32>
    %c0_20 = arith.constant 0 : index
    %c0_21 = arith.constant 0 : index
    %c0_22 = arith.constant 0 : index
    %17 = vector.load %arg2[%c0_20, %c0_21, %c0_22] : memref<2x8x16xf32, #tpu.memory_space<vmem>>, vector<2x8x16xf32>
    %18 = vector.shape_cast %17 : vector<2x8x16xf32> to vector<16x16xf32>
    %cst = arith.constant dense<0.000000e+00> : vector<16x32xf32>
    %19 = tpu.matmul %18, %3, %cst {dimension_numbers = #tpu.dot_dimension_numbers<[1], [0], [0], [1], [0, 0, 1, 1], [], []>} : vector<16x16xf32>, vector<16x32xf32>, vector<16x32xf32> -> vector<16x32xf32>
    %20 = vector.broadcast %4 : vector<1x32xf32> to vector<16x32xf32>
    %21 = arith.addf %19, %20 : vector<16x32xf32>
    %22 = vector.shape_cast %21 : vector<16x32xf32> to vector<2x8x32xf32>
    %23 = vector.extract_strided_slice %22 {offsets = [0, 0, 0], sizes = [2, 1, 32], strides = [1, 1, 1]} : vector<2x8x32xf32> to vector<2x1x32xf32>
    %24 = vector.shape_cast %23 : vector<2x1x32xf32> to vector<2x32xf32>
    %cst_23 = arith.constant dense<0.000000e+00> : vector<2x64xf32>
    %25 = tpu.matmul %13, %5, %cst_23 {dimension_numbers = #tpu.dot_dimension_numbers<[1], [0], [0], [1], [0, 0, 1, 1], [], []>} : vector<2x32xf32>, vector<32x64xf32>, vector<2x64xf32> -> vector<2x64xf32>
    %26 = vector.broadcast %6 : vector<1x64xf32> to vector<2x64xf32>
    %27 = arith.addf %25, %26 : vector<2x64xf32>
    %28 = vector.extract_strided_slice %27 {offsets = [0, 0], sizes = [2, 32], strides = [1, 1]} : vector<2x64xf32> to vector<2x32xf32>
    %29 = arith.negf %28 : vector<2x32xf32>
    %30 = math.exp %29 : vector<2x32xf32>
    %cst_24 = arith.constant 1.000000e+00 : f32
    %31 = vector.broadcast %cst_24 : f32 to vector<2x32xf32>
    %32 = arith.addf %31, %30 : vector<2x32xf32>
    %33 = arith.divf %31, %32 : vector<2x32xf32>
    %34 = vector.extract_strided_slice %27 {offsets = [0, 32], sizes = [2, 32], strides = [1, 1]} : vector<2x64xf32> to vector<2x32xf32>
    %35 = arith.negf %34 : vector<2x32xf32>
    %36 = math.exp %35 : vector<2x32xf32>
    %cst_25 = arith.constant 1.000000e+00 : f32
    %37 = vector.broadcast %cst_25 : f32 to vector<2x32xf32>
    %38 = arith.addf %37, %36 : vector<2x32xf32>
    %39 = arith.divf %37, %38 : vector<2x32xf32>
    %40 = arith.mulf %33, %24 : vector<2x32xf32>
    %41 = arith.addf %15, %40 : vector<2x32xf32>
    %42 = math.tanh %41 : vector<2x32xf32>
    %43 = arith.subf %42, %24 : vector<2x32xf32>
    %44 = arith.mulf %39, %43 : vector<2x32xf32>
    %45 = arith.addf %24, %44 : vector<2x32xf32>
    %cst_26 = arith.constant dense<0.000000e+00> : vector<2x32xf32>
    %46 = tpu.matmul %45, %7, %cst_26 {dimension_numbers = #tpu.dot_dimension_numbers<[1], [0], [0], [1], [0, 0, 1, 1], [], []>} : vector<2x32xf32>, vector<32x32xf32>, vector<2x32xf32> -> vector<2x32xf32>
    %47 = vector.broadcast %8 : vector<1x32xf32> to vector<2x32xf32>
    %48 = arith.addf %46, %47 : vector<2x32xf32>
    %cst_27 = arith.constant dense<0.000000e+00> : vector<2x64xf32>
    %49 = tpu.matmul %14, %9, %cst_27 {dimension_numbers = #tpu.dot_dimension_numbers<[1], [0], [0], [1], [0, 0, 1, 1], [], []>} : vector<2x32xf32>, vector<32x64xf32>, vector<2x64xf32> -> vector<2x64xf32>
    %50 = vector.broadcast %10 : vector<1x64xf32> to vector<2x64xf32>
    %51 = arith.addf %49, %50 : vector<2x64xf32>
    %52 = vector.extract_strided_slice %51 {offsets = [0, 0], sizes = [2, 32], strides = [1, 1]} : vector<2x64xf32> to vector<2x32xf32>
    %53 = arith.negf %52 : vector<2x32xf32>
    %54 = math.exp %53 : vector<2x32xf32>
    %cst_28 = arith.constant 1.000000e+00 : f32
    %55 = vector.broadcast %cst_28 : f32 to vector<2x32xf32>
    %56 = arith.addf %55, %54 : vector<2x32xf32>
    %57 = arith.divf %55, %56 : vector<2x32xf32>
    %58 = vector.extract_strided_slice %51 {offsets = [0, 32], sizes = [2, 32], strides = [1, 1]} : vector<2x64xf32> to vector<2x32xf32>
    %59 = arith.negf %58 : vector<2x32xf32>
    %60 = math.exp %59 : vector<2x32xf32>
    %cst_29 = arith.constant 1.000000e+00 : f32
    %61 = vector.broadcast %cst_29 : f32 to vector<2x32xf32>
    %62 = arith.addf %61, %60 : vector<2x32xf32>
    %63 = arith.divf %61, %62 : vector<2x32xf32>
    %64 = arith.mulf %57, %48 : vector<2x32xf32>
    %65 = arith.addf %16, %64 : vector<2x32xf32>
    %66 = math.tanh %65 : vector<2x32xf32>
    %67 = arith.subf %66, %48 : vector<2x32xf32>
    %68 = arith.mulf %63, %67 : vector<2x32xf32>
    %69 = arith.addf %48, %68 : vector<2x32xf32>
    %70 = tpu.concatenate %45, %69 in 1 : vector<2x32xf32>, vector<2x32xf32> -> vector<2x64xf32>
    %71 = vector.extract_strided_slice %22 {offsets = [0, 1, 0], sizes = [2, 1, 32], strides = [1, 1, 1]} : vector<2x8x32xf32> to vector<2x1x32xf32>
    %72 = vector.shape_cast %71 : vector<2x1x32xf32> to vector<2x32xf32>
    %cst_30 = arith.constant dense<0.000000e+00> : vector<2x64xf32>
    %73 = tpu.matmul %45, %5, %cst_30 {dimension_numbers = #tpu.dot_dimension_numbers<[1], [0], [0], [1], [0, 0, 1, 1], [], []>} : vector<2x32xf32>, vector<32x64xf32>, vector<2x64xf32> -> vector<2x64xf32>
    %74 = vector.broadcast %6 : vector<1x64xf32> to vector<2x64xf32>
    %75 = arith.addf %73, %74 : vector<2x64xf32>
    %76 = vector.extract_strided_slice %75 {offsets = [0, 0], sizes = [2, 32], strides = [1, 1]} : vector<2x64xf32> to vector<2x32xf32>
    %77 = arith.negf %76 : vector<2x32xf32>
    %78 = math.exp %77 : vector<2x32xf32>
    %cst_31 = arith.constant 1.000000e+00 : f32
    %79 = vector.broadcast %cst_31 : f32 to vector<2x32xf32>
    %80 = arith.addf %79, %78 : vector<2x32xf32>
    %81 = arith.divf %79, %80 : vector<2x32xf32>
    %82 = vector.extract_strided_slice %75 {offsets = [0, 32], sizes = [2, 32], strides = [1, 1]} : vector<2x64xf32> to vector<2x32xf32>
    %83 = arith.negf %82 : vector<2x32xf32>
    %84 = math.exp %83 : vector<2x32xf32>
    %cst_32 = arith.constant 1.000000e+00 : f32
    %85 = vector.broadcast %cst_32 : f32 to vector<2x32xf32>
    %86 = arith.addf %85, %84 : vector<2x32xf32>
    %87 = arith.divf %85, %86 : vector<2x32xf32>
    %88 = arith.mulf %81, %72 : vector<2x32xf32>
    %89 = arith.addf %42, %88 : vector<2x32xf32>
    %90 = math.tanh %89 : vector<2x32xf32>
    %91 = arith.subf %90, %72 : vector<2x32xf32>
    %92 = arith.mulf %87, %91 : vector<2x32xf32>
    %93 = arith.addf %72, %92 : vector<2x32xf32>
    %cst_33 = arith.constant dense<0.000000e+00> : vector<2x32xf32>
    %94 = tpu.matmul %93, %7, %cst_33 {dimension_numbers = #tpu.dot_dimension_numbers<[1], [0], [0], [1], [0, 0, 1, 1], [], []>} : vector<2x32xf32>, vector<32x32xf32>, vector<2x32xf32> -> vector<2x32xf32>
    %95 = vector.broadcast %8 : vector<1x32xf32> to vector<2x32xf32>
    %96 = arith.addf %94, %95 : vector<2x32xf32>
    %cst_34 = arith.constant dense<0.000000e+00> : vector<2x64xf32>
    %97 = tpu.matmul %69, %9, %cst_34 {dimension_numbers = #tpu.dot_dimension_numbers<[1], [0], [0], [1], [0, 0, 1, 1], [], []>} : vector<2x32xf32>, vector<32x64xf32>, vector<2x64xf32> -> vector<2x64xf32>
    %98 = vector.broadcast %10 : vector<1x64xf32> to vector<2x64xf32>
    %99 = arith.addf %97, %98 : vector<2x64xf32>
    %100 = vector.extract_strided_slice %99 {offsets = [0, 0], sizes = [2, 32], strides = [1, 1]} : vector<2x64xf32> to vector<2x32xf32>
    %101 = arith.negf %100 : vector<2x32xf32>
    %102 = math.exp %101 : vector<2x32xf32>
    %cst_35 = arith.constant 1.000000e+00 : f32
    %103 = vector.broadcast %cst_35 : f32 to vector<2x32xf32>
    %104 = arith.addf %103, %102 : vector<2x32xf32>
    %105 = arith.divf %103, %104 : vector<2x32xf32>
    %106 = vector.extract_strided_slice %99 {offsets = [0, 32], sizes = [2, 32], strides = [1, 1]} : vector<2x64xf32> to vector<2x32xf32>
    %107 = arith.negf %106 : vector<2x32xf32>
    %108 = math.exp %107 : vector<2x32xf32>
    %cst_36 = arith.constant 1.000000e+00 : f32
    %109 = vector.broadcast %cst_36 : f32 to vector<2x32xf32>
    %110 = arith.addf %109, %108 : vector<2x32xf32>
    %111 = arith.divf %109, %110 : vector<2x32xf32>
    %112 = arith.mulf %105, %96 : vector<2x32xf32>
    %113 = arith.addf %66, %112 : vector<2x32xf32>
    %114 = math.tanh %113 : vector<2x32xf32>
    %115 = arith.subf %114, %96 : vector<2x32xf32>
    %116 = arith.mulf %111, %115 : vector<2x32xf32>
    %117 = arith.addf %96, %116 : vector<2x32xf32>
    %118 = tpu.concatenate %93, %117 in 1 : vector<2x32xf32>, vector<2x32xf32> -> vector<2x64xf32>
    %119 = vector.extract_strided_slice %22 {offsets = [0, 2, 0], sizes = [2, 1, 32], strides = [1, 1, 1]} : vector<2x8x32xf32> to vector<2x1x32xf32>
    %120 = vector.shape_cast %119 : vector<2x1x32xf32> to vector<2x32xf32>
    %cst_37 = arith.constant dense<0.000000e+00> : vector<2x64xf32>
    %121 = tpu.matmul %93, %5, %cst_37 {dimension_numbers = #tpu.dot_dimension_numbers<[1], [0], [0], [1], [0, 0, 1, 1], [], []>} : vector<2x32xf32>, vector<32x64xf32>, vector<2x64xf32> -> vector<2x64xf32>
    %122 = vector.broadcast %6 : vector<1x64xf32> to vector<2x64xf32>
    %123 = arith.addf %121, %122 : vector<2x64xf32>
    %124 = vector.extract_strided_slice %123 {offsets = [0, 0], sizes = [2, 32], strides = [1, 1]} : vector<2x64xf32> to vector<2x32xf32>
    %125 = arith.negf %124 : vector<2x32xf32>
    %126 = math.exp %125 : vector<2x32xf32>
    %cst_38 = arith.constant 1.000000e+00 : f32
    %127 = vector.broadcast %cst_38 : f32 to vector<2x32xf32>
    %128 = arith.addf %127, %126 : vector<2x32xf32>
    %129 = arith.divf %127, %128 : vector<2x32xf32>
    %130 = vector.extract_strided_slice %123 {offsets = [0, 32], sizes = [2, 32], strides = [1, 1]} : vector<2x64xf32> to vector<2x32xf32>
    %131 = arith.negf %130 : vector<2x32xf32>
    %132 = math.exp %131 : vector<2x32xf32>
    %cst_39 = arith.constant 1.000000e+00 : f32
    %133 = vector.broadcast %cst_39 : f32 to vector<2x32xf32>
    %134 = arith.addf %133, %132 : vector<2x32xf32>
    %135 = arith.divf %133, %134 : vector<2x32xf32>
    %136 = arith.mulf %129, %120 : vector<2x32xf32>
    %137 = arith.addf %90, %136 : vector<2x32xf32>
    %138 = math.tanh %137 : vector<2x32xf32>
    %139 = arith.subf %138, %120 : vector<2x32xf32>
    %140 = arith.mulf %135, %139 : vector<2x32xf32>
    %141 = arith.addf %120, %140 : vector<2x32xf32>
    %cst_40 = arith.constant dense<0.000000e+00> : vector<2x32xf32>
    %142 = tpu.matmul %141, %7, %cst_40 {dimension_numbers = #tpu.dot_dimension_numbers<[1], [0], [0], [1], [0, 0, 1, 1], [], []>} : vector<2x32xf32>, vector<32x32xf32>, vector<2x32xf32> -> vector<2x32xf32>
    %143 = vector.broadcast %8 : vector<1x32xf32> to vector<2x32xf32>
    %144 = arith.addf %142, %143 : vector<2x32xf32>
    %cst_41 = arith.constant dense<0.000000e+00> : vector<2x64xf32>
    %145 = tpu.matmul %117, %9, %cst_41 {dimension_numbers = #tpu.dot_dimension_numbers<[1], [0], [0], [1], [0, 0, 1, 1], [], []>} : vector<2x32xf32>, vector<32x64xf32>, vector<2x64xf32> -> vector<2x64xf32>
    %146 = vector.broadcast %10 : vector<1x64xf32> to vector<2x64xf32>
    %147 = arith.addf %145, %146 : vector<2x64xf32>
    %148 = vector.extract_strided_slice %147 {offsets = [0, 0], sizes = [2, 32], strides = [1, 1]} : vector<2x64xf32> to vector<2x32xf32>
    %149 = arith.negf %148 : vector<2x32xf32>
    %150 = math.exp %149 : vector<2x32xf32>
    %cst_42 = arith.constant 1.000000e+00 : f32
    %151 = vector.broadcast %cst_42 : f32 to vector<2x32xf32>
    %152 = arith.addf %151, %150 : vector<2x32xf32>
    %153 = arith.divf %151, %152 : vector<2x32xf32>
    %154 = vector.extract_strided_slice %147 {offsets = [0, 32], sizes = [2, 32], strides = [1, 1]} : vector<2x64xf32> to vector<2x32xf32>
    %155 = arith.negf %154 : vector<2x32xf32>
    %156 = math.exp %155 : vector<2x32xf32>
    %cst_43 = arith.constant 1.000000e+00 : f32
    %157 = vector.broadcast %cst_43 : f32 to vector<2x32xf32>
    %158 = arith.addf %157, %156 : vector<2x32xf32>
    %159 = arith.divf %157, %158 : vector<2x32xf32>
    %160 = arith.mulf %153, %144 : vector<2x32xf32>
    %161 = arith.addf %114, %160 : vector<2x32xf32>
    %162 = math.tanh %161 : vector<2x32xf32>
    %163 = arith.subf %162, %144 : vector<2x32xf32>
    %164 = arith.mulf %159, %163 : vector<2x32xf32>
    %165 = arith.addf %144, %164 : vector<2x32xf32>
    %166 = tpu.concatenate %141, %165 in 1 : vector<2x32xf32>, vector<2x32xf32> -> vector<2x64xf32>
    %167 = vector.extract_strided_slice %22 {offsets = [0, 3, 0], sizes = [2, 1, 32], strides = [1, 1, 1]} : vector<2x8x32xf32> to vector<2x1x32xf32>
    %168 = vector.shape_cast %167 : vector<2x1x32xf32> to vector<2x32xf32>
    %cst_44 = arith.constant dense<0.000000e+00> : vector<2x64xf32>
    %169 = tpu.matmul %141, %5, %cst_44 {dimension_numbers = #tpu.dot_dimension_numbers<[1], [0], [0], [1], [0, 0, 1, 1], [], []>} : vector<2x32xf32>, vector<32x64xf32>, vector<2x64xf32> -> vector<2x64xf32>
    %170 = vector.broadcast %6 : vector<1x64xf32> to vector<2x64xf32>
    %171 = arith.addf %169, %170 : vector<2x64xf32>
    %172 = vector.extract_strided_slice %171 {offsets = [0, 0], sizes = [2, 32], strides = [1, 1]} : vector<2x64xf32> to vector<2x32xf32>
    %173 = arith.negf %172 : vector<2x32xf32>
    %174 = math.exp %173 : vector<2x32xf32>
    %cst_45 = arith.constant 1.000000e+00 : f32
    %175 = vector.broadcast %cst_45 : f32 to vector<2x32xf32>
    %176 = arith.addf %175, %174 : vector<2x32xf32>
    %177 = arith.divf %175, %176 : vector<2x32xf32>
    %178 = vector.extract_strided_slice %171 {offsets = [0, 32], sizes = [2, 32], strides = [1, 1]} : vector<2x64xf32> to vector<2x32xf32>
    %179 = arith.negf %178 : vector<2x32xf32>
    %180 = math.exp %179 : vector<2x32xf32>
    %cst_46 = arith.constant 1.000000e+00 : f32
    %181 = vector.broadcast %cst_46 : f32 to vector<2x32xf32>
    %182 = arith.addf %181, %180 : vector<2x32xf32>
    %183 = arith.divf %181, %182 : vector<2x32xf32>
    %184 = arith.mulf %177, %168 : vector<2x32xf32>
    %185 = arith.addf %138, %184 : vector<2x32xf32>
    %186 = math.tanh %185 : vector<2x32xf32>
    %187 = arith.subf %186, %168 : vector<2x32xf32>
    %188 = arith.mulf %183, %187 : vector<2x32xf32>
    %189 = arith.addf %168, %188 : vector<2x32xf32>
    %cst_47 = arith.constant dense<0.000000e+00> : vector<2x32xf32>
    %190 = tpu.matmul %189, %7, %cst_47 {dimension_numbers = #tpu.dot_dimension_numbers<[1], [0], [0], [1], [0, 0, 1, 1], [], []>} : vector<2x32xf32>, vector<32x32xf32>, vector<2x32xf32> -> vector<2x32xf32>
    %191 = vector.broadcast %8 : vector<1x32xf32> to vector<2x32xf32>
    %192 = arith.addf %190, %191 : vector<2x32xf32>
    %cst_48 = arith.constant dense<0.000000e+00> : vector<2x64xf32>
    %193 = tpu.matmul %165, %9, %cst_48 {dimension_numbers = #tpu.dot_dimension_numbers<[1], [0], [0], [1], [0, 0, 1, 1], [], []>} : vector<2x32xf32>, vector<32x64xf32>, vector<2x64xf32> -> vector<2x64xf32>
    %194 = vector.broadcast %10 : vector<1x64xf32> to vector<2x64xf32>
    %195 = arith.addf %193, %194 : vector<2x64xf32>
    %196 = vector.extract_strided_slice %195 {offsets = [0, 0], sizes = [2, 32], strides = [1, 1]} : vector<2x64xf32> to vector<2x32xf32>
    %197 = arith.negf %196 : vector<2x32xf32>
    %198 = math.exp %197 : vector<2x32xf32>
    %cst_49 = arith.constant 1.000000e+00 : f32
    %199 = vector.broadcast %cst_49 : f32 to vector<2x32xf32>
    %200 = arith.addf %199, %198 : vector<2x32xf32>
    %201 = arith.divf %199, %200 : vector<2x32xf32>
    %202 = vector.extract_strided_slice %195 {offsets = [0, 32], sizes = [2, 32], strides = [1, 1]} : vector<2x64xf32> to vector<2x32xf32>
    %203 = arith.negf %202 : vector<2x32xf32>
    %204 = math.exp %203 : vector<2x32xf32>
    %cst_50 = arith.constant 1.000000e+00 : f32
    %205 = vector.broadcast %cst_50 : f32 to vector<2x32xf32>
    %206 = arith.addf %205, %204 : vector<2x32xf32>
    %207 = arith.divf %205, %206 : vector<2x32xf32>
    %208 = arith.mulf %201, %192 : vector<2x32xf32>
    %209 = arith.addf %162, %208 : vector<2x32xf32>
    %210 = math.tanh %209 : vector<2x32xf32>
    %211 = arith.subf %210, %192 : vector<2x32xf32>
    %212 = arith.mulf %207, %211 : vector<2x32xf32>
    %213 = arith.addf %192, %212 : vector<2x32xf32>
    %214 = tpu.concatenate %189, %213 in 1 : vector<2x32xf32>, vector<2x32xf32> -> vector<2x64xf32>
    %215 = vector.extract_strided_slice %22 {offsets = [0, 4, 0], sizes = [2, 1, 32], strides = [1, 1, 1]} : vector<2x8x32xf32> to vector<2x1x32xf32>
    %216 = vector.shape_cast %215 : vector<2x1x32xf32> to vector<2x32xf32>
    %cst_51 = arith.constant dense<0.000000e+00> : vector<2x64xf32>
    %217 = tpu.matmul %189, %5, %cst_51 {dimension_numbers = #tpu.dot_dimension_numbers<[1], [0], [0], [1], [0, 0, 1, 1], [], []>} : vector<2x32xf32>, vector<32x64xf32>, vector<2x64xf32> -> vector<2x64xf32>
    %218 = vector.broadcast %6 : vector<1x64xf32> to vector<2x64xf32>
    %219 = arith.addf %217, %218 : vector<2x64xf32>
    %220 = vector.extract_strided_slice %219 {offsets = [0, 0], sizes = [2, 32], strides = [1, 1]} : vector<2x64xf32> to vector<2x32xf32>
    %221 = arith.negf %220 : vector<2x32xf32>
    %222 = math.exp %221 : vector<2x32xf32>
    %cst_52 = arith.constant 1.000000e+00 : f32
    %223 = vector.broadcast %cst_52 : f32 to vector<2x32xf32>
    %224 = arith.addf %223, %222 : vector<2x32xf32>
    %225 = arith.divf %223, %224 : vector<2x32xf32>
    %226 = vector.extract_strided_slice %219 {offsets = [0, 32], sizes = [2, 32], strides = [1, 1]} : vector<2x64xf32> to vector<2x32xf32>
    %227 = arith.negf %226 : vector<2x32xf32>
    %228 = math.exp %227 : vector<2x32xf32>
    %cst_53 = arith.constant 1.000000e+00 : f32
    %229 = vector.broadcast %cst_53 : f32 to vector<2x32xf32>
    %230 = arith.addf %229, %228 : vector<2x32xf32>
    %231 = arith.divf %229, %230 : vector<2x32xf32>
    %232 = arith.mulf %225, %216 : vector<2x32xf32>
    %233 = arith.addf %186, %232 : vector<2x32xf32>
    %234 = math.tanh %233 : vector<2x32xf32>
    %235 = arith.subf %234, %216 : vector<2x32xf32>
    %236 = arith.mulf %231, %235 : vector<2x32xf32>
    %237 = arith.addf %216, %236 : vector<2x32xf32>
    %cst_54 = arith.constant dense<0.000000e+00> : vector<2x32xf32>
    %238 = tpu.matmul %237, %7, %cst_54 {dimension_numbers = #tpu.dot_dimension_numbers<[1], [0], [0], [1], [0, 0, 1, 1], [], []>} : vector<2x32xf32>, vector<32x32xf32>, vector<2x32xf32> -> vector<2x32xf32>
    %239 = vector.broadcast %8 : vector<1x32xf32> to vector<2x32xf32>
    %240 = arith.addf %238, %239 : vector<2x32xf32>
    %cst_55 = arith.constant dense<0.000000e+00> : vector<2x64xf32>
    %241 = tpu.matmul %213, %9, %cst_55 {dimension_numbers = #tpu.dot_dimension_numbers<[1], [0], [0], [1], [0, 0, 1, 1], [], []>} : vector<2x32xf32>, vector<32x64xf32>, vector<2x64xf32> -> vector<2x64xf32>
    %242 = vector.broadcast %10 : vector<1x64xf32> to vector<2x64xf32>
    %243 = arith.addf %241, %242 : vector<2x64xf32>
    %244 = vector.extract_strided_slice %243 {offsets = [0, 0], sizes = [2, 32], strides = [1, 1]} : vector<2x64xf32> to vector<2x32xf32>
    %245 = arith.negf %244 : vector<2x32xf32>
    %246 = math.exp %245 : vector<2x32xf32>
    %cst_56 = arith.constant 1.000000e+00 : f32
    %247 = vector.broadcast %cst_56 : f32 to vector<2x32xf32>
    %248 = arith.addf %247, %246 : vector<2x32xf32>
    %249 = arith.divf %247, %248 : vector<2x32xf32>
    %250 = vector.extract_strided_slice %243 {offsets = [0, 32], sizes = [2, 32], strides = [1, 1]} : vector<2x64xf32> to vector<2x32xf32>
    %251 = arith.negf %250 : vector<2x32xf32>
    %252 = math.exp %251 : vector<2x32xf32>
    %cst_57 = arith.constant 1.000000e+00 : f32
    %253 = vector.broadcast %cst_57 : f32 to vector<2x32xf32>
    %254 = arith.addf %253, %252 : vector<2x32xf32>
    %255 = arith.divf %253, %254 : vector<2x32xf32>
    %256 = arith.mulf %249, %240 : vector<2x32xf32>
    %257 = arith.addf %210, %256 : vector<2x32xf32>
    %258 = math.tanh %257 : vector<2x32xf32>
    %259 = arith.subf %258, %240 : vector<2x32xf32>
    %260 = arith.mulf %255, %259 : vector<2x32xf32>
    %261 = arith.addf %240, %260 : vector<2x32xf32>
    %262 = tpu.concatenate %237, %261 in 1 : vector<2x32xf32>, vector<2x32xf32> -> vector<2x64xf32>
    %263 = vector.extract_strided_slice %22 {offsets = [0, 5, 0], sizes = [2, 1, 32], strides = [1, 1, 1]} : vector<2x8x32xf32> to vector<2x1x32xf32>
    %264 = vector.shape_cast %263 : vector<2x1x32xf32> to vector<2x32xf32>
    %cst_58 = arith.constant dense<0.000000e+00> : vector<2x64xf32>
    %265 = tpu.matmul %237, %5, %cst_58 {dimension_numbers = #tpu.dot_dimension_numbers<[1], [0], [0], [1], [0, 0, 1, 1], [], []>} : vector<2x32xf32>, vector<32x64xf32>, vector<2x64xf32> -> vector<2x64xf32>
    %266 = vector.broadcast %6 : vector<1x64xf32> to vector<2x64xf32>
    %267 = arith.addf %265, %266 : vector<2x64xf32>
    %268 = vector.extract_strided_slice %267 {offsets = [0, 0], sizes = [2, 32], strides = [1, 1]} : vector<2x64xf32> to vector<2x32xf32>
    %269 = arith.negf %268 : vector<2x32xf32>
    %270 = math.exp %269 : vector<2x32xf32>
    %cst_59 = arith.constant 1.000000e+00 : f32
    %271 = vector.broadcast %cst_59 : f32 to vector<2x32xf32>
    %272 = arith.addf %271, %270 : vector<2x32xf32>
    %273 = arith.divf %271, %272 : vector<2x32xf32>
    %274 = vector.extract_strided_slice %267 {offsets = [0, 32], sizes = [2, 32], strides = [1, 1]} : vector<2x64xf32> to vector<2x32xf32>
    %275 = arith.negf %274 : vector<2x32xf32>
    %276 = math.exp %275 : vector<2x32xf32>
    %cst_60 = arith.constant 1.000000e+00 : f32
    %277 = vector.broadcast %cst_60 : f32 to vector<2x32xf32>
    %278 = arith.addf %277, %276 : vector<2x32xf32>
    %279 = arith.divf %277, %278 : vector<2x32xf32>
    %280 = arith.mulf %273, %264 : vector<2x32xf32>
    %281 = arith.addf %234, %280 : vector<2x32xf32>
    %282 = math.tanh %281 : vector<2x32xf32>
    %283 = arith.subf %282, %264 : vector<2x32xf32>
    %284 = arith.mulf %279, %283 : vector<2x32xf32>
    %285 = arith.addf %264, %284 : vector<2x32xf32>
    %cst_61 = arith.constant dense<0.000000e+00> : vector<2x32xf32>
    %286 = tpu.matmul %285, %7, %cst_61 {dimension_numbers = #tpu.dot_dimension_numbers<[1], [0], [0], [1], [0, 0, 1, 1], [], []>} : vector<2x32xf32>, vector<32x32xf32>, vector<2x32xf32> -> vector<2x32xf32>
    %287 = vector.broadcast %8 : vector<1x32xf32> to vector<2x32xf32>
    %288 = arith.addf %286, %287 : vector<2x32xf32>
    %cst_62 = arith.constant dense<0.000000e+00> : vector<2x64xf32>
    %289 = tpu.matmul %261, %9, %cst_62 {dimension_numbers = #tpu.dot_dimension_numbers<[1], [0], [0], [1], [0, 0, 1, 1], [], []>} : vector<2x32xf32>, vector<32x64xf32>, vector<2x64xf32> -> vector<2x64xf32>
    %290 = vector.broadcast %10 : vector<1x64xf32> to vector<2x64xf32>
    %291 = arith.addf %289, %290 : vector<2x64xf32>
    %292 = vector.extract_strided_slice %291 {offsets = [0, 0], sizes = [2, 32], strides = [1, 1]} : vector<2x64xf32> to vector<2x32xf32>
    %293 = arith.negf %292 : vector<2x32xf32>
    %294 = math.exp %293 : vector<2x32xf32>
    %cst_63 = arith.constant 1.000000e+00 : f32
    %295 = vector.broadcast %cst_63 : f32 to vector<2x32xf32>
    %296 = arith.addf %295, %294 : vector<2x32xf32>
    %297 = arith.divf %295, %296 : vector<2x32xf32>
    %298 = vector.extract_strided_slice %291 {offsets = [0, 32], sizes = [2, 32], strides = [1, 1]} : vector<2x64xf32> to vector<2x32xf32>
    %299 = arith.negf %298 : vector<2x32xf32>
    %300 = math.exp %299 : vector<2x32xf32>
    %cst_64 = arith.constant 1.000000e+00 : f32
    %301 = vector.broadcast %cst_64 : f32 to vector<2x32xf32>
    %302 = arith.addf %301, %300 : vector<2x32xf32>
    %303 = arith.divf %301, %302 : vector<2x32xf32>
    %304 = arith.mulf %297, %288 : vector<2x32xf32>
    %305 = arith.addf %258, %304 : vector<2x32xf32>
    %306 = math.tanh %305 : vector<2x32xf32>
    %307 = arith.subf %306, %288 : vector<2x32xf32>
    %308 = arith.mulf %303, %307 : vector<2x32xf32>
    %309 = arith.addf %288, %308 : vector<2x32xf32>
    %310 = tpu.concatenate %285, %309 in 1 : vector<2x32xf32>, vector<2x32xf32> -> vector<2x64xf32>
    %311 = vector.extract_strided_slice %22 {offsets = [0, 6, 0], sizes = [2, 1, 32], strides = [1, 1, 1]} : vector<2x8x32xf32> to vector<2x1x32xf32>
    %312 = vector.shape_cast %311 : vector<2x1x32xf32> to vector<2x32xf32>
    %cst_65 = arith.constant dense<0.000000e+00> : vector<2x64xf32>
    %313 = tpu.matmul %285, %5, %cst_65 {dimension_numbers = #tpu.dot_dimension_numbers<[1], [0], [0], [1], [0, 0, 1, 1], [], []>} : vector<2x32xf32>, vector<32x64xf32>, vector<2x64xf32> -> vector<2x64xf32>
    %314 = vector.broadcast %6 : vector<1x64xf32> to vector<2x64xf32>
    %315 = arith.addf %313, %314 : vector<2x64xf32>
    %316 = vector.extract_strided_slice %315 {offsets = [0, 0], sizes = [2, 32], strides = [1, 1]} : vector<2x64xf32> to vector<2x32xf32>
    %317 = arith.negf %316 : vector<2x32xf32>
    %318 = math.exp %317 : vector<2x32xf32>
    %cst_66 = arith.constant 1.000000e+00 : f32
    %319 = vector.broadcast %cst_66 : f32 to vector<2x32xf32>
    %320 = arith.addf %319, %318 : vector<2x32xf32>
    %321 = arith.divf %319, %320 : vector<2x32xf32>
    %322 = vector.extract_strided_slice %315 {offsets = [0, 32], sizes = [2, 32], strides = [1, 1]} : vector<2x64xf32> to vector<2x32xf32>
    %323 = arith.negf %322 : vector<2x32xf32>
    %324 = math.exp %323 : vector<2x32xf32>
    %cst_67 = arith.constant 1.000000e+00 : f32
    %325 = vector.broadcast %cst_67 : f32 to vector<2x32xf32>
    %326 = arith.addf %325, %324 : vector<2x32xf32>
    %327 = arith.divf %325, %326 : vector<2x32xf32>
    %328 = arith.mulf %321, %312 : vector<2x32xf32>
    %329 = arith.addf %282, %328 : vector<2x32xf32>
    %330 = math.tanh %329 : vector<2x32xf32>
    %331 = arith.subf %330, %312 : vector<2x32xf32>
    %332 = arith.mulf %327, %331 : vector<2x32xf32>
    %333 = arith.addf %312, %332 : vector<2x32xf32>
    %cst_68 = arith.constant dense<0.000000e+00> : vector<2x32xf32>
    %334 = tpu.matmul %333, %7, %cst_68 {dimension_numbers = #tpu.dot_dimension_numbers<[1], [0], [0], [1], [0, 0, 1, 1], [], []>} : vector<2x32xf32>, vector<32x32xf32>, vector<2x32xf32> -> vector<2x32xf32>
    %335 = vector.broadcast %8 : vector<1x32xf32> to vector<2x32xf32>
    %336 = arith.addf %334, %335 : vector<2x32xf32>
    %cst_69 = arith.constant dense<0.000000e+00> : vector<2x64xf32>
    %337 = tpu.matmul %309, %9, %cst_69 {dimension_numbers = #tpu.dot_dimension_numbers<[1], [0], [0], [1], [0, 0, 1, 1], [], []>} : vector<2x32xf32>, vector<32x64xf32>, vector<2x64xf32> -> vector<2x64xf32>
    %338 = vector.broadcast %10 : vector<1x64xf32> to vector<2x64xf32>
    %339 = arith.addf %337, %338 : vector<2x64xf32>
    %340 = vector.extract_strided_slice %339 {offsets = [0, 0], sizes = [2, 32], strides = [1, 1]} : vector<2x64xf32> to vector<2x32xf32>
    %341 = arith.negf %340 : vector<2x32xf32>
    %342 = math.exp %341 : vector<2x32xf32>
    %cst_70 = arith.constant 1.000000e+00 : f32
    %343 = vector.broadcast %cst_70 : f32 to vector<2x32xf32>
    %344 = arith.addf %343, %342 : vector<2x32xf32>
    %345 = arith.divf %343, %344 : vector<2x32xf32>
    %346 = vector.extract_strided_slice %339 {offsets = [0, 32], sizes = [2, 32], strides = [1, 1]} : vector<2x64xf32> to vector<2x32xf32>
    %347 = arith.negf %346 : vector<2x32xf32>
    %348 = math.exp %347 : vector<2x32xf32>
    %cst_71 = arith.constant 1.000000e+00 : f32
    %349 = vector.broadcast %cst_71 : f32 to vector<2x32xf32>
    %350 = arith.addf %349, %348 : vector<2x32xf32>
    %351 = arith.divf %349, %350 : vector<2x32xf32>
    %352 = arith.mulf %345, %336 : vector<2x32xf32>
    %353 = arith.addf %306, %352 : vector<2x32xf32>
    %354 = math.tanh %353 : vector<2x32xf32>
    %355 = arith.subf %354, %336 : vector<2x32xf32>
    %356 = arith.mulf %351, %355 : vector<2x32xf32>
    %357 = arith.addf %336, %356 : vector<2x32xf32>
    %358 = tpu.concatenate %333, %357 in 1 : vector<2x32xf32>, vector<2x32xf32> -> vector<2x64xf32>
    %359 = vector.extract_strided_slice %22 {offsets = [0, 7, 0], sizes = [2, 1, 32], strides = [1, 1, 1]} : vector<2x8x32xf32> to vector<2x1x32xf32>
    %360 = vector.shape_cast %359 : vector<2x1x32xf32> to vector<2x32xf32>
    %cst_72 = arith.constant dense<0.000000e+00> : vector<2x64xf32>
    %361 = tpu.matmul %333, %5, %cst_72 {dimension_numbers = #tpu.dot_dimension_numbers<[1], [0], [0], [1], [0, 0, 1, 1], [], []>} : vector<2x32xf32>, vector<32x64xf32>, vector<2x64xf32> -> vector<2x64xf32>
    %362 = vector.broadcast %6 : vector<1x64xf32> to vector<2x64xf32>
    %363 = arith.addf %361, %362 : vector<2x64xf32>
    %364 = vector.extract_strided_slice %363 {offsets = [0, 0], sizes = [2, 32], strides = [1, 1]} : vector<2x64xf32> to vector<2x32xf32>
    %365 = arith.negf %364 : vector<2x32xf32>
    %366 = math.exp %365 : vector<2x32xf32>
    %cst_73 = arith.constant 1.000000e+00 : f32
    %367 = vector.broadcast %cst_73 : f32 to vector<2x32xf32>
    %368 = arith.addf %367, %366 : vector<2x32xf32>
    %369 = arith.divf %367, %368 : vector<2x32xf32>
    %370 = vector.extract_strided_slice %363 {offsets = [0, 32], sizes = [2, 32], strides = [1, 1]} : vector<2x64xf32> to vector<2x32xf32>
    %371 = arith.negf %370 : vector<2x32xf32>
    %372 = math.exp %371 : vector<2x32xf32>
    %cst_74 = arith.constant 1.000000e+00 : f32
    %373 = vector.broadcast %cst_74 : f32 to vector<2x32xf32>
    %374 = arith.addf %373, %372 : vector<2x32xf32>
    %375 = arith.divf %373, %374 : vector<2x32xf32>
    %376 = arith.mulf %369, %360 : vector<2x32xf32>
    %377 = arith.addf %330, %376 : vector<2x32xf32>
    %378 = math.tanh %377 : vector<2x32xf32>
    %379 = arith.subf %378, %360 : vector<2x32xf32>
    %380 = arith.mulf %375, %379 : vector<2x32xf32>
    %381 = arith.addf %360, %380 : vector<2x32xf32>
    %cst_75 = arith.constant dense<0.000000e+00> : vector<2x32xf32>
    %382 = tpu.matmul %381, %7, %cst_75 {dimension_numbers = #tpu.dot_dimension_numbers<[1], [0], [0], [1], [0, 0, 1, 1], [], []>} : vector<2x32xf32>, vector<32x32xf32>, vector<2x32xf32> -> vector<2x32xf32>
    %383 = vector.broadcast %8 : vector<1x32xf32> to vector<2x32xf32>
    %384 = arith.addf %382, %383 : vector<2x32xf32>
    %cst_76 = arith.constant dense<0.000000e+00> : vector<2x64xf32>
    %385 = tpu.matmul %357, %9, %cst_76 {dimension_numbers = #tpu.dot_dimension_numbers<[1], [0], [0], [1], [0, 0, 1, 1], [], []>} : vector<2x32xf32>, vector<32x64xf32>, vector<2x64xf32> -> vector<2x64xf32>
    %386 = vector.broadcast %10 : vector<1x64xf32> to vector<2x64xf32>
    %387 = arith.addf %385, %386 : vector<2x64xf32>
    %388 = vector.extract_strided_slice %387 {offsets = [0, 0], sizes = [2, 32], strides = [1, 1]} : vector<2x64xf32> to vector<2x32xf32>
    %389 = arith.negf %388 : vector<2x32xf32>
    %390 = math.exp %389 : vector<2x32xf32>
    %cst_77 = arith.constant 1.000000e+00 : f32
    %391 = vector.broadcast %cst_77 : f32 to vector<2x32xf32>
    %392 = arith.addf %391, %390 : vector<2x32xf32>
    %393 = arith.divf %391, %392 : vector<2x32xf32>
    %394 = vector.extract_strided_slice %387 {offsets = [0, 32], sizes = [2, 32], strides = [1, 1]} : vector<2x64xf32> to vector<2x32xf32>
    %395 = arith.negf %394 : vector<2x32xf32>
    %396 = math.exp %395 : vector<2x32xf32>
    %cst_78 = arith.constant 1.000000e+00 : f32
    %397 = vector.broadcast %cst_78 : f32 to vector<2x32xf32>
    %398 = arith.addf %397, %396 : vector<2x32xf32>
    %399 = arith.divf %397, %398 : vector<2x32xf32>
    %400 = arith.mulf %393, %384 : vector<2x32xf32>
    %401 = arith.addf %354, %400 : vector<2x32xf32>
    %402 = math.tanh %401 : vector<2x32xf32>
    %403 = arith.subf %402, %384 : vector<2x32xf32>
    %404 = arith.mulf %399, %403 : vector<2x32xf32>
    %405 = arith.addf %384, %404 : vector<2x32xf32>
    %406 = tpu.concatenate %381, %405 in 1 : vector<2x32xf32>, vector<2x32xf32> -> vector<2x64xf32>
    %407 = vector.shape_cast %70 : vector<2x64xf32> to vector<2x1x64xf32>
    %408 = vector.shape_cast %118 : vector<2x64xf32> to vector<2x1x64xf32>
    %409 = vector.shape_cast %166 : vector<2x64xf32> to vector<2x1x64xf32>
    %410 = vector.shape_cast %214 : vector<2x64xf32> to vector<2x1x64xf32>
    %411 = vector.shape_cast %262 : vector<2x64xf32> to vector<2x1x64xf32>
    %412 = vector.shape_cast %310 : vector<2x64xf32> to vector<2x1x64xf32>
    %413 = vector.shape_cast %358 : vector<2x64xf32> to vector<2x1x64xf32>
    %414 = vector.shape_cast %406 : vector<2x64xf32> to vector<2x1x64xf32>
    %415 = tpu.concatenate %407, %408, %409, %410, %411, %412, %413, %414 in 1 : vector<2x1x64xf32>, vector<2x1x64xf32>, vector<2x1x64xf32>, vector<2x1x64xf32>, vector<2x1x64xf32>, vector<2x1x64xf32>, vector<2x1x64xf32>, vector<2x1x64xf32> -> vector<2x8x64xf32>
    %c0_79 = arith.constant 0 : index
    %c0_80 = arith.constant 0 : index
    %c0_81 = arith.constant 0 : index
    %416 = vector.load %arg11[%c0_79, %c0_80, %c0_81] : memref<2x8x64xf32, #tpu.memory_space<vmem>>, vector<2x8x64xf32>
    tpu.vector_store %arg11[%c0_79, %c0_80, %c0_81], %415 {strides = array<i32>} : memref<2x8x64xf32, #tpu.memory_space<vmem>>, vector<2x8x64xf32>,
    %417 = tpu.concatenate %381, %405 in 1 : vector<2x32xf32>, vector<2x32xf32> -> vector<2x64xf32>
    %c0_82 = arith.constant 0 : index
    %c0_83 = arith.constant 0 : index
    %418 = vector.load %arg13[%c0_82, %c0_83] : memref<2x64xf32, #tpu.memory_space<vmem>>, vector<2x64xf32>
    tpu.vector_store %arg13[%c0_82, %c0_83], %417 {strides = array<i32>} : memref<2x64xf32, #tpu.memory_space<vmem>>, vector<2x64xf32>,
    %419 = tpu.concatenate %378, %402 in 1 : vector<2x32xf32>, vector<2x32xf32> -> vector<2x64xf32>
    %c0_84 = arith.constant 0 : index
    %c0_85 = arith.constant 0 : index
    %420 = vector.load %arg14[%c0_84, %c0_85] : memref<2x64xf32, #tpu.memory_space<vmem>>, vector<2x64xf32>
    tpu.vector_store %arg14[%c0_84, %c0_85], %419 {strides = array<i32>} : memref<2x64xf32, #tpu.memory_space<vmem>>, vector<2x64xf32>,
    %c0_i32_86 = arith.constant 0 : i32
    %421 = arith.cmpi eq, %arg1, %c0_i32_86 : i32
    %422 = arith.extui %421 : i1 to i32
    %c0_i32_87 = arith.constant 0 : i32
    %423 = arith.cmpi ne, %422, %c0_i32_87 : i32
    scf.if %423 {
      %c0_88 = arith.constant 0 : index
      %c0_89 = arith.constant 0 : index
      %424 = vector.load %arg14[%c0_88, %c0_89] : memref<2x64xf32, #tpu.memory_space<vmem>>, vector<2x64xf32>
      %c0_90 = arith.constant 0 : index
      %c0_91 = arith.constant 0 : index
      %425 = vector.load %arg12[%c0_90, %c0_91] : memref<2x64xf32, #tpu.memory_space<vmem>>, vector<2x64xf32>
      tpu.vector_store %arg12[%c0_90, %c0_91], %424 {strides = array<i32>} : memref<2x64xf32, #tpu.memory_space<vmem>>, vector<2x64xf32>,
    } else {
    }
    return
  }
  func.func @transform_0(%arg0: i32, %arg1: i32) -> (i32, i32, i32) {
    %c0_i32 = arith.constant 0 : i32
    %c0_i32_0 = arith.constant 0 : i32
    return %arg0, %arg1, %c0_i32 : i32, i32, i32
  }
  func.func @transform_1(%arg0: i32, %arg1: i32) -> (i32, i32) {
    %c0_i32 = arith.constant 0 : i32
    %c0_i32_0 = arith.constant 0 : i32
    %c0_i32_1 = arith.constant 0 : i32
    return %c0_i32, %c0_i32_0 : i32, i32
  }
  func.func @transform_2(%arg0: i32, %arg1: i32) -> (i32, i32) {
    %c0_i32 = arith.constant 0 : i32
    %c0_i32_0 = arith.constant 0 : i32
    %c0_i32_1 = arith.constant 0 : i32
    return %c0_i32, %c0_i32_0 : i32, i32
  }
  func.func @transform_3(%arg0: i32, %arg1: i32) -> (i32, i32) {
    %c0_i32 = arith.constant 0 : i32
    %c0_i32_0 = arith.constant 0 : i32
    %c0_i32_1 = arith.constant 0 : i32
    return %c0_i32, %c0_i32_0 : i32, i32
  }
  func.func @transform_4(%arg0: i32, %arg1: i32) -> (i32, i32) {
    %c0_i32 = arith.constant 0 : i32
    %c0_i32_0 = arith.constant 0 : i32
    %c0_i32_1 = arith.constant 0 : i32
    return %c0_i32, %c0_i32_0 : i32, i32
  }
  func.func @transform_5(%arg0: i32, %arg1: i32) -> (i32, i32) {
    %c0_i32 = arith.constant 0 : i32
    %c0_i32_0 = arith.constant 0 : i32
    %c0_i32_1 = arith.constant 0 : i32
    return %c0_i32, %c0_i32_0 : i32, i32
  }
  func.func @transform_6(%arg0: i32, %arg1: i32) -> (i32, i32) {
    %c0_i32 = arith.constant 0 : i32
    %c0_i32_0 = arith.constant 0 : i32
    %c0_i32_1 = arith.constant 0 : i32
    return %c0_i32, %c0_i32_0 : i32, i32
  }
  func.func @transform_7(%arg0: i32, %arg1: i32) -> (i32, i32) {
    %c0_i32 = arith.constant 0 : i32
    %c0_i32_0 = arith.constant 0 : i32
    %c0_i32_1 = arith.constant 0 : i32
    return %c0_i32, %c0_i32_0 : i32, i32
  }
  func.func @transform_8(%arg0: i32, %arg1: i32) -> (i32, i32) {
    %c0_i32 = arith.constant 0 : i32
    %c0_i32_0 = arith.constant 0 : i32
    %c0_i32_1 = arith.constant 0 : i32
    return %c0_i32, %c0_i32_0 : i32, i32
  }
  func.func @transform_9(%arg0: i32, %arg1: i32) -> (i32, i32, i32) {
    %c0_i32 = arith.constant 0 : i32
    %c0_i32_0 = arith.constant 0 : i32
    return %arg0, %arg1, %c0_i32 : i32, i32, i32
  }
  func.func @transform_10(%arg0: i32, %arg1: i32) -> (i32, i32) {
    %c0_i32 = arith.constant 0 : i32
    %c0_i32_0 = arith.constant 0 : i32
    return %arg0, %c0_i32 : i32, i32
  }
}

</mosaic_0001>

<llo_original>
// kernel: tpu_custom_call.1
$region0: #{tpu_custom_call.1}
  #allocation0 [shape = 'u32[]', space=smem, size = 0x4, offset = 0x4, fixed_abs, tag = 'smem constant byte address 0x4 - core index']
  #allocation1 [shape = 'u32[144,128]{1,0:T(1,128)}', space=vmem, size = 0x12000, scoped, tag = 'internal scratch']
  #allocation2 [shape = 'f32[2,64]{1,0:T(2,128)}', space=vmem, size = 0x400, scoped, tag = 'scratch operand']
  #allocation3 [shape = 'f32[2,64]{1,0:T(2,128)}', space=vmem, size = 0x400, scoped, tag = 'scratch operand']
  %s0 = inlined_call_operand.hbm [shape: f32[2,8,16], index: 0, kind: input, shape index: {}]
  %s1 = inlined_call_operand.hbm [shape: f32[16,32], index: 1, kind: input, shape index: {}]
  %s2 = inlined_call_operand.vmem [shape: f32[1,32], index: 2, kind: input, shape index: {}]
  %s3 = inlined_call_operand.hbm [shape: f32[32,64], index: 3, kind: input, shape index: {}]
  %s4 = inlined_call_operand.vmem [shape: f32[1,64], index: 4, kind: input, shape index: {}]
  %s5 = inlined_call_operand.hbm [shape: f32[32,32], index: 5, kind: input, shape index: {}]
  %s6 = inlined_call_operand.vmem [shape: f32[1,32], index: 6, kind: input, shape index: {}]
  %s7 = inlined_call_operand.hbm [shape: f32[32,64], index: 7, kind: input, shape index: {}]
  %s8 = inlined_call_operand.vmem [shape: f32[1,64], index: 8, kind: input, shape index: {}]
  %s9 = inlined_call_operand.hbm [shape: f32[2,8,64], index: 9, kind: output, shape index: {0}]
  %s10 = inlined_call_operand.hbm [shape: f32[2,64], index: 10, kind: output, shape index: {1}]
  %11 = xla_tuple %s9, %s10
  %s12 = sld [smem:[#allocation0]]
  $region82: #{tpu_custom_call.1} parent=0
    _
  %s14 = ssub.s32 1, %s12
  %s15 = scalar_select 0, %s14, %s12
  $region1: #{tpu_custom_call.1} parent=0
    #allocation4 [shape = 'u8[8192]{0}', space=vmem, size = 0x2000, scoped, tag = 'input window, operand 0, single buffered']
    #allocation5 [shape = 's32[1]{0}', space=sflag, size = 0x4, scoped, tag = 'scoped memory for tpu_custom_call.1']
    #allocation6 [shape = 's32[1]{0}', space=sflag, size = 0x4, scoped, tag = 'scoped memory for tpu_custom_call.1']
    #allocation7 [shape = 'u8[8192]{0}', space=vmem, size = 0x2000, scoped, tag = 'input window, operand 1, single buffered']
    #allocation8 [shape = 's32[1]{0}', space=sflag, size = 0x4, scoped, tag = 'scoped memory for tpu_custom_call.1']
    #allocation9 [shape = 'u8[16384]{0}', space=vmem, size = 0x4000, scoped, tag = 'input window, operand 3, single buffered']
    #allocation10 [shape = 'u8[16384]{0}', space=vmem, size = 0x4000, scoped, tag = 'input window, operand 5, single buffered']
    #allocation11 [shape = 's32[1]{0}', space=sflag, size = 0x4, scoped, tag = 'scoped memory for tpu_custom_call.1']
    #allocation12 [shape = 'u8[16384]{0}', space=vmem, size = 0x4000, scoped, tag = 'input window, operand 7, single buffered']
    #allocation13 [shape = 'u8[8192]{0}', space=vmem, size = 0x2000, scoped, tag = 'output window, operand 0, single buffered']
    #allocation14 [shape = 'u8[1024]{0}', space=vmem, size = 0x400, scoped, tag = 'output window, operand 1, single buffered']
    #allocation15 [shape = 's32[1]{0}', space=sflag, size = 0x4, scoped, tag = 'scoped memory for tpu_custom_call.1']
    %16 = vsyncpa [#allocation5], 0
    %17 = vsyncpa [#allocation8], 0
    %18 = vsyncpa [#allocation11], 0
    %19 = vsyncpa [#allocation6], 0
    %20 = vsyncpa [#allocation15], 0
    // Predicated region
    $region2: #{tpu_custom_call.1} parent=1 // pred_check
      _
    $region3: #{tpu_custom_call.1} parent=1 // pred_check_branch
      %22 = sbr.rel (0) target = $region5
    $region4: #{tpu_custom_call.1} parent=1 // pred_region
      %s24 = ssub.s32 256, 256
      %25 = vsyncadd [#allocation5], %s24
      %s26 = sshll.u32 [#allocation4], 4
      %s27 = int_to_ptr.vmem [resolvable:$true] %s26
      %32 = dma.hbm_to_vmem [thread:$0]  %s0, 256, %s27, [#allocation5], 128, 128, 8
    $region5: #{tpu_custom_call.1} parent=1 // pred_fallthru
      _
    // Predicated region
    $region6: #{tpu_custom_call.1} parent=1 // pred_check
      _
    $region7: #{tpu_custom_call.1} parent=1 // pred_check_branch
      %34 = sbr.rel (0) target = $region9
    $region8: #{tpu_custom_call.1} parent=1 // pred_region
      %s36 = ssub.s32 256, 256
      %37 = vsyncadd [#allocation8], %s36
      %s38 = sshll.u32 [#allocation7], 4
      %s39 = int_to_ptr.vmem [resolvable:$true] %s38
      %44 = dma.hbm_to_vmem [thread:$0]  %s1, 256, %s39, [#allocation8], 128, 128, 8
    $region9: #{tpu_custom_call.1} parent=1 // pred_fallthru
      _
    // Predicated region
    $region10: #{tpu_custom_call.1} parent=1 // pred_check
      _
    $region11: #{tpu_custom_call.1} parent=1 // pred_check_branch
      %46 = sbr.rel (0) target = $region13
    $region12: #{tpu_custom_call.1} parent=1 // pred_region
      _
    $region13: #{tpu_custom_call.1} parent=1 // pred_fallthru
      _
    // Predicated region
    $region14: #{tpu_custom_call.1} parent=1 // pred_check
      _
    $region15: #{tpu_custom_call.1} parent=1 // pred_check_branch
      %48 = sbr.rel (0) target = $region17
    $region16: #{tpu_custom_call.1} parent=1 // pred_region
      %s50 = ssub.s32 512, 512
      %51 = vsyncadd [#allocation8], %s50
      %s52 = sshll.u32 [#allocation9], 4
      %s53 = int_to_ptr.vmem [resolvable:$true] %s52
      %58 = dma.hbm_to_vmem [thread:$0]  %s3, 512, %s53, [#allocation8], 128, 128, 8
    $region17: #{tpu_custom_call.1} parent=1 // pred_fallthru
      _
    // Predicated region
    $region18: #{tpu_custom_call.1} parent=1 // pred_check
      _
    $region19: #{tpu_custom_call.1} parent=1 // pred_check_branch
      %60 = sbr.rel (0) target = $region21
    $region20: #{tpu_custom_call.1} parent=1 // pred_region
      _
    $region21: #{tpu_custom_call.1} parent=1 // pred_fallthru
      _
    // Predicated region
    $region22: #{tpu_custom_call.1} parent=1 // pred_check
      _
    $region23: #{tpu_custom_call.1} parent=1 // pred_check_branch
      %62 = sbr.rel (0) target = $region25
    $region24: #{tpu_custom_call.1} parent=1 // pred_region
      %s64 = ssub.s32 512, 512
      %65 = vsyncadd [#allocation11], %s64
      %s66 = sshll.u32 [#allocation10], 4
      %s67 = int_to_ptr.vmem [resolvable:$true] %s66
      %72 = dma.hbm_to_vmem [thread:$0]  %s5, 512, %s67, [#allocation11], 128, 128, 8
    $region25: #{tpu_custom_call.1} parent=1 // pred_fallthru
      _
    // Predicated region
    $region26: #{tpu_custom_call.1} parent=1 // pred_check
      _
    $region27: #{tpu_custom_call.1} parent=1 // pred_check_branch
      %74 = sbr.rel (0) target = $region29
    $region28: #{tpu_custom_call.1} parent=1 // pred_region
      _
    $region29: #{tpu_custom_call.1} parent=1 // pred_fallthru
      _
    // Predicated region
    $region30: #{tpu_custom_call.1} parent=1 // pred_check
      _
    $region31: #{tpu_custom_call.1} parent=1 // pred_check_branch
      %76 = sbr.rel (0) target = $region33
    $region32: #{tpu_custom_call.1} parent=1 // pred_region
      %s78 = ssub.s32 512, 512
      %79 = vsyncadd [#allocation11], %s78
      %s80 = sshll.u32 [#allocation12], 4
      %s81 = int_to_ptr.vmem [resolvable:$true] %s80
      %86 = dma.hbm_to_vmem [thread:$0]  %s7, 512, %s81, [#allocation11], 128, 128, 8
    $region33: #{tpu_custom_call.1} parent=1 // pred_fallthru
      _
    // Predicated region
    $region34: #{tpu_custom_call.1} parent=1 // pred_check
      _
    $region35: #{tpu_custom_call.1} parent=1 // pred_check_branch
      %88 = sbr.rel (0) target = $region37
    $region36: #{tpu_custom_call.1} parent=1 // pred_region
      _
    $region37: #{tpu_custom_call.1} parent=1 // pred_fallthru
      _
    // Predicated region
    $region38: #{tpu_custom_call.1} parent=1 // pred_check
      _
    $region39: #{tpu_custom_call.1} parent=1 // pred_check_branch
      %90 = sbr.rel (0) target = $region41
    $region40: #{tpu_custom_call.1} parent=1 // pred_region
      %91 = dma.done [#allocation5], 256
    $region41: #{tpu_custom_call.1} parent=1 // pred_fallthru
      _
    // Predicated region
    $region42: #{tpu_custom_call.1} parent=1 // pred_check
      _
    $region43: #{tpu_custom_call.1} parent=1 // pred_check_branch
      %93 = sbr.rel (0) target = $region45
    $region44: #{tpu_custom_call.1} parent=1 // pred_region
      %94 = dma.done [#allocation8], 256
    $region45: #{tpu_custom_call.1} parent=1 // pred_fallthru
      _
    // Predicated region
    $region46: #{tpu_custom_call.1} parent=1 // pred_check
      _
    $region47: #{tpu_custom_call.1} parent=1 // pred_check_branch
      %96 = sbr.rel (0) target = $region49
    $region48: #{tpu_custom_call.1} parent=1 // pred_region
      %97 = dma.done [#allocation8], 512
    $region49: #{tpu_custom_call.1} parent=1 // pred_fallthru
      _
    // Predicated region
    $region50: #{tpu_custom_call.1} parent=1 // pred_check
      _
    $region51: #{tpu_custom_call.1} parent=1 // pred_check_branch
      %99 = sbr.rel (0) target = $region53
    $region52: #{tpu_custom_call.1} parent=1 // pred_region
      %100 = dma.done [#allocation11], 512
    $region53: #{tpu_custom_call.1} parent=1 // pred_fallthru
      _
    // Predicated region
    $region54: #{tpu_custom_call.1} parent=1 // pred_check
      _
    $region55: #{tpu_custom_call.1} parent=1 // pred_check_branch
      %102 = sbr.rel (0) target = $region57
    $region56: #{tpu_custom_call.1} parent=1 // pred_region
      %103 = dma.done [#allocation11], 512
    $region57: #{tpu_custom_call.1} parent=1 // pred_fallthru
      _
    %p104 = scmp.eq.s32.totalorder 0, 0
    // Predicated region
    $region58: #{tpu_custom_call.1} parent=1 // pred_check
      %p105 = pneg %p104
    $region59: #{tpu_custom_call.1} parent=1 // pred_check_branch
      %107 = sbr.rel (%p105) target = $region61
    $region60: #{tpu_custom_call.1} parent=1 // pred_region
      %vm108 = vcmask 517120
      %109 = vst.msk [vmem:[#allocation2] sm:$0x3] %vm108, 0.0
      %110 = vst.msk [vmem:[#allocation3] sm:$0x3] %vm108, 0.0
    $region61: #{tpu_custom_call.1} parent=1 // pred_fallthru
      _
    %v111 = vld [vmem:[#allocation7] sm:$0xff]
    %v112 = vld [vmem:[#allocation7 + $0x8] sm:$0xff]
    %v113 = vld [vmem:[%s2] sm:$0x1]
    %v114 = vld [vmem:[#allocation9] sm:$0xff]
    %v115 = vld [vmem:[#allocation9 + $0x8] sm:$0xff]
    %v116 = vld [vmem:[#allocation9 + $0x10] sm:$0xff]
    %v117 = vld [vmem:[#allocation9 + $0x18] sm:$0xff]
    %v118 = vld [vmem:[%s4] sm:$0x1]
    %v119 = vld [vmem:[#allocation10] sm:$0xff]
    %v120 = vld [vmem:[#allocation10 + $0x8] sm:$0xff]
    %v121 = vld [vmem:[#allocation10 + $0x10] sm:$0xff]
    %v122 = vld [vmem:[#allocation10 + $0x18] sm:$0xff]
    %v123 = vld [vmem:[%s6] sm:$0x1]
    %v124 = vld [vmem:[#allocation12] sm:$0xff]
    %v125 = vld [vmem:[#allocation12 + $0x8] sm:$0xff]
    %v126 = vld [vmem:[#allocation12 + $0x10] sm:$0xff]
    %v127 = vld [vmem:[#allocation12 + $0x18] sm:$0xff]
    %v128 = vld [vmem:[%s8] sm:$0x1]
    %v129 = vld [vmem:[#allocation2] sm:$0x3]
    %v130 = vld [vmem:[#allocation3] sm:$0x3]
    %v131 = vld [vmem:[#allocation4] sm:$0xff]
    %v132 = vld [vmem:[#allocation4 + $0x8] sm:$0xff]
    %v134 = vlaneseq
    %v135 = vshrl.u32 %v134, 7
    %v136 = vsub.s32 0, %v135
    %v137 = vrot.slane %v113, %v136
    %vm139 = vcmask 130048
    %v141 = vsel %vm139, %v131, 0
    %v144 = vsel %vm139, %v132, 0
    %146 = vmatprep.subr.mxu0 0.0
    %147 = vmatpush1.msra.mxu0 %v111
    %148 = vmatprep.subr.mxu0 0.0
    %149 = vmatpush1.msra.mxu0 %v112
    %150 = vmatprep.subr.mxu0 0.0
    %151 = vmatpush1.msra.mxu0 0.0
    %152 = vmatprep.subr.mxu0 0.0
    %153 = vmatpush1.msra.mxu0 0.0
    %154 = vmatprep.subr.mxu0 0.0
    %155 = vmatpush1.msra.mxu0 0.0
    %156 = vmatprep.subr.mxu0 0.0
    %157 = vmatpush1.msra.mxu0 0.0
    %158 = vmatprep.subr.mxu0 0.0
    %159 = vmatpush1.msra.mxu0 0.0
    %160 = vmatprep.subr.mxu0 0.0
    %161 = vmatpush1.msra.mxu0 0.0
    %162 = vmatprep.subr.mxu0 0.0
    %163 = vmatpush1.msra.mxu0 0.0
    %164 = vmatprep.subr.mxu0 0.0
    %165 = vmatpush1.msra.mxu0 0.0
    %166 = vmatprep.subr.mxu0 0.0
    %167 = vmatpush1.msra.mxu0 0.0
    %168 = vmatprep.subr.mxu0 0.0
    %169 = vmatpush1.msra.mxu0 0.0
    %170 = vmatprep.subr.mxu0 0.0
    %171 = vmatpush1.msra.mxu0 0.0
    %172 = vmatprep.subr.mxu0 0.0
    %173 = vmatpush1.msra.mxu0 0.0
    %174 = vmatprep.subr.mxu0 0.0
    %175 = vmatpush1.msra.mxu0 0.0
    %176 = vmatprep.subr.mxu0 0.0
    %177 = vmatpush1.msra.mxu0 0.0
    %178 = vmatprep.subr.mxu0 0.0
    %179 = vmatpush1.msra.mxu0 0.0
    %180 = vmatprep.subr.mxu0 0.0
    %181 = vmatpush1.msra.mxu0 0.0
    %182 = vmatprep.subr.mxu0 0.0
    %183 = vmatpush1.msra.mxu0 0.0
    %184 = vmatprep.subr.mxu0 0.0
    %185 = vmatpush1.msra.mxu0 0.0
    %186 = vmatprep.subr.mxu0 0.0
    %187 = vmatpush1.msra.mxu0 0.0
    %188 = vmatprep.subr.mxu0 0.0
    %189 = vmatpush1.msra.mxu0 0.0
    %190 = vmatprep.subr.mxu0 0.0
    %191 = vmatpush1.msra.mxu0 0.0
    %192 = vmatprep.subr.mxu0 0.0
    %193 = vmatpush1.msra.mxu0 0.0
    %194 = vmatprep.subr.mxu0 0.0
    %195 = vmatpush1.msra.mxu0 0.0
    %196 = vmatprep.subr.mxu0 0.0
    %197 = vmatpush1.msra.mxu0 0.0
    %198 = vmatprep.subr.mxu0 0.0
    %199 = vmatpush1.msra.mxu0 0.0
    %200 = vmatprep.subr.mxu0 0.0
    %201 = vmatpush1.msra.mxu0 0.0
    %202 = vmatprep.subr.mxu0 0.0
    %203 = vmatpush1.msra.mxu0 0.0
    %204 = vmatprep.subr.mxu0 0.0
    %205 = vmatpush1.msra.mxu0 0.0
    %206 = vmatprep.subr.mxu0 0.0
    %207 = vmatpush1.msra.mxu0 0.0
    %208 = vmatprep.subr.mxu0 0.0
    %209 = vmatpush1.msra.mxu0 0.0
    %210 = vmatprep.mubr.f32.mxu0 0.0
    %211 = vmatmul.mubr.f32.gmra.mrb[0].mxu0 %v141
    %v212 = vpop.f32.mrb[0].mxu0
    %v213 = vadd.f32 %v137, %v212
    %v214 = vpop.f32.mrb[0].mxu0
    %215 = vmatprep.mubr.f32.mxu0 0.0
    %216 = vmatmul.mubr.f32.gmra.mrb[0].mxu0 %v144
    %v217 = vpop.f32.mrb[0].mxu0
    %v218 = vadd.f32 %v137, %v217
    %v219 = vpop.f32.mrb[0].mxu0
    %220 = vdwg.mxu0
    %v222 = vlaneseq
    %v223 = vshrl.u32 %v222, 7
    %v224 = vsub.s32 0, %v223
    %v225 = vrot.slane %v118, %v224
    %vm227 = vcmask 261120
    %v229 = vsel %vm227, %v129, 0
    %231 = vmatprep.subr.mxu0 0.0
    %232 = vmatpush1.msra.mxu0 %v114
    %233 = vmatprep.subr.mxu0 0.0
    %234 = vmatpush1.msra.mxu0 %v115
    %235 = vmatprep.subr.mxu0 0.0
    %236 = vmatpush1.msra.mxu0 %v116
    %237 = vmatprep.subr.mxu0 0.0
    %238 = vmatpush1.msra.mxu0 %v117
    %239 = vmatprep.subr.mxu0 0.0
    %240 = vmatpush1.msra.mxu0 0.0
    %241 = vmatprep.subr.mxu0 0.0
    %242 = vmatpush1.msra.mxu0 0.0
    %243 = vmatprep.subr.mxu0 0.0
    %244 = vmatpush1.msra.mxu0 0.0
    %245 = vmatprep.subr.mxu0 0.0
    %246 = vmatpush1.msra.mxu0 0.0
    %247 = vmatprep.subr.mxu0 0.0
    %248 = vmatpush1.msra.mxu0 0.0
    %249 = vmatprep.subr.mxu0 0.0
    %250 = vmatpush1.msra.mxu0 0.0
    %251 = vmatprep.subr.mxu0 0.0
    %252 = vmatpush1.msra.mxu0 0.0
    %253 = vmatprep.subr.mxu0 0.0
    %254 = vmatpush1.msra.mxu0 0.0
    %255 = vmatprep.subr.mxu0 0.0
    %256 = vmatpush1.msra.mxu0 0.0
    %257 = vmatprep.subr.mxu0 0.0
    %258 = vmatpush1.msra.mxu0 0.0
    %259 = vmatprep.subr.mxu0 0.0
    %260 = vmatpush1.msra.mxu0 0.0
    %261 = vmatprep.subr.mxu0 0.0
    %262 = vmatpush1.msra.mxu0 0.0
    %263 = vmatprep.subr.mxu0 0.0
    %264 = vmatpush1.msra.mxu0 0.0
    %265 = vmatprep.subr.mxu0 0.0
    %266 = vmatpush1.msra.mxu0 0.0
    %267 = vmatprep.subr.mxu0 0.0
    %268 = vmatpush1.msra.mxu0 0.0
    %269 = vmatprep.subr.mxu0 0.0
    %270 = vmatpush1.msra.mxu0 0.0
    %271 = vmatprep.subr.mxu0 0.0
    %272 = vmatpush1.msra.mxu0 0.0
    %273 = vmatprep.subr.mxu0 0.0
    %274 = vmatpush1.msra.mxu0 0.0
    %275 = vmatprep.subr.mxu0 0.0
    %276 = vmatpush1.msra.mxu0 0.0
    %277 = vmatprep.subr.mxu0 0.0
    %278 = vmatpush1.msra.mxu0 0.0
    %279 = vmatprep.subr.mxu0 0.0
    %280 = vmatpush1.msra.mxu0 0.0
    %281 = vmatprep.subr.mxu0 0.0
    %282 = vmatpush1.msra.mxu0 0.0
    %283 = vmatprep.subr.mxu0 0.0
    %284 = vmatpush1.msra.mxu0 0.0
    %285 = vmatprep.subr.mxu0 0.0
    %286 = vmatpush1.msra.mxu0 0.0
    %287 = vmatprep.subr.mxu0 0.0
    %288 = vmatpush1.msra.mxu0 0.0
    %289 = vmatprep.subr.mxu0 0.0
    %290 = vmatpush1.msra.mxu0 0.0
    %291 = vmatprep.subr.mxu0 0.0
    %292 = vmatpush1.msra.mxu0 0.0
    %293 = vmatprep.subr.mxu0 0.0
    %294 = vmatpush1.msra.mxu0 0.0
    %295 = vmatprep.mubr.f32.mxu0 0.0
    %296 = vmatmul.mubr.f32.gmra.mrb[0].mxu0 %v229
    %v297 = vpop.f32.mrb[0].mxu0
    %v298 = vadd.f32 %v225, %v297
    %v299 = vpop.f32.mrb[0].mxu0
    %300 = vdwg.mxu0
    %v301 = vxor.u32 %v298, 2147483648
    %v302 = vmul.f32 %v301, 1.442695
    %v303 = vpow.pop %v302
    %v304 = vadd.f32 %v303, 1.0
    %v305 = vrcp.pop %v304
    %v306 = vmul.f32 1.0, %v305
    %v309 = vrot.slane %v218, 7
    %vm310 = vcmask 1041409
    %v311 = vsel %vm310, %v309, %v213
    %v313 = vmul.f32 %v306, %v311
    %v314 = vadd.f32 %v130, %v313
    %v315 = vtanh.pop %v314
    %v316 = vsub.f32 %v315, %v311
    %318 = vrot.lane.b32.xlu0 %v316, 32
    %v319 = vpop.permute.xlu0 %318
    %v321 = vmul.f32 %v306, %v319
    %v323 = vrot.slane %v321, 1
    %324 = vrot.lane.b32.xlu0 %v321, 96
    %v325 = vpop.permute.xlu0 %324
    %326 = vrot.lane.b32.xlu0 %v323, 96
    %v327 = vpop.permute.xlu0 %326
    %v330 = vadd.f32 %v213, %v325
    %v331 = vadd.f32 %v218, %v327
    %v333 = vlaneseq
    %v334 = vshrl.u32 %v333, 7
    %v335 = vsub.s32 0, %v334
    %v336 = vrot.slane %v123, %v335
    %v340 = vrot.slane %v331, 7
    %v341 = vsel %vm310, %v340, %v330
    %v342 = vsel %vm227, %v341, 0
    %344 = vmatprep.subr.mxu0 0.0
    %345 = vmatpush1.msra.mxu0 %v119
    %346 = vmatprep.subr.mxu0 0.0
    %347 = vmatpush1.msra.mxu0 %v120
    %348 = vmatprep.subr.mxu0 0.0
    %349 = vmatpush1.msra.mxu0 %v121
    %350 = vmatprep.subr.mxu0 0.0
    %351 = vmatpush1.msra.mxu0 %v122
    %352 = vmatprep.subr.mxu0 0.0
    %353 = vmatpush1.msra.mxu0 0.0
    %354 = vmatprep.subr.mxu0 0.0
    %355 = vmatpush1.msra.mxu0 0.0
    %356 = vmatprep.subr.mxu0 0.0
    %357 = vmatpush1.msra.mxu0 0.0
    %358 = vmatprep.subr.mxu0 0.0
    %359 = vmatpush1.msra.mxu0 0.0
    %360 = vmatprep.subr.mxu0 0.0
    %361 = vmatpush1.msra.mxu0 0.0
    %362 = vmatprep.subr.mxu0 0.0
    %363 = vmatpush1.msra.mxu0 0.0
    %364 = vmatprep.subr.mxu0 0.0
    %365 = vmatpush1.msra.mxu0 0.0
    %366 = vmatprep.subr.mxu0 0.0
    %367 = vmatpush1.msra.mxu0 0.0
    %368 = vmatprep.subr.mxu0 0.0
    %369 = vmatpush1.msra.mxu0 0.0
    %370 = vmatprep.subr.mxu0 0.0
    %371 = vmatpush1.msra.mxu0 0.0
    %372 = vmatprep.subr.mxu0 0.0
    %373 = vmatpush1.msra.mxu0 0.0
    %374 = vmatprep.subr.mxu0 0.0
    %375 = vmatpush1.msra.mxu0 0.0
    %376 = vmatprep.subr.mxu0 0.0
    %377 = vmatpush1.msra.mxu0 0.0
    %378 = vmatprep.subr.mxu0 0.0
    %379 = vmatpush1.msra.mxu0 0.0
    %380 = vmatprep.subr.mxu0 0.0
    %381 = vmatpush1.msra.mxu0 0.0
    %382 = vmatprep.subr.mxu0 0.0
    %383 = vmatpush1.msra.mxu0 0.0
    %384 = vmatprep.subr.mxu0 0.0
    %385 = vmatpush1.msra.mxu0 0.0
    %386 = vmatprep.subr.mxu0 0.0
    %387 = vmatpush1.msra.mxu0 0.0
    %388 = vmatprep.subr.mxu0 0.0
    %389 = vmatpush1.msra.mxu0 0.0
    %390 = vmatprep.subr.mxu0 0.0
    %391 = vmatpush1.msra.mxu0 0.0
    %392 = vmatprep.subr.mxu0 0.0
    %393 = vmatpush1.msra.mxu0 0.0
    %394 = vmatprep.subr.mxu0 0.0
    %395 = vmatpush1.msra.mxu0 0.0
    %396 = vmatprep.subr.mxu0 0.0
    %397 = vmatpush1.msra.mxu0 0.0
    %398 = vmatprep.subr.mxu0 0.0
    %399 = vmatpush1.msra.mxu0 0.0
    %400 = vmatprep.subr.mxu0 0.0
    %401 = vmatpush1.msra.mxu0 0.0
    %402 = vmatprep.subr.mxu0 0.0
    %403 = vmatpush1.msra.mxu0 0.0
    %404 = vmatprep.subr.mxu0 0.0
    %405 = vmatpush1.msra.mxu0 0.0
    %406 = vmatprep.subr.mxu0 0.0
    %407 = vmatpush1.msra.mxu0 0.0
    %408 = vmatprep.mubr.f32.mxu0 0.0
    %409 = vmatmul.mubr.f32.gmra.mrb[0].mxu0 %v342
    %v410 = vpop.f32.mrb[0].mxu0
    %v411 = vadd.f32 %v336, %v410
    %v412 = vpop.f32.mrb[0].mxu0
    %413 = vdwg.mxu0
    %v415 = vlaneseq
    %v416 = vshrl.u32 %v415, 7
    %v417 = vsub.s32 0, %v416
    %v418 = vrot.slane %v128, %v417
    %420 = vrot.lane.b32.xlu0 %v129, 96
    %v421 = vpop.permute.xlu0 %420
    %v422 = vsel %vm227, %v421, 0
    %424 = vmatprep.subr.mxu0 0.0
    %425 = vmatpush1.msra.mxu0 %v124
    %426 = vmatprep.subr.mxu0 0.0
    %427 = vmatpush1.msra.mxu0 %v125
    %428 = vmatprep.subr.mxu0 0.0
    %429 = vmatpush1.msra.mxu0 %v126
    %430 = vmatprep.subr.mxu0 0.0
    %431 = vmatpush1.msra.mxu0 %v127
    %432 = vmatprep.subr.mxu0 0.0
    %433 = vmatpush1.msra.mxu0 0.0
    %434 = vmatprep.subr.mxu0 0.0
    %435 = vmatpush1.msra.mxu0 0.0
    %436 = vmatprep.subr.mxu0 0.0
    %437 = vmatpush1.msra.mxu0 0.0
    %438 = vmatprep.subr.mxu0 0.0
    %439 = vmatpush1.msra.mxu0 0.0
    %440 = vmatprep.subr.mxu0 0.0
    %441 = vmatpush1.msra.mxu0 0.0
    %442 = vmatprep.subr.mxu0 0.0
    %443 = vmatpush1.msra.mxu0 0.0
    %444 = vmatprep.subr.mxu0 0.0
    %445 = vmatpush1.msra.mxu0 0.0
    %446 = vmatprep.subr.mxu0 0.0
    %447 = vmatpush1.msra.mxu0 0.0
    %448 = vmatprep.subr.mxu0 0.0
    %449 = vmatpush1.msra.mxu0 0.0
    %450 = vmatprep.subr.mxu0 0.0
    %451 = vmatpush1.msra.mxu0 0.0
    %452 = vmatprep.subr.mxu0 0.0
    %453 = vmatpush1.msra.mxu0 0.0
    %454 = vmatprep.subr.mxu0 0.0
    %455 = vmatpush1.msra.mxu0 0.0
    %456 = vmatprep.subr.mxu0 0.0
    %457 = vmatpush1.msra.mxu0 0.0
    %458 = vmatprep.subr.mxu0 0.0
    %459 = vmatpush1.msra.mxu0 0.0
    %460 = vmatprep.subr.mxu0 0.0
    %461 = vmatpush1.msra.mxu0 0.0
    %462 = vmatprep.subr.mxu0 0.0
    %463 = vmatpush1.msra.mxu0 0.0
    %464 = vmatprep.subr.mxu0 0.0
    %465 = vmatpush1.msra.mxu0 0.0
    %466 = vmatprep.subr.mxu0 0.0
    %467 = vmatpush1.msra.mxu0 0.0
    %468 = vmatprep.subr.mxu0 0.0
    %469 = vmatpush1.msra.mxu0 0.0
    %470 = vmatprep.subr.mxu0 0.0
    %471 = vmatpush1.msra.mxu0 0.0
    %472 = vmatprep.subr.mxu0 0.0
    %473 = vmatpush1.msra.mxu0 0.0
    %474 = vmatprep.subr.mxu0 0.0
    %475 = vmatpush1.msra.mxu0 0.0
    %476 = vmatprep.subr.mxu0 0.0
    %477 = vmatpush1.msra.mxu0 0.0
    %478 = vmatprep.subr.mxu0 0.0
    %479 = vmatpush1.msra.mxu0 0.0
    %480 = vmatprep.subr.mxu0 0.0
    %481 = vmatpush1.msra.mxu0 0.0
    %482 = vmatprep.subr.mxu0 0.0
    %483 = vmatpush1.msra.mxu0 0.0
    %484 = vmatprep.subr.mxu0 0.0
    %485 = vmatpush1.msra.mxu0 0.0
    %486 = vmatprep.subr.mxu0 0.0
    %487 = vmatpush1.msra.mxu0 0.0
    %488 = vmatprep.mubr.f32.mxu0 0.0
    %489 = vmatmul.mubr.f32.gmra.mrb[0].mxu0 %v422
    %v490 = vpop.f32.mrb[0].mxu0
    %v491 = vadd.f32 %v418, %v490
    %v492 = vpop.f32.mrb[0].mxu0
    %493 = vdwg.mxu0
    %v494 = vxor.u32 %v491, 2147483648
    %v495 = vmul.f32 %v494, 1.442695
    %v496 = vpow.pop %v495
    %v497 = vadd.f32 %v496, 1.0
    %v498 = vrcp.pop %v497
    %v499 = vmul.f32 1.0, %v498
    %v500 = vmul.f32 %v499, %v411
    %502 = vrot.lane.b32.xlu0 %v500, 32
    %v503 = vpop.permute.xlu0 %502
    %v505 = vadd.f32 %v130, %v503
    %v506 = vtanh.pop %v505
    %508 = vrot.lane.b32.xlu0 %v411, 32
    %v509 = vpop.permute.xlu0 %508
    %v511 = vsub.f32 %v506, %v509
    %v512 = vmul.f32 %v499, %v511
    %514 = vrot.lane.b32.xlu0 %v512, 96
    %v515 = vpop.permute.xlu0 %514
    %v517 = vadd.f32 %v411, %v515
    %520 = vrot.lane.b32.xlu0 %v517, 32
    %v521 = vpop.permute.xlu0 %520
    %v523 = vsel %vm227, %v341, %v521
    %524 = vmatprep.subr.mxu0 0.0
    %525 = vmatpush1.msra.mxu0 %v114
    %526 = vmatprep.subr.mxu0 0.0
    %527 = vmatpush1.msra.mxu0 %v115
    %528 = vmatprep.subr.mxu0 0.0
    %529 = vmatpush1.msra.mxu0 %v116
    %530 = vmatprep.subr.mxu0 0.0
    %531 = vmatpush1.msra.mxu0 %v117
    %532 = vmatprep.subr.mxu0 0.0
    %533 = vmatpush1.msra.mxu0 0.0
    %534 = vmatprep.subr.mxu0 0.0
    %535 = vmatpush1.msra.mxu0 0.0
    %536 = vmatprep.subr.mxu0 0.0
    %537 = vmatpush1.msra.mxu0 0.0
    %538 = vmatprep.subr.mxu0 0.0
    %539 = vmatpush1.msra.mxu0 0.0
    %540 = vmatprep.subr.mxu0 0.0
    %541 = vmatpush1.msra.mxu0 0.0
    %542 = vmatprep.subr.mxu0 0.0
    %543 = vmatpush1.msra.mxu0 0.0
    %544 = vmatprep.subr.mxu0 0.0
    %545 = vmatpush1.msra.mxu0 0.0
    %546 = vmatprep.subr.mxu0 0.0
    %547 = vmatpush1.msra.mxu0 0.0
    %548 = vmatprep.subr.mxu0 0.0
    %549 = vmatpush1.msra.mxu0 0.0
    %550 = vmatprep.subr.mxu0 0.0
    %551 = vmatpush1.msra.mxu0 0.0
    %552 = vmatprep.subr.mxu0 0.0
    %553 = vmatpush1.msra.mxu0 0.0
    %554 = vmatprep.subr.mxu0 0.0
    %555 = vmatpush1.msra.mxu0 0.0
    %556 = vmatprep.subr.mxu0 0.0
    %557 = vmatpush1.msra.mxu0 0.0
    %558 = vmatprep.subr.mxu0 0.0
    %559 = vmatpush1.msra.mxu0 0.0
    %560 = vmatprep.subr.mxu0 0.0
    %561 = vmatpush1.msra.mxu0 0.0
    %562 = vmatprep.subr.mxu0 0.0
    %563 = vmatpush1.msra.mxu0 0.0
    %564 = vmatprep.subr.mxu0 0.0
    %565 = vmatpush1.msra.mxu0 0.0
    %566 = vmatprep.subr.mxu0 0.0
    %567 = vmatpush1.msra.mxu0 0.0
    %568 = vmatprep.subr.mxu0 0.0
    %569 = vmatpush1.msra.mxu0 0.0
    %570 = vmatprep.subr.mxu0 0.0
    %571 = vmatpush1.msra.mxu0 0.0
    %572 = vmatprep.subr.mxu0 0.0
    %573 = vmatpush1.msra.mxu0 0.0
    %574 = vmatprep.subr.mxu0 0.0
    %575 = vmatpush1.msra.mxu0 0.0
    %576 = vmatprep.subr.mxu0 0.0
    %577 = vmatpush1.msra.mxu0 0.0
    %578 = vmatprep.subr.mxu0 0.0
    %579 = vmatpush1.msra.mxu0 0.0
    %580 = vmatprep.subr.mxu0 0.0
    %581 = vmatpush1.msra.mxu0 0.0
    %582 = vmatprep.subr.mxu0 0.0
    %583 = vmatpush1.msra.mxu0 0.0
    %584 = vmatprep.subr.mxu0 0.0
    %585 = vmatpush1.msra.mxu0 0.0
    %586 = vmatprep.subr.mxu0 0.0
    %587 = vmatpush1.msra.mxu0 0.0
    %588 = vmatprep.mubr.f32.mxu0 0.0
    %589 = vmatmul.mubr.f32.gmra.mrb[0].mxu0 %v342
    %v590 = vpop.f32.mrb[0].mxu0
    %v591 = vadd.f32 %v225, %v590
    %v592 = vpop.f32.mrb[0].mxu0
    %593 = vdwg.mxu0
    %v594 = vxor.u32 %v591, 2147483648
    %v595 = vmul.f32 %v594, 1.442695
    %v596 = vpow.pop %v595
    %v597 = vadd.f32 %v596, 1.0
    %v598 = vrcp.pop %v597
    %v599 = vmul.f32 1.0, %v598
    %v600 = vrot.slane %v213, 1
    %v601 = vsel %vm310, %v218, %v600
    %v603 = vmul.f32 %v599, %v601
    %v604 = vadd.f32 %v315, %v603
    %v605 = vtanh.pop %v604
    %v606 = vsub.f32 %v605, %v601
    %608 = vrot.lane.b32.xlu0 %v606, 32
    %v609 = vpop.permute.xlu0 %608
    %v611 = vmul.f32 %v599, %v609
    %v613 = vrot.slane %v611, 7
    %614 = vrot.lane.b32.xlu0 %v613, 96
    %v615 = vpop.permute.xlu0 %614
    %616 = vrot.lane.b32.xlu0 %v611, 96
    %v617 = vpop.permute.xlu0 %616
    %v620 = vadd.f32 %v213, %v615
    %v621 = vadd.f32 %v218, %v617
    %v624 = vrot.slane %v620, 1
    %v625 = vsel %vm310, %v621, %v624
    %v626 = vsel %vm227, %v625, 0
    %628 = vmatprep.subr.mxu0 0.0
    %629 = vmatpush1.msra.mxu0 %v119
    %630 = vmatprep.subr.mxu0 0.0
    %631 = vmatpush1.msra.mxu0 %v120
    %632 = vmatprep.subr.mxu0 0.0
    %633 = vmatpush1.msra.mxu0 %v121
    %634 = vmatprep.subr.mxu0 0.0
    %635 = vmatpush1.msra.mxu0 %v122
    %636 = vmatprep.subr.mxu0 0.0
    %637 = vmatpush1.msra.mxu0 0.0
    %638 = vmatprep.subr.mxu0 0.0
    %639 = vmatpush1.msra.mxu0 0.0
    %640 = vmatprep.subr.mxu0 0.0
    %641 = vmatpush1.msra.mxu0 0.0
    %642 = vmatprep.subr.mxu0 0.0
    %643 = vmatpush1.msra.mxu0 0.0
    %644 = vmatprep.subr.mxu0 0.0
    %645 = vmatpush1.msra.mxu0 0.0
    %646 = vmatprep.subr.mxu0 0.0
    %647 = vmatpush1.msra.mxu0 0.0
    %648 = vmatprep.subr.mxu0 0.0
    %649 = vmatpush1.msra.mxu0 0.0
    %650 = vmatprep.subr.mxu0 0.0
    %651 = vmatpush1.msra.mxu0 0.0
    %652 = vmatprep.subr.mxu0 0.0
    %653 = vmatpush1.msra.mxu0 0.0
    %654 = vmatprep.subr.mxu0 0.0
    %655 = vmatpush1.msra.mxu0 0.0
    %656 = vmatprep.subr.mxu0 0.0
    %657 = vmatpush1.msra.mxu0 0.0
    %658 = vmatprep.subr.mxu0 0.0
    %659 = vmatpush1.msra.mxu0 0.0
    %660 = vmatprep.subr.mxu0 0.0
    %661 = vmatpush1.msra.mxu0 0.0
    %662 = vmatprep.subr.mxu0 0.0
    %663 = vmatpush1.msra.mxu0 0.0
    %664 = vmatprep.subr.mxu0 0.0
    %665 = vmatpush1.msra.mxu0 0.0
    %666 = vmatprep.subr.mxu0 0.0
    %667 = vmatpush1.msra.mxu0 0.0
    %668 = vmatprep.subr.mxu0 0.0
    %669 = vmatpush1.msra.mxu0 0.0
    %670 = vmatprep.subr.mxu0 0.0
    %671 = vmatpush1.msra.mxu0 0.0
    %672 = vmatprep.subr.mxu0 0.0
    %673 = vmatpush1.msra.mxu0 0.0
    %674 = vmatprep.subr.mxu0 0.0
    %675 = vmatpush1.msra.mxu0 0.0
    %676 = vmatprep.subr.mxu0 0.0
    %677 = vmatpush1.msra.mxu0 0.0
    %678 = vmatprep.subr.mxu0 0.0
    %679 = vmatpush1.msra.mxu0 0.0
    %680 = vmatprep.subr.mxu0 0.0
    %681 = vmatpush1.msra.mxu0 0.0
    %682 = vmatprep.subr.mxu0 0.0
    %683 = vmatpush1.msra.mxu0 0.0
    %684 = vmatprep.subr.mxu0 0.0
    %685 = vmatpush1.msra.mxu0 0.0
    %686 = vmatprep.subr.mxu0 0.0
    %687 = vmatpush1.msra.mxu0 0.0
    %688 = vmatprep.subr.mxu0 0.0
    %689 = vmatpush1.msra.mxu0 0.0
    %690 = vmatprep.subr.mxu0 0.0
    %691 = vmatpush1.msra.mxu0 0.0
    %692 = vmatprep.mubr.f32.mxu0 0.0
    %693 = vmatmul.mubr.f32.gmra.mrb[0].mxu0 %v626
    %v694 = vpop.f32.mrb[0].mxu0
    %v695 = vadd.f32 %v336, %v694
    %v696 = vpop.f32.mrb[0].mxu0
    %697 = vdwg.mxu0
    %v698 = vsel %vm227, %v517, 0
    %700 = vmatprep.subr.mxu0 0.0
    %701 = vmatpush1.msra.mxu0 %v124
    %702 = vmatprep.subr.mxu0 0.0
    %703 = vmatpush1.msra.mxu0 %v125
    %704 = vmatprep.subr.mxu0 0.0
    %705 = vmatpush1.msra.mxu0 %v126
    %706 = vmatprep.subr.mxu0 0.0
    %707 = vmatpush1.msra.mxu0 %v127
    %708 = vmatprep.subr.mxu0 0.0
    %709 = vmatpush1.msra.mxu0 0.0
    %710 = vmatprep.subr.mxu0 0.0
    %711 = vmatpush1.msra.mxu0 0.0
    %712 = vmatprep.subr.mxu0 0.0
    %713 = vmatpush1.msra.mxu0 0.0
    %714 = vmatprep.subr.mxu0 0.0
    %715 = vmatpush1.msra.mxu0 0.0
    %716 = vmatprep.subr.mxu0 0.0
    %717 = vmatpush1.msra.mxu0 0.0
    %718 = vmatprep.subr.mxu0 0.0
    %719 = vmatpush1.msra.mxu0 0.0
    %720 = vmatprep.subr.mxu0 0.0
    %721 = vmatpush1.msra.mxu0 0.0
    %722 = vmatprep.subr.mxu0 0.0
    %723 = vmatpush1.msra.mxu0 0.0
    %724 = vmatprep.subr.mxu0 0.0
    %725 = vmatpush1.msra.mxu0 0.0
    %726 = vmatprep.subr.mxu0 0.0
    %727 = vmatpush1.msra.mxu0 0.0
    %728 = vmatprep.subr.mxu0 0.0
    %729 = vmatpush1.msra.mxu0 0.0
    %730 = vmatprep.subr.mxu0 0.0
    %731 = vmatpush1.msra.mxu0 0.0
    %732 = vmatprep.subr.mxu0 0.0
    %733 = vmatpush1.msra.mxu0 0.0
    %734 = vmatprep.subr.mxu0 0.0
    %735 = vmatpush1.msra.mxu0 0.0
    %736 = vmatprep.subr.mxu0 0.0
    %737 = vmatpush1.msra.mxu0 0.0
    %738 = vmatprep.subr.mxu0 0.0
    %739 = vmatpush1.msra.mxu0 0.0
    %740 = vmatprep.subr.mxu0 0.0
    %741 = vmatpush1.msra.mxu0 0.0
    %742 = vmatprep.subr.mxu0 0.0
    %743 = vmatpush1.msra.mxu0 0.0
    %744 = vmatprep.subr.mxu0 0.0
    %745 = vmatpush1.msra.mxu0 0.0
    %746 = vmatprep.subr.mxu0 0.0
    %747 = vmatpush1.msra.mxu0 0.0
    %748 = vmatprep.subr.mxu0 0.0
    %749 = vmatpush1.msra.mxu0 0.0
    %750 = vmatprep.subr.mxu0 0.0
    %751 = vmatpush1.msra.mxu0 0.0
    %752 = vmatprep.subr.mxu0 0.0
    %753 = vmatpush1.msra.mxu0 0.0
    %754 = vmatprep.subr.mxu0 0.0
    %755 = vmatpush1.msra.mxu0 0.0
    %756 = vmatprep.subr.mxu0 0.0
    %757 = vmatpush1.msra.mxu0 0.0
    %758 = vmatprep.subr.mxu0 0.0
    %759 = vmatpush1.msra.mxu0 0.0
    %760 = vmatprep.subr.mxu0 0.0
    %761 = vmatpush1.msra.mxu0 0.0
    %762 = vmatprep.subr.mxu0 0.0
    %763 = vmatpush1.msra.mxu0 0.0
    %764 = vmatprep.mubr.f32.mxu0 0.0
    %765 = vmatmul.mubr.f32.gmra.mrb[0].mxu0 %v698
    %v766 = vpop.f32.mrb[0].mxu0
    %v767 = vadd.f32 %v418, %v766
    %v768 = vpop.f32.mrb[0].mxu0
    %769 = vdwg.mxu0
    %v770 = vxor.u32 %v767, 2147483648
    %v771 = vmul.f32 %v770, 1.442695
    %v772 = vpow.pop %v771
    %v773 = vadd.f32 %v772, 1.0
    %v774 = vrcp.pop %v773
    %v775 = vmul.f32 1.0, %v774
    %v776 = vmul.f32 %v775, %v695
    %778 = vrot.lane.b32.xlu0 %v776, 32
    %v779 = vpop.permute.xlu0 %778
    %v781 = vadd.f32 %v506, %v779
    %v782 = vtanh.pop %v781
    %784 = vrot.lane.b32.xlu0 %v695, 32
    %v785 = vpop.permute.xlu0 %784
    %v787 = vsub.f32 %v782, %v785
    %v788 = vmul.f32 %v775, %v787
    %790 = vrot.lane.b32.xlu0 %v788, 96
    %v791 = vpop.permute.xlu0 %790
    %v793 = vadd.f32 %v695, %v791
    %v794 = vrot.slane %v621, 7
    %vm795 = vcmask 1042434
    %v796 = vsel %vm795, %v794, %v620
    %v799 = vrot.slane %v793, 7
    %800 = vrot.lane.b32.xlu0 %v799, 32
    %v801 = vpop.permute.xlu0 %800
    %v803 = vsel %vm227, %v796, %v801
    %804 = vmatprep.subr.mxu0 0.0
    %805 = vmatpush1.msra.mxu0 %v114
    %806 = vmatprep.subr.mxu0 0.0
    %807 = vmatpush1.msra.mxu0 %v115
    %808 = vmatprep.subr.mxu0 0.0
    %809 = vmatpush1.msra.mxu0 %v116
    %810 = vmatprep.subr.mxu0 0.0
    %811 = vmatpush1.msra.mxu0 %v117
    %812 = vmatprep.subr.mxu0 0.0
    %813 = vmatpush1.msra.mxu0 0.0
    %814 = vmatprep.subr.mxu0 0.0
    %815 = vmatpush1.msra.mxu0 0.0
    %816 = vmatprep.subr.mxu0 0.0
    %817 = vmatpush1.msra.mxu0 0.0
    %818 = vmatprep.subr.mxu0 0.0
    %819 = vmatpush1.msra.mxu0 0.0
    %820 = vmatprep.subr.mxu0 0.0
    %821 = vmatpush1.msra.mxu0 0.0
    %822 = vmatprep.subr.mxu0 0.0
    %823 = vmatpush1.msra.mxu0 0.0
    %824 = vmatprep.subr.mxu0 0.0
    %825 = vmatpush1.msra.mxu0 0.0
    %826 = vmatprep.subr.mxu0 0.0
    %827 = vmatpush1.msra.mxu0 0.0
    %828 = vmatprep.subr.mxu0 0.0
    %829 = vmatpush1.msra.mxu0 0.0
    %830 = vmatprep.subr.mxu0 0.0
    %831 = vmatpush1.msra.mxu0 0.0
    %832 = vmatprep.subr.mxu0 0.0
    %833 = vmatpush1.msra.mxu0 0.0
    %834 = vmatprep.subr.mxu0 0.0
    %835 = vmatpush1.msra.mxu0 0.0
    %836 = vmatprep.subr.mxu0 0.0
    %837 = vmatpush1.msra.mxu0 0.0
    %838 = vmatprep.subr.mxu0 0.0
    %839 = vmatpush1.msra.mxu0 0.0
    %840 = vmatprep.subr.mxu0 0.0
    %841 = vmatpush1.msra.mxu0 0.0
    %842 = vmatprep.subr.mxu0 0.0
    %843 = vmatpush1.msra.mxu0 0.0
    %844 = vmatprep.subr.mxu0 0.0
    %845 = vmatpush1.msra.mxu0 0.0
    %846 = vmatprep.subr.mxu0 0.0
    %847 = vmatpush1.msra.mxu0 0.0
    %848 = vmatprep.subr.mxu0 0.0
    %849 = vmatpush1.msra.mxu0 0.0
    %850 = vmatprep.subr.mxu0 0.0
    %851 = vmatpush1.msra.mxu0 0.0
    %852 = vmatprep.subr.mxu0 0.0
    %853 = vmatpush1.msra.mxu0 0.0
    %854 = vmatprep.subr.mxu0 0.0
    %855 = vmatpush1.msra.mxu0 0.0
    %856 = vmatprep.subr.mxu0 0.0
    %857 = vmatpush1.msra.mxu0 0.0
    %858 = vmatprep.subr.mxu0 0.0
    %859 = vmatpush1.msra.mxu0 0.0
    %860 = vmatprep.subr.mxu0 0.0
    %861 = vmatpush1.msra.mxu0 0.0
    %862 = vmatprep.subr.mxu0 0.0
    %863 = vmatpush1.msra.mxu0 0.0
    %864 = vmatprep.subr.mxu0 0.0
    %865 = vmatpush1.msra.mxu0 0.0
    %866 = vmatprep.subr.mxu0 0.0
    %867 = vmatpush1.msra.mxu0 0.0
    %868 = vmatprep.mubr.f32.mxu0 0.0
    %869 = vmatmul.mubr.f32.gmra.mrb[0].mxu0 %v626
    %v870 = vpop.f32.mrb[0].mxu0
    %v871 = vadd.f32 %v225, %v870
    %v872 = vpop.f32.mrb[0].mxu0
    %873 = vdwg.mxu0
    %v874 = vxor.u32 %v871, 2147483648
    %v875 = vmul.f32 %v874, 1.442695
    %v876 = vpow.pop %v875
    %v877 = vadd.f32 %v876, 1.0
    %v878 = vrcp.pop %v877
    %v879 = vmul.f32 1.0, %v878
    %v880 = vrot.slane %v213, 2
    %v881 = vrot.slane %v218, 1
    %v882 = vsel %vm310, %v881, %v880
    %v884 = vmul.f32 %v879, %v882
    %v885 = vadd.f32 %v605, %v884
    %v886 = vtanh.pop %v885
    %v887 = vsub.f32 %v886, %v882
    %889 = vrot.lane.b32.xlu0 %v887, 32
    %v890 = vpop.permute.xlu0 %889
    %v892 = vmul.f32 %v879, %v890
    %v894 = vrot.slane %v892, 6
    %v895 = vrot.slane %v892, 7
    %896 = vrot.lane.b32.xlu0 %v894, 96
    %v897 = vpop.permute.xlu0 %896
    %898 = vrot.lane.b32.xlu0 %v895, 96
    %v899 = vpop.permute.xlu0 %898
    %v902 = vadd.f32 %v213, %v897
    %v903 = vadd.f32 %v218, %v899
    %v906 = vrot.slane %v902, 2
    %v907 = vrot.slane %v903, 1
    %v908 = vsel %vm310, %v907, %v906
    %v909 = vsel %vm227, %v908, 0
    %911 = vmatprep.subr.mxu0 0.0
    %912 = vmatpush1.msra.mxu0 %v119
    %913 = vmatprep.subr.mxu0 0.0
    %914 = vmatpush1.msra.mxu0 %v120
    %915 = vmatprep.subr.mxu0 0.0
    %916 = vmatpush1.msra.mxu0 %v121
    %917 = vmatprep.subr.mxu0 0.0
    %918 = vmatpush1.msra.mxu0 %v122
    %919 = vmatprep.subr.mxu0 0.0
    %920 = vmatpush1.msra.mxu0 0.0
    %921 = vmatprep.subr.mxu0 0.0
    %922 = vmatpush1.msra.mxu0 0.0
    %923 = vmatprep.subr.mxu0 0.0
    %924 = vmatpush1.msra.mxu0 0.0
    %925 = vmatprep.subr.mxu0 0.0
    %926 = vmatpush1.msra.mxu0 0.0
    %927 = vmatprep.subr.mxu0 0.0
    %928 = vmatpush1.msra.mxu0 0.0
    %929 = vmatprep.subr.mxu0 0.0
    %930 = vmatpush1.msra.mxu0 0.0
    %931 = vmatprep.subr.mxu0 0.0
    %932 = vmatpush1.msra.mxu0 0.0
    %933 = vmatprep.subr.mxu0 0.0
    %934 = vmatpush1.msra.mxu0 0.0
    %935 = vmatprep.subr.mxu0 0.0
    %936 = vmatpush1.msra.mxu0 0.0
    %937 = vmatprep.subr.mxu0 0.0
    %938 = vmatpush1.msra.mxu0 0.0
    %939 = vmatprep.subr.mxu0 0.0
    %940 = vmatpush1.msra.mxu0 0.0
    %941 = vmatprep.subr.mxu0 0.0
    %942 = vmatpush1.msra.mxu0 0.0
    %943 = vmatprep.subr.mxu0 0.0
    %944 = vmatpush1.msra.mxu0 0.0
    %945 = vmatprep.subr.mxu0 0.0
    %946 = vmatpush1.msra.mxu0 0.0
    %947 = vmatprep.subr.mxu0 0.0
    %948 = vmatpush1.msra.mxu0 0.0
    %949 = vmatprep.subr.mxu0 0.0
    %950 = vmatpush1.msra.mxu0 0.0
    %951 = vmatprep.subr.mxu0 0.0
    %952 = vmatpush1.msra.mxu0 0.0
    %953 = vmatprep.subr.mxu0 0.0
    %954 = vmatpush1.msra.mxu0 0.0
    %955 = vmatprep.subr.mxu0 0.0
    %956 = vmatpush1.msra.mxu0 0.0
    %957 = vmatprep.subr.mxu0 0.0
    %958 = vmatpush1.msra.mxu0 0.0
    %959 = vmatprep.subr.mxu0 0.0
    %960 = vmatpush1.msra.mxu0 0.0
    %961 = vmatprep.subr.mxu0 0.0
    %962 = vmatpush1.msra.mxu0 0.0
    %963 = vmatprep.subr.mxu0 0.0
    %964 = vmatpush1.msra.mxu0 0.0
    %965 = vmatprep.subr.mxu0 0.0
    %966 = vmatpush1.msra.mxu0 0.0
    %967 = vmatprep.subr.mxu0 0.0
    %968 = vmatpush1.msra.mxu0 0.0
    %969 = vmatprep.subr.mxu0 0.0
    %970 = vmatpush1.msra.mxu0 0.0
    %971 = vmatprep.subr.mxu0 0.0
    %972 = vmatpush1.msra.mxu0 0.0
    %973 = vmatprep.subr.mxu0 0.0
    %974 = vmatpush1.msra.mxu0 0.0
    %975 = vmatprep.mubr.f32.mxu0 0.0
    %976 = vmatmul.mubr.f32.gmra.mrb[0].mxu0 %v909
    %v977 = vpop.f32.mrb[0].mxu0
    %v978 = vadd.f32 %v336, %v977
    %v979 = vpop.f32.mrb[0].mxu0
    %980 = vdwg.mxu0
    %v981 = vsel %vm227, %v793, 0
    %983 = vmatprep.subr.mxu0 0.0
    %984 = vmatpush1.msra.mxu0 %v124
    %985 = vmatprep.subr.mxu0 0.0
    %986 = vmatpush1.msra.mxu0 %v125
    %987 = vmatprep.subr.mxu0 0.0
    %988 = vmatpush1.msra.mxu0 %v126
    %989 = vmatprep.subr.mxu0 0.0
    %990 = vmatpush1.msra.mxu0 %v127
    %991 = vmatprep.subr.mxu0 0.0
    %992 = vmatpush1.msra.mxu0 0.0
    %993 = vmatprep.subr.mxu0 0.0
    %994 = vmatpush1.msra.mxu0 0.0
    %995 = vmatprep.subr.mxu0 0.0
    %996 = vmatpush1.msra.mxu0 0.0
    %997 = vmatprep.subr.mxu0 0.0
    %998 = vmatpush1.msra.mxu0 0.0
    %999 = vmatprep.subr.mxu0 0.0
    %1000 = vmatpush1.msra.mxu0 0.0
    %1001 = vmatprep.subr.mxu0 0.0
    %1002 = vmatpush1.msra.mxu0 0.0
    %1003 = vmatprep.subr.mxu0 0.0
    %1004 = vmatpush1.msra.mxu0 0.0
    %1005 = vmatprep.subr.mxu0 0.0
    %1006 = vmatpush1.msra.mxu0 0.0
    %1007 = vmatprep.subr.mxu0 0.0
    %1008 = vmatpush1.msra.mxu0 0.0
    %1009 = vmatprep.subr.mxu0 0.0
    %1010 = vmatpush1.msra.mxu0 0.0
    %1011 = vmatprep.subr.mxu0 0.0
    %1012 = vmatpush1.msra.mxu0 0.0
    %1013 = vmatprep.subr.mxu0 0.0
    %1014 = vmatpush1.msra.mxu0 0.0
    %1015 = vmatprep.subr.mxu0 0.0
    %1016 = vmatpush1.msra.mxu0 0.0
    %1017 = vmatprep.subr.mxu0 0.0
    %1018 = vmatpush1.msra.mxu0 0.0
    %1019 = vmatprep.subr.mxu0 0.0
    %1020 = vmatpush1.msra.mxu0 0.0
    %1021 = vmatprep.subr.mxu0 0.0
    %1022 = vmatpush1.msra.mxu0 0.0
    %1023 = vmatprep.subr.mxu0 0.0
    %1024 = vmatpush1.msra.mxu0 0.0
    %1025 = vmatprep.subr.mxu0 0.0
    %1026 = vmatpush1.msra.mxu0 0.0
    %1027 = vmatprep.subr.mxu0 0.0
    %1028 = vmatpush1.msra.mxu0 0.0
    %1029 = vmatprep.subr.mxu0 0.0
    %1030 = vmatpush1.msra.mxu0 0.0
    %1031 = vmatprep.subr.mxu0 0.0
    %1032 = vmatpush1.msra.mxu0 0.0
    %1033 = vmatprep.subr.mxu0 0.0
    %1034 = vmatpush1.msra.mxu0 0.0
    %1035 = vmatprep.subr.mxu0 0.0
    %1036 = vmatpush1.msra.mxu0 0.0
    %1037 = vmatprep.subr.mxu0 0.0
    %1038 = vmatpush1.msra.mxu0 0.0
    %1039 = vmatprep.subr.mxu0 0.0
    %1040 = vmatpush1.msra.mxu0 0.0
    %1041 = vmatprep.subr.mxu0 0.0
    %1042 = vmatpush1.msra.mxu0 0.0
    %1043 = vmatprep.subr.mxu0 0.0
    %1044 = vmatpush1.msra.mxu0 0.0
    %1045 = vmatprep.subr.mxu0 0.0
    %1046 = vmatpush1.msra.mxu0 0.0
    %1047 = vmatprep.mubr.f32.mxu0 0.0
    %1048 = vmatmul.mubr.f32.gmra.mrb[0].mxu0 %v981
    %v1049 = vpop.f32.mrb[0].mxu0
    %v1050 = vadd.f32 %v418, %v1049
    %v1051 = vpop.f32.mrb[0].mxu0
    %1052 = vdwg.mxu0
    %v1053 = vxor.u32 %v1050, 2147483648
    %v1054 = vmul.f32 %v1053, 1.442695
    %v1055 = vpow.pop %v1054
    %v1056 = vadd.f32 %v1055, 1.0
    %v1057 = vrcp.pop %v1056
    %v1058 = vmul.f32 1.0, %v1057
    %v1059 = vmul.f32 %v1058, %v978
    %1061 = vrot.lane.b32.xlu0 %v1059, 32
    %v1062 = vpop.permute.xlu0 %1061
    %v1064 = vadd.f32 %v782, %v1062
    %v1065 = vtanh.pop %v1064
    %1067 = vrot.lane.b32.xlu0 %v978, 32
    %v1068 = vpop.permute.xlu0 %1067
    %v1070 = vsub.f32 %v1065, %v1068
    %v1071 = vmul.f32 %v1058, %v1070
    %1073 = vrot.lane.b32.xlu0 %v1071, 96
    %v1074 = vpop.permute.xlu0 %1073
    %v1076 = vadd.f32 %v978, %v1074
    %v1077 = vrot.slane %v903, 7
    %vm1078 = vcmask 1043459
    %v1079 = vsel %vm1078, %v1077, %v902
    %v1082 = vrot.slane %v1076, 6
    %1083 = vrot.lane.b32.xlu0 %v1082, 32
    %v1084 = vpop.permute.xlu0 %1083
    %v1086 = vsel %vm227, %v1079, %v1084
    %1087 = vmatprep.subr.mxu0 0.0
    %1088 = vmatpush1.msra.mxu0 %v114
    %1089 = vmatprep.subr.mxu0 0.0
    %1090 = vmatpush1.msra.mxu0 %v115
    %1091 = vmatprep.subr.mxu0 0.0
    %1092 = vmatpush1.msra.mxu0 %v116
    %1093 = vmatprep.subr.mxu0 0.0
    %1094 = vmatpush1.msra.mxu0 %v117
    %1095 = vmatprep.subr.mxu0 0.0
    %1096 = vmatpush1.msra.mxu0 0.0
    %1097 = vmatprep.subr.mxu0 0.0
    %1098 = vmatpush1.msra.mxu0 0.0
    %1099 = vmatprep.subr.mxu0 0.0
    %1100 = vmatpush1.msra.mxu0 0.0
    %1101 = vmatprep.subr.mxu0 0.0
    %1102 = vmatpush1.msra.mxu0 0.0
    %1103 = vmatprep.subr.mxu0 0.0
    %1104 = vmatpush1.msra.mxu0 0.0
    %1105 = vmatprep.subr.mxu0 0.0
    %1106 = vmatpush1.msra.mxu0 0.0
    %1107 = vmatprep.subr.mxu0 0.0
    %1108 = vmatpush1.msra.mxu0 0.0
    %1109 = vmatprep.subr.mxu0 0.0
    %1110 = vmatpush1.msra.mxu0 0.0
    %1111 = vmatprep.subr.mxu0 0.0
    %1112 = vmatpush1.msra.mxu0 0.0
    %1113 = vmatprep.subr.mxu0 0.0
    %1114 = vmatpush1.msra.mxu0 0.0
    %1115 = vmatprep.subr.mxu0 0.0
    %1116 = vmatpush1.msra.mxu0 0.0
    %1117 = vmatprep.subr.mxu0 0.0
    %1118 = vmatpush1.msra.mxu0 0.0
    %1119 = vmatprep.subr.mxu0 0.0
    %1120 = vmatpush1.msra.mxu0 0.0
    %1121 = vmatprep.subr.mxu0 0.0
    %1122 = vmatpush1.msra.mxu0 0.0
    %1123 = vmatprep.subr.mxu0 0.0
    %1124 = vmatpush1.msra.mxu0 0.0
    %1125 = vmatprep.subr.mxu0 0.0
    %1126 = vmatpush1.msra.mxu0 0.0
    %1127 = vmatprep.subr.mxu0 0.0
    %1128 = vmatpush1.msra.mxu0 0.0
    %1129 = vmatprep.subr.mxu0 0.0
    %1130 = vmatpush1.msra.mxu0 0.0
    %1131 = vmatprep.subr.mxu0 0.0
    %1132 = vmatpush1.msra.mxu0 0.0
    %1133 = vmatprep.subr.mxu0 0.0
    %1134 = vmatpush1.msra.mxu0 0.0
    %1135 = vmatprep.subr.mxu0 0.0
    %1136 = vmatpush1.msra.mxu0 0.0
    %1137 = vmatprep.subr.mxu0 0.0
    %1138 = vmatpush1.msra.mxu0 0.0
    %1139 = vmatprep.subr.mxu0 0.0
    %1140 = vmatpush1.msra.mxu0 0.0
    %1141 = vmatprep.subr.mxu0 0.0
    %1142 = vmatpush1.msra.mxu0 0.0
    %1143 = vmatprep.subr.mxu0 0.0
    %1144 = vmatpush1.msra.mxu0 0.0
    %1145 = vmatprep.subr.mxu0 0.0
    %1146 = vmatpush1.msra.mxu0 0.0
    %1147 = vmatprep.subr.mxu0 0.0
    %1148 = vmatpush1.msra.mxu0 0.0
    %1149 = vmatprep.subr.mxu0 0.0
    %1150 = vmatpush1.msra.mxu0 0.0
    %1151 = vmatprep.mubr.f32.mxu0 0.0
    %1152 = vmatmul.mubr.f32.gmra.mrb[0].mxu0 %v909
    %v1153 = vpop.f32.mrb[0].mxu0
    %v1154 = vadd.f32 %v225, %v1153
    %v1155 = vpop.f32.mrb[0].mxu0
    %1156 = vdwg.mxu0
    %v1157 = vxor.u32 %v1154, 2147483648
    %v1158 = vmul.f32 %v1157, 1.442695
    %v1159 = vpow.pop %v1158
    %v1160 = vadd.f32 %v1159, 1.0
    %v1161 = vrcp.pop %v1160
    %v1162 = vmul.f32 1.0, %v1161
    %v1163 = vrot.slane %v213, 3
    %v1164 = vrot.slane %v218, 2
    %v1165 = vsel %vm310, %v1164, %v1163
    %v1167 = vmul.f32 %v1162, %v1165
    %v1168 = vadd.f32 %v886, %v1167
    %v1169 = vtanh.pop %v1168
    %v1170 = vsub.f32 %v1169, %v1165
    %1172 = vrot.lane.b32.xlu0 %v1170, 32
    %v1173 = vpop.permute.xlu0 %1172
    %v1175 = vmul.f32 %v1162, %v1173
    %v1177 = vrot.slane %v1175, 5
    %v1178 = vrot.slane %v1175, 6
    %1179 = vrot.lane.b32.xlu0 %v1177, 96
    %v1180 = vpop.permute.xlu0 %1179
    %1181 = vrot.lane.b32.xlu0 %v1178, 96
    %v1182 = vpop.permute.xlu0 %1181
    %v1185 = vadd.f32 %v213, %v1180
    %v1186 = vadd.f32 %v218, %v1182
    %v1189 = vrot.slane %v1185, 3
    %v1190 = vrot.slane %v1186, 2
    %v1191 = vsel %vm310, %v1190, %v1189
    %v1192 = vsel %vm227, %v1191, 0
    %1194 = vmatprep.subr.mxu0 0.0
    %1195 = vmatpush1.msra.mxu0 %v119
    %1196 = vmatprep.subr.mxu0 0.0
    %1197 = vmatpush1.msra.mxu0 %v120
    %1198 = vmatprep.subr.mxu0 0.0
    %1199 = vmatpush1.msra.mxu0 %v121
    %1200 = vmatprep.subr.mxu0 0.0
    %1201 = vmatpush1.msra.mxu0 %v122
    %1202 = vmatprep.subr.mxu0 0.0
    %1203 = vmatpush1.msra.mxu0 0.0
    %1204 = vmatprep.subr.mxu0 0.0
    %1205 = vmatpush1.msra.mxu0 0.0
    %1206 = vmatprep.subr.mxu0 0.0
    %1207 = vmatpush1.msra.mxu0 0.0
    %1208 = vmatprep.subr.mxu0 0.0
    %1209 = vmatpush1.msra.mxu0 0.0
    %1210 = vmatprep.subr.mxu0 0.0
    %1211 = vmatpush1.msra.mxu0 0.0
    %1212 = vmatprep.subr.mxu0 0.0
    %1213 = vmatpush1.msra.mxu0 0.0
    %1214 = vmatprep.subr.mxu0 0.0
    %1215 = vmatpush1.msra.mxu0 0.0
    %1216 = vmatprep.subr.mxu0 0.0
    %1217 = vmatpush1.msra.mxu0 0.0
    %1218 = vmatprep.subr.mxu0 0.0
    %1219 = vmatpush1.msra.mxu0 0.0
    %1220 = vmatprep.subr.mxu0 0.0
    %1221 = vmatpush1.msra.mxu0 0.0
    %1222 = vmatprep.subr.mxu0 0.0
    %1223 = vmatpush1.msra.mxu0 0.0
    %1224 = vmatprep.subr.mxu0 0.0
    %1225 = vmatpush1.msra.mxu0 0.0
    %1226 = vmatprep.subr.mxu0 0.0
    %1227 = vmatpush1.msra.mxu0 0.0
    %1228 = vmatprep.subr.mxu0 0.0
    %1229 = vmatpush1.msra.mxu0 0.0
    %1230 = vmatprep.subr.mxu0 0.0
    %1231 = vmatpush1.msra.mxu0 0.0
    %1232 = vmatprep.subr.mxu0 0.0
    %1233 = vmatpush1.msra.mxu0 0.0
    %1234 = vmatprep.subr.mxu0 0.0
    %1235 = vmatpush1.msra.mxu0 0.0
    %1236 = vmatprep.subr.mxu0 0.0
    %1237 = vmatpush1.msra.mxu0 0.0
    %1238 = vmatprep.subr.mxu0 0.0
    %1239 = vmatpush1.msra.mxu0 0.0
    %1240 = vmatprep.subr.mxu0 0.0
    %1241 = vmatpush1.msra.mxu0 0.0
    %1242 = vmatprep.subr.mxu0 0.0
    %1243 = vmatpush1.msra.mxu0 0.0
    %1244 = vmatprep.subr.mxu0 0.0
    %1245 = vmatpush1.msra.mxu0 0.0
    %1246 = vmatprep.subr.mxu0 0.0
    %1247 = vmatpush1.msra.mxu0 0.0
    %1248 = vmatprep.subr.mxu0 0.0
    %1249 = vmatpush1.msra.mxu0 0.0
    %1250 = vmatprep.subr.mxu0 0.0
    %1251 = vmatpush1.msra.mxu0 0.0
    %1252 = vmatprep.subr.mxu0 0.0
    %1253 = vmatpush1.msra.mxu0 0.0
    %1254 = vmatprep.subr.mxu0 0.0
    %1255 = vmatpush1.msra.mxu0 0.0
    %1256 = vmatprep.subr.mxu0 0.0
    %1257 = vmatpush1.msra.mxu0 0.0
    %1258 = vmatprep.mubr.f32.mxu0 0.0
    %1259 = vmatmul.mubr.f32.gmra.mrb[0].mxu0 %v1192
    %v1260 = vpop.f32.mrb[0].mxu0
    %v1261 = vadd.f32 %v336, %v1260
    %v1262 = vpop.f32.mrb[0].mxu0
    %1263 = vdwg.mxu0
    %v1264 = vsel %vm227, %v1076, 0
    %1266 = vmatprep.subr.mxu0 0.0
    %1267 = vmatpush1.msra.mxu0 %v124
    %1268 = vmatprep.subr.mxu0 0.0
    %1269 = vmatpush1.msra.mxu0 %v125
    %1270 = vmatprep.subr.mxu0 0.0
    %1271 = vmatpush1.msra.mxu0 %v126
    %1272 = vmatprep.subr.mxu0 0.0
    %1273 = vmatpush1.msra.mxu0 %v127
    %1274 = vmatprep.subr.mxu0 0.0
    %1275 = vmatpush1.msra.mxu0 0.0
    %1276 = vmatprep.subr.mxu0 0.0
    %1277 = vmatpush1.msra.mxu0 0.0
    %1278 = vmatprep.subr.mxu0 0.0
    %1279 = vmatpush1.msra.mxu0 0.0
    %1280 = vmatprep.subr.mxu0 0.0
    %1281 = vmatpush1.msra.mxu0 0.0
    %1282 = vmatprep.subr.mxu0 0.0
    %1283 = vmatpush1.msra.mxu0 0.0
    %1284 = vmatprep.subr.mxu0 0.0
    %1285 = vmatpush1.msra.mxu0 0.0
    %1286 = vmatprep.subr.mxu0 0.0
    %1287 = vmatpush1.msra.mxu0 0.0
    %1288 = vmatprep.subr.mxu0 0.0
    %1289 = vmatpush1.msra.mxu0 0.0
    %1290 = vmatprep.subr.mxu0 0.0
    %1291 = vmatpush1.msra.mxu0 0.0
    %1292 = vmatprep.subr.mxu0 0.0
    %1293 = vmatpush1.msra.mxu0 0.0
    %1294 = vmatprep.subr.mxu0 0.0
    %1295 = vmatpush1.msra.mxu0 0.0
    %1296 = vmatprep.subr.mxu0 0.0
    %1297 = vmatpush1.msra.mxu0 0.0
    %1298 = vmatprep.subr.mxu0 0.0
    %1299 = vmatpush1.msra.mxu0 0.0
    %1300 = vmatprep.subr.mxu0 0.0
    %1301 = vmatpush1.msra.mxu0 0.0
    %1302 = vmatprep.subr.mxu0 0.0
    %1303 = vmatpush1.msra.mxu0 0.0
    %1304 = vmatprep.subr.mxu0 0.0
    %1305 = vmatpush1.msra.mxu0 0.0
    %1306 = vmatprep.subr.mxu0 0.0
    %1307 = vmatpush1.msra.mxu0 0.0
    %1308 = vmatprep.subr.mxu0 0.0
    %1309 = vmatpush1.msra.mxu0 0.0
    %1310 = vmatprep.subr.mxu0 0.0
    %1311 = vmatpush1.msra.mxu0 0.0
    %1312 = vmatprep.subr.mxu0 0.0
    %1313 = vmatpush1.msra.mxu0 0.0
    %1314 = vmatprep.subr.mxu0 0.0
    %1315 = vmatpush1.msra.mxu0 0.0
    %1316 = vmatprep.subr.mxu0 0.0
    %1317 = vmatpush1.msra.mxu0 0.0
    %1318 = vmatprep.subr.mxu0 0.0
    %1319 = vmatpush1.msra.mxu0 0.0
    %1320 = vmatprep.subr.mxu0 0.0
    %1321 = vmatpush1.msra.mxu0 0.0
    %1322 = vmatprep.subr.mxu0 0.0
    %1323 = vmatpush1.msra.mxu0 0.0
    %1324 = vmatprep.subr.mxu0 0.0
    %1325 = vmatpush1.msra.mxu0 0.0
    %1326 = vmatprep.subr.mxu0 0.0
    %1327 = vmatpush1.msra.mxu0 0.0
    %1328 = vmatprep.subr.mxu0 0.0
    %1329 = vmatpush1.msra.mxu0 0.0
    %1330 = vmatprep.mubr.f32.mxu0 0.0
    %1331 = vmatmul.mubr.f32.gmra.mrb[0].mxu0 %v1264
    %v1332 = vpop.f32.mrb[0].mxu0
    %v1333 = vadd.f32 %v418, %v1332
    %v1334 = vpop.f32.mrb[0].mxu0
    %1335 = vdwg.mxu0
    %v1336 = vxor.u32 %v1333, 2147483648
    %v1337 = vmul.f32 %v1336, 1.442695
    %v1338 = vpow.pop %v1337
    %v1339 = vadd.f32 %v1338, 1.0
    %v1340 = vrcp.pop %v1339
    %v1341 = vmul.f32 1.0, %v1340
    %v1342 = vmul.f32 %v1341, %v1261
    %1344 = vrot.lane.b32.xlu0 %v1342, 32
    %v1345 = vpop.permute.xlu0 %1344
    %v1347 = vadd.f32 %v1065, %v1345
    %v1348 = vtanh.pop %v1347
    %1350 = vrot.lane.b32.xlu0 %v1261, 32
    %v1351 = vpop.permute.xlu0 %1350
    %v1353 = vsub.f32 %v1348, %v1351
    %v1354 = vmul.f32 %v1341, %v1353
    %1356 = vrot.lane.b32.xlu0 %v1354, 96
    %v1357 = vpop.permute.xlu0 %1356
    %v1359 = vadd.f32 %v1261, %v1357
    %v1360 = vrot.slane %v1186, 7
    %vm1361 = vcmask 1044484
    %v1362 = vsel %vm1361, %v1360, %v1185
    %v1365 = vrot.slane %v1359, 5
    %1366 = vrot.lane.b32.xlu0 %v1365, 32
    %v1367 = vpop.permute.xlu0 %1366
    %v1369 = vsel %vm227, %v1362, %v1367
    %1370 = vmatprep.subr.mxu0 0.0
    %1371 = vmatpush1.msra.mxu0 %v114
    %1372 = vmatprep.subr.mxu0 0.0
    %1373 = vmatpush1.msra.mxu0 %v115
    %1374 = vmatprep.subr.mxu0 0.0
    %1375 = vmatpush1.msra.mxu0 %v116
    %1376 = vmatprep.subr.mxu0 0.0
    %1377 = vmatpush1.msra.mxu0 %v117
    %1378 = vmatprep.subr.mxu0 0.0
    %1379 = vmatpush1.msra.mxu0 0.0
    %1380 = vmatprep.subr.mxu0 0.0
    %1381 = vmatpush1.msra.mxu0 0.0
    %1382 = vmatprep.subr.mxu0 0.0
    %1383 = vmatpush1.msra.mxu0 0.0
    %1384 = vmatprep.subr.mxu0 0.0
    %1385 = vmatpush1.msra.mxu0 0.0
    %1386 = vmatprep.subr.mxu0 0.0
    %1387 = vmatpush1.msra.mxu0 0.0
    %1388 = vmatprep.subr.mxu0 0.0
    %1389 = vmatpush1.msra.mxu0 0.0
    %1390 = vmatprep.subr.mxu0 0.0
    %1391 = vmatpush1.msra.mxu0 0.0
    %1392 = vmatprep.subr.mxu0 0.0
    %1393 = vmatpush1.msra.mxu0 0.0
    %1394 = vmatprep.subr.mxu0 0.0
    %1395 = vmatpush1.msra.mxu0 0.0
    %1396 = vmatprep.subr.mxu0 0.0
    %1397 = vmatpush1.msra.mxu0 0.0
    %1398 = vmatprep.subr.mxu0 0.0
    %1399 = vmatpush1.msra.mxu0 0.0
    %1400 = vmatprep.subr.mxu0 0.0
    %1401 = vmatpush1.msra.mxu0 0.0
    %1402 = vmatprep.subr.mxu0 0.0
    %1403 = vmatpush1.msra.mxu0 0.0
    %1404 = vmatprep.subr.mxu0 0.0
    %1405 = vmatpush1.msra.mxu0 0.0
    %1406 = vmatprep.subr.mxu0 0.0
    %1407 = vmatpush1.msra.mxu0 0.0
    %1408 = vmatprep.subr.mxu0 0.0
    %1409 = vmatpush1.msra.mxu0 0.0
    %1410 = vmatprep.subr.mxu0 0.0
    %1411 = vmatpush1.msra.mxu0 0.0
    %1412 = vmatprep.subr.mxu0 0.0
    %1413 = vmatpush1.msra.mxu0 0.0
    %1414 = vmatprep.subr.mxu0 0.0
    %1415 = vmatpush1.msra.mxu0 0.0
    %1416 = vmatprep.subr.mxu0 0.0
    %1417 = vmatpush1.msra.mxu0 0.0
    %1418 = vmatprep.subr.mxu0 0.0
    %1419 = vmatpush1.msra.mxu0 0.0
    %1420 = vmatprep.subr.mxu0 0.0
    %1421 = vmatpush1.msra.mxu0 0.0
    %1422 = vmatprep.subr.mxu0 0.0
    %1423 = vmatpush1.msra.mxu0 0.0
    %1424 = vmatprep.subr.mxu0 0.0
    %1425 = vmatpush1.msra.mxu0 0.0
    %1426 = vmatprep.subr.mxu0 0.0
    %1427 = vmatpush1.msra.mxu0 0.0
    %1428 = vmatprep.subr.mxu0 0.0
    %1429 = vmatpush1.msra.mxu0 0.0
    %1430 = vmatprep.subr.mxu0 0.0
    %1431 = vmatpush1.msra.mxu0 0.0
    %1432 = vmatprep.subr.mxu0 0.0
    %1433 = vmatpush1.msra.mxu0 0.0
    %1434 = vmatprep.mubr.f32.mxu0 0.0
    %1435 = vmatmul.mubr.f32.gmra.mrb[0].mxu0 %v1192
    %v1436 = vpop.f32.mrb[0].mxu0
    %v1437 = vadd.f32 %v225, %v1436
    %v1438 = vpop.f32.mrb[0].mxu0
    %1439 = vdwg.mxu0
    %v1440 = vxor.u32 %v1437, 2147483648
    %v1441 = vmul.f32 %v1440, 1.442695
    %v1442 = vpow.pop %v1441
    %v1443 = vadd.f32 %v1442, 1.0
    %v1444 = vrcp.pop %v1443
    %v1445 = vmul.f32 1.0, %v1444
    %v1446 = vrot.slane %v213, 4
    %v1447 = vrot.slane %v218, 3
    %v1448 = vsel %vm310, %v1447, %v1446
    %v1450 = vmul.f32 %v1445, %v1448
    %v1451 = vadd.f32 %v1169, %v1450
    %v1452 = vtanh.pop %v1451
    %v1453 = vsub.f32 %v1452, %v1448
    %1455 = vrot.lane.b32.xlu0 %v1453, 32
    %v1456 = vpop.permute.xlu0 %1455
    %v1458 = vmul.f32 %v1445, %v1456
    %v1460 = vrot.slane %v1458, 4
    %v1461 = vrot.slane %v1458, 5
    %1462 = vrot.lane.b32.xlu0 %v1460, 96
    %v1463 = vpop.permute.xlu0 %1462
    %1464 = vrot.lane.b32.xlu0 %v1461, 96
    %v1465 = vpop.permute.xlu0 %1464
    %v1468 = vadd.f32 %v213, %v1463
    %v1469 = vadd.f32 %v218, %v1465
    %v1472 = vrot.slane %v1468, 4
    %v1473 = vrot.slane %v1469, 3
    %v1474 = vsel %vm310, %v1473, %v1472
    %v1475 = vsel %vm227, %v1474, 0
    %1477 = vmatprep.subr.mxu0 0.0
    %1478 = vmatpush1.msra.mxu0 %v119
    %1479 = vmatprep.subr.mxu0 0.0
    %1480 = vmatpush1.msra.mxu0 %v120
    %1481 = vmatprep.subr.mxu0 0.0
    %1482 = vmatpush1.msra.mxu0 %v121
    %1483 = vmatprep.subr.mxu0 0.0
    %1484 = vmatpush1.msra.mxu0 %v122
    %1485 = vmatprep.subr.mxu0 0.0
    %1486 = vmatpush1.msra.mxu0 0.0
    %1487 = vmatprep.subr.mxu0 0.0
    %1488 = vmatpush1.msra.mxu0 0.0
    %1489 = vmatprep.subr.mxu0 0.0
    %1490 = vmatpush1.msra.mxu0 0.0
    %1491 = vmatprep.subr.mxu0 0.0
    %1492 = vmatpush1.msra.mxu0 0.0
    %1493 = vmatprep.subr.mxu0 0.0
    %1494 = vmatpush1.msra.mxu0 0.0
    %1495 = vmatprep.subr.mxu0 0.0
    %1496 = vmatpush1.msra.mxu0 0.0
    %1497 = vmatprep.subr.mxu0 0.0
    %1498 = vmatpush1.msra.mxu0 0.0
    %1499 = vmatprep.subr.mxu0 0.0
    %1500 = vmatpush1.msra.mxu0 0.0
    %1501 = vmatprep.subr.mxu0 0.0
    %1502 = vmatpush1.msra.mxu0 0.0
    %1503 = vmatprep.subr.mxu0 0.0
    %1504 = vmatpush1.msra.mxu0 0.0
    %1505 = vmatprep.subr.mxu0 0.0
    %1506 = vmatpush1.msra.mxu0 0.0
    %1507 = vmatprep.subr.mxu0 0.0
    %1508 = vmatpush1.msra.mxu0 0.0
    %1509 = vmatprep.subr.mxu0 0.0
    %1510 = vmatpush1.msra.mxu0 0.0
    %1511 = vmatprep.subr.mxu0 0.0
    %1512 = vmatpush1.msra.mxu0 0.0
    %1513 = vmatprep.subr.mxu0 0.0
    %1514 = vmatpush1.msra.mxu0 0.0
    %1515 = vmatprep.subr.mxu0 0.0
    %1516 = vmatpush1.msra.mxu0 0.0
    %1517 = vmatprep.subr.mxu0 0.0
    %1518 = vmatpush1.msra.mxu0 0.0
    %1519 = vmatprep.subr.mxu0 0.0
    %1520 = vmatpush1.msra.mxu0 0.0
    %1521 = vmatprep.subr.mxu0 0.0
    %1522 = vmatpush1.msra.mxu0 0.0
    %1523 = vmatprep.subr.mxu0 0.0
    %1524 = vmatpush1.msra.mxu0 0.0
    %1525 = vmatprep.subr.mxu0 0.0
    %1526 = vmatpush1.msra.mxu0 0.0
    %1527 = vmatprep.subr.mxu0 0.0
    %1528 = vmatpush1.msra.mxu0 0.0
    %1529 = vmatprep.subr.mxu0 0.0
    %1530 = vmatpush1.msra.mxu0 0.0
    %1531 = vmatprep.subr.mxu0 0.0
    %1532 = vmatpush1.msra.mxu0 0.0
    %1533 = vmatprep.subr.mxu0 0.0
    %1534 = vmatpush1.msra.mxu0 0.0
    %1535 = vmatprep.subr.mxu0 0.0
    %1536 = vmatpush1.msra.mxu0 0.0
    %1537 = vmatprep.subr.mxu0 0.0
    %1538 = vmatpush1.msra.mxu0 0.0
    %1539 = vmatprep.subr.mxu0 0.0
    %1540 = vmatpush1.msra.mxu0 0.0
    %1541 = vmatprep.mubr.f32.mxu0 0.0
    %1542 = vmatmul.mubr.f32.gmra.mrb[0].mxu0 %v1475
    %v1543 = vpop.f32.mrb[0].mxu0
    %v1544 = vadd.f32 %v336, %v1543
    %v1545 = vpop.f32.mrb[0].mxu0
    %1546 = vdwg.mxu0
    %v1547 = vsel %vm227, %v1359, 0
    %1549 = vmatprep.subr.mxu0 0.0
    %1550 = vmatpush1.msra.mxu0 %v124
    %1551 = vmatprep.subr.mxu0 0.0
    %1552 = vmatpush1.msra.mxu0 %v125
    %1553 = vmatprep.subr.mxu0 0.0
    %1554 = vmatpush1.msra.mxu0 %v126
    %1555 = vmatprep.subr.mxu0 0.0
    %1556 = vmatpush1.msra.mxu0 %v127
    %1557 = vmatprep.subr.mxu0 0.0
    %1558 = vmatpush1.msra.mxu0 0.0
    %1559 = vmatprep.subr.mxu0 0.0
    %1560 = vmatpush1.msra.mxu0 0.0
    %1561 = vmatprep.subr.mxu0 0.0
    %1562 = vmatpush1.msra.mxu0 0.0
    %1563 = vmatprep.subr.mxu0 0.0
    %1564 = vmatpush1.msra.mxu0 0.0
    %1565 = vmatprep.subr.mxu0 0.0
    %1566 = vmatpush1.msra.mxu0 0.0
    %1567 = vmatprep.subr.mxu0 0.0
    %1568 = vmatpush1.msra.mxu0 0.0
    %1569 = vmatprep.subr.mxu0 0.0
    %1570 = vmatpush1.msra.mxu0 0.0
    %1571 = vmatprep.subr.mxu0 0.0
    %1572 = vmatpush1.msra.mxu0 0.0
    %1573 = vmatprep.subr.mxu0 0.0
    %1574 = vmatpush1.msra.mxu0 0.0
    %1575 = vmatprep.subr.mxu0 0.0
    %1576 = vmatpush1.msra.mxu0 0.0
    %1577 = vmatprep.subr.mxu0 0.0
    %1578 = vmatpush1.msra.mxu0 0.0
    %1579 = vmatprep.subr.mxu0 0.0
    %1580 = vmatpush1.msra.mxu0 0.0
    %1581 = vmatprep.subr.mxu0 0.0
    %1582 = vmatpush1.msra.mxu0 0.0
    %1583 = vmatprep.subr.mxu0 0.0
    %1584 = vmatpush1.msra.mxu0 0.0
    %1585 = vmatprep.subr.mxu0 0.0
    %1586 = vmatpush1.msra.mxu0 0.0
    %1587 = vmatprep.subr.mxu0 0.0
    %1588 = vmatpush1.msra.mxu0 0.0
    %1589 = vmatprep.subr.mxu0 0.0
    %1590 = vmatpush1.msra.mxu0 0.0
    %1591 = vmatprep.subr.mxu0 0.0
    %1592 = vmatpush1.msra.mxu0 0.0
    %1593 = vmatprep.subr.mxu0 0.0
    %1594 = vmatpush1.msra.mxu0 0.0
    %1595 = vmatprep.subr.mxu0 0.0
    %1596 = vmatpush1.msra.mxu0 0.0
    %1597 = vmatprep.subr.mxu0 0.0
    %1598 = vmatpush1.msra.mxu0 0.0
    %1599 = vmatprep.subr.mxu0 0.0
    %1600 = vmatpush1.msra.mxu0 0.0
    %1601 = vmatprep.subr.mxu0 0.0
    %1602 = vmatpush1.msra.mxu0 0.0
    %1603 = vmatprep.subr.mxu0 0.0
    %1604 = vmatpush1.msra.mxu0 0.0
    %1605 = vmatprep.subr.mxu0 0.0
    %1606 = vmatpush1.msra.mxu0 0.0
    %1607 = vmatprep.subr.mxu0 0.0
    %1608 = vmatpush1.msra.mxu0 0.0
    %1609 = vmatprep.subr.mxu0 0.0
    %1610 = vmatpush1.msra.mxu0 0.0
    %1611 = vmatprep.subr.mxu0 0.0
    %1612 = vmatpush1.msra.mxu0 0.0
    %1613 = vmatprep.mubr.f32.mxu0 0.0
    %1614 = vmatmul.mubr.f32.gmra.mrb[0].mxu0 %v1547
    %v1615 = vpop.f32.mrb[0].mxu0
    %v1616 = vadd.f32 %v418, %v1615
    %v1617 = vpop.f32.mrb[0].mxu0
    %1618 = vdwg.mxu0
    %v1619 = vxor.u32 %v1616, 2147483648
    %v1620 = vmul.f32 %v1619, 1.442695
    %v1621 = vpow.pop %v1620
    %v1622 = vadd.f32 %v1621, 1.0
    %v1623 = vrcp.pop %v1622
    %v1624 = vmul.f32 1.0, %v1623
    %v1625 = vmul.f32 %v1624, %v1544
    %1627 = vrot.lane.b32.xlu0 %v1625, 32
    %v1628 = vpop.permute.xlu0 %1627
    %v1630 = vadd.f32 %v1348, %v1628
    %v1631 = vtanh.pop %v1630
    %1633 = vrot.lane.b32.xlu0 %v1544, 32
    %v1634 = vpop.permute.xlu0 %1633
    %v1636 = vsub.f32 %v1631, %v1634
    %v1637 = vmul.f32 %v1624, %v1636
    %1639 = vrot.lane.b32.xlu0 %v1637, 96
    %v1640 = vpop.permute.xlu0 %1639
    %v1642 = vadd.f32 %v1544, %v1640
    %v1643 = vrot.slane %v1469, 7
    %vm1644 = vcmask 1045509
    %v1645 = vsel %vm1644, %v1643, %v1468
    %v1648 = vrot.slane %v1642, 4
    %1649 = vrot.lane.b32.xlu0 %v1648, 32
    %v1650 = vpop.permute.xlu0 %1649
    %v1652 = vsel %vm227, %v1645, %v1650
    %1653 = vmatprep.subr.mxu0 0.0
    %1654 = vmatpush1.msra.mxu0 %v114
    %1655 = vmatprep.subr.mxu0 0.0
    %1656 = vmatpush1.msra.mxu0 %v115
    %1657 = vmatprep.subr.mxu0 0.0
    %1658 = vmatpush1.msra.mxu0 %v116
    %1659 = vmatprep.subr.mxu0 0.0
    %1660 = vmatpush1.msra.mxu0 %v117
    %1661 = vmatprep.subr.mxu0 0.0
    %1662 = vmatpush1.msra.mxu0 0.0
    %1663 = vmatprep.subr.mxu0 0.0
    %1664 = vmatpush1.msra.mxu0 0.0
    %1665 = vmatprep.subr.mxu0 0.0
    %1666 = vmatpush1.msra.mxu0 0.0
    %1667 = vmatprep.subr.mxu0 0.0
    %1668 = vmatpush1.msra.mxu0 0.0
    %1669 = vmatprep.subr.mxu0 0.0
    %1670 = vmatpush1.msra.mxu0 0.0
    %1671 = vmatprep.subr.mxu0 0.0
    %1672 = vmatpush1.msra.mxu0 0.0
    %1673 = vmatprep.subr.mxu0 0.0
    %1674 = vmatpush1.msra.mxu0 0.0
    %1675 = vmatprep.subr.mxu0 0.0
    %1676 = vmatpush1.msra.mxu0 0.0
    %1677 = vmatprep.subr.mxu0 0.0
    %1678 = vmatpush1.msra.mxu0 0.0
    %1679 = vmatprep.subr.mxu0 0.0
    %1680 = vmatpush1.msra.mxu0 0.0
    %1681 = vmatprep.subr.mxu0 0.0
    %1682 = vmatpush1.msra.mxu0 0.0
    %1683 = vmatprep.subr.mxu0 0.0
    %1684 = vmatpush1.msra.mxu0 0.0
    %1685 = vmatprep.subr.mxu0 0.0
    %1686 = vmatpush1.msra.mxu0 0.0
    %1687 = vmatprep.subr.mxu0 0.0
    %1688 = vmatpush1.msra.mxu0 0.0
    %1689 = vmatprep.subr.mxu0 0.0
    %1690 = vmatpush1.msra.mxu0 0.0
    %1691 = vmatprep.subr.mxu0 0.0
    %1692 = vmatpush1.msra.mxu0 0.0
    %1693 = vmatprep.subr.mxu0 0.0
    %1694 = vmatpush1.msra.mxu0 0.0
    %1695 = vmatprep.subr.mxu0 0.0
    %1696 = vmatpush1.msra.mxu0 0.0
    %1697 = vmatprep.subr.mxu0 0.0
    %1698 = vmatpush1.msra.mxu0 0.0
    %1699 = vmatprep.subr.mxu0 0.0
    %1700 = vmatpush1.msra.mxu0 0.0
    %1701 = vmatprep.subr.mxu0 0.0
    %1702 = vmatpush1.msra.mxu0 0.0
    %1703 = vmatprep.subr.mxu0 0.0
    %1704 = vmatpush1.msra.mxu0 0.0
    %1705 = vmatprep.subr.mxu0 0.0
    %1706 = vmatpush1.msra.mxu0 0.0
    %1707 = vmatprep.subr.mxu0 0.0
    %1708 = vmatpush1.msra.mxu0 0.0
    %1709 = vmatprep.subr.mxu0 0.0
    %1710 = vmatpush1.msra.mxu0 0.0
    %1711 = vmatprep.subr.mxu0 0.0
    %1712 = vmatpush1.msra.mxu0 0.0
    %1713 = vmatprep.subr.mxu0 0.0
    %1714 = vmatpush1.msra.mxu0 0.0
    %1715 = vmatprep.subr.mxu0 0.0
    %1716 = vmatpush1.msra.mxu0 0.0
    %1717 = vmatprep.mubr.f32.mxu0 0.0
    %1718 = vmatmul.mubr.f32.gmra.mrb[0].mxu0 %v1475
    %v1719 = vpop.f32.mrb[0].mxu0
    %v1720 = vadd.f32 %v225, %v1719
    %v1721 = vpop.f32.mrb[0].mxu0
    %1722 = vdwg.mxu0
    %v1723 = vxor.u32 %v1720, 2147483648
    %v1724 = vmul.f32 %v1723, 1.442695
    %v1725 = vpow.pop %v1724
    %v1726 = vadd.f32 %v1725, 1.0
    %v1727 = vrcp.pop %v1726
    %v1728 = vmul.f32 1.0, %v1727
    %v1729 = vrot.slane %v213, 5
    %v1730 = vrot.slane %v218, 4
    %v1731 = vsel %vm310, %v1730, %v1729
    %v1733 = vmul.f32 %v1728, %v1731
    %v1734 = vadd.f32 %v1452, %v1733
    %v1735 = vtanh.pop %v1734
    %v1736 = vsub.f32 %v1735, %v1731
    %1738 = vrot.lane.b32.xlu0 %v1736, 32
    %v1739 = vpop.permute.xlu0 %1738
    %v1741 = vmul.f32 %v1728, %v1739
    %v1743 = vrot.slane %v1741, 3
    %v1744 = vrot.slane %v1741, 4
    %1745 = vrot.lane.b32.xlu0 %v1743, 96
    %v1746 = vpop.permute.xlu0 %1745
    %1747 = vrot.lane.b32.xlu0 %v1744, 96
    %v1748 = vpop.permute.xlu0 %1747
    %v1751 = vadd.f32 %v213, %v1746
    %v1752 = vadd.f32 %v218, %v1748
    %v1755 = vrot.slane %v1751, 5
    %v1756 = vrot.slane %v1752, 4
    %v1757 = vsel %vm310, %v1756, %v1755
    %v1758 = vsel %vm227, %v1757, 0
    %1760 = vmatprep.subr.mxu0 0.0
    %1761 = vmatpush1.msra.mxu0 %v119
    %1762 = vmatprep.subr.mxu0 0.0
    %1763 = vmatpush1.msra.mxu0 %v120
    %1764 = vmatprep.subr.mxu0 0.0
    %1765 = vmatpush1.msra.mxu0 %v121
    %1766 = vmatprep.subr.mxu0 0.0
    %1767 = vmatpush1.msra.mxu0 %v122
    %1768 = vmatprep.subr.mxu0 0.0
    %1769 = vmatpush1.msra.mxu0 0.0
    %1770 = vmatprep.subr.mxu0 0.0
    %1771 = vmatpush1.msra.mxu0 0.0
    %1772 = vmatprep.subr.mxu0 0.0
    %1773 = vmatpush1.msra.mxu0 0.0
    %1774 = vmatprep.subr.mxu0 0.0
    %1775 = vmatpush1.msra.mxu0 0.0
    %1776 = vmatprep.subr.mxu0 0.0
    %1777 = vmatpush1.msra.mxu0 0.0
    %1778 = vmatprep.subr.mxu0 0.0
    %1779 = vmatpush1.msra.mxu0 0.0
    %1780 = vmatprep.subr.mxu0 0.0
    %1781 = vmatpush1.msra.mxu0 0.0
    %1782 = vmatprep.subr.mxu0 0.0
    %1783 = vmatpush1.msra.mxu0 0.0
    %1784 = vmatprep.subr.mxu0 0.0
    %1785 = vmatpush1.msra.mxu0 0.0
    %1786 = vmatprep.subr.mxu0 0.0
    %1787 = vmatpush1.msra.mxu0 0.0
    %1788 = vmatprep.subr.mxu0 0.0
    %1789 = vmatpush1.msra.mxu0 0.0
    %1790 = vmatprep.subr.mxu0 0.0
    %1791 = vmatpush1.msra.mxu0 0.0
    %1792 = vmatprep.subr.mxu0 0.0
    %1793 = vmatpush1.msra.mxu0 0.0
    %1794 = vmatprep.subr.mxu0 0.0
    %1795 = vmatpush1.msra.mxu0 0.0
    %1796 = vmatprep.subr.mxu0 0.0
    %1797 = vmatpush1.msra.mxu0 0.0
    %1798 = vmatprep.subr.mxu0 0.0
    %1799 = vmatpush1.msra.mxu0 0.0
    %1800 = vmatprep.subr.mxu0 0.0
    %1801 = vmatpush1.msra.mxu0 0.0
    %1802 = vmatprep.subr.mxu0 0.0
    %1803 = vmatpush1.msra.mxu0 0.0
    %1804 = vmatprep.subr.mxu0 0.0
    %1805 = vmatpush1.msra.mxu0 0.0
    %1806 = vmatprep.subr.mxu0 0.0
    %1807 = vmatpush1.msra.mxu0 0.0
    %1808 = vmatprep.subr.mxu0 0.0
    %1809 = vmatpush1.msra.mxu0 0.0
    %1810 = vmatprep.subr.mxu0 0.0
    %1811 = vmatpush1.msra.mxu0 0.0
    %1812 = vmatprep.subr.mxu0 0.0
    %1813 = vmatpush1.msra.mxu0 0.0
    %1814 = vmatprep.subr.mxu0 0.0
    %1815 = vmatpush1.msra.mxu0 0.0
    %1816 = vmatprep.subr.mxu0 0.0
    %1817 = vmatpush1.msra.mxu0 0.0
    %1818 = vmatprep.subr.mxu0 0.0
    %1819 = vmatpush1.msra.mxu0 0.0
    %1820 = vmatprep.subr.mxu0 0.0
    %1821 = vmatpush1.msra.mxu0 0.0
    %1822 = vmatprep.subr.mxu0 0.0
    %1823 = vmatpush1.msra.mxu0 0.0
    %1824 = vmatprep.mubr.f32.mxu0 0.0
    %1825 = vmatmul.mubr.f32.gmra.mrb[0].mxu0 %v1758
    %v1826 = vpop.f32.mrb[0].mxu0
    %v1827 = vadd.f32 %v336, %v1826
    %v1828 = vpop.f32.mrb[0].mxu0
    %1829 = vdwg.mxu0
    %v1830 = vsel %vm227, %v1642, 0
    %1832 = vmatprep.subr.mxu0 0.0
    %1833 = vmatpush1.msra.mxu0 %v124
    %1834 = vmatprep.subr.mxu0 0.0
    %1835 = vmatpush1.msra.mxu0 %v125
    %1836 = vmatprep.subr.mxu0 0.0
    %1837 = vmatpush1.msra.mxu0 %v126
    %1838 = vmatprep.subr.mxu0 0.0
    %1839 = vmatpush1.msra.mxu0 %v127
    %1840 = vmatprep.subr.mxu0 0.0
    %1841 = vmatpush1.msra.mxu0 0.0
    %1842 = vmatprep.subr.mxu0 0.0
    %1843 = vmatpush1.msra.mxu0 0.0
    %1844 = vmatprep.subr.mxu0 0.0
    %1845 = vmatpush1.msra.mxu0 0.0
    %1846 = vmatprep.subr.mxu0 0.0
    %1847 = vmatpush1.msra.mxu0 0.0
    %1848 = vmatprep.subr.mxu0 0.0
    %1849 = vmatpush1.msra.mxu0 0.0
    %1850 = vmatprep.subr.mxu0 0.0
    %1851 = vmatpush1.msra.mxu0 0.0
    %1852 = vmatprep.subr.mxu0 0.0
    %1853 = vmatpush1.msra.mxu0 0.0
    %1854 = vmatprep.subr.mxu0 0.0
    %1855 = vmatpush1.msra.mxu0 0.0
    %1856 = vmatprep.subr.mxu0 0.0
    %1857 = vmatpush1.msra.mxu0 0.0
    %1858 = vmatprep.subr.mxu0 0.0
    %1859 = vmatpush1.msra.mxu0 0.0
    %1860 = vmatprep.subr.mxu0 0.0
    %1861 = vmatpush1.msra.mxu0 0.0
    %1862 = vmatprep.subr.mxu0 0.0
    %1863 = vmatpush1.msra.mxu0 0.0
    %1864 = vmatprep.subr.mxu0 0.0
    %1865 = vmatpush1.msra.mxu0 0.0
    %1866 = vmatprep.subr.mxu0 0.0
    %1867 = vmatpush1.msra.mxu0 0.0
    %1868 = vmatprep.subr.mxu0 0.0
    %1869 = vmatpush1.msra.mxu0 0.0
    %1870 = vmatprep.subr.mxu0 0.0
    %1871 = vmatpush1.msra.mxu0 0.0
    %1872 = vmatprep.subr.mxu0 0.0
    %1873 = vmatpush1.msra.mxu0 0.0
    %1874 = vmatprep.subr.mxu0 0.0
    %1875 = vmatpush1.msra.mxu0 0.0
    %1876 = vmatprep.subr.mxu0 0.0
    %1877 = vmatpush1.msra.mxu0 0.0
    %1878 = vmatprep.subr.mxu0 0.0
    %1879 = vmatpush1.msra.mxu0 0.0
    %1880 = vmatprep.subr.mxu0 0.0
    %1881 = vmatpush1.msra.mxu0 0.0
    %1882 = vmatprep.subr.mxu0 0.0
    %1883 = vmatpush1.msra.mxu0 0.0
    %1884 = vmatprep.subr.mxu0 0.0
    %1885 = vmatpush1.msra.mxu0 0.0
    %1886 = vmatprep.subr.mxu0 0.0
    %1887 = vmatpush1.msra.mxu0 0.0
    %1888 = vmatprep.subr.mxu0 0.0
    %1889 = vmatpush1.msra.mxu0 0.0
    %1890 = vmatprep.subr.mxu0 0.0
    %1891 = vmatpush1.msra.mxu0 0.0
    %1892 = vmatprep.subr.mxu0 0.0
    %1893 = vmatpush1.msra.mxu0 0.0
    %1894 = vmatprep.subr.mxu0 0.0
    %1895 = vmatpush1.msra.mxu0 0.0
    %1896 = vmatprep.mubr.f32.mxu0 0.0
    %1897 = vmatmul.mubr.f32.gmra.mrb[0].mxu0 %v1830
    %v1898 = vpop.f32.mrb[0].mxu0
    %v1899 = vadd.f32 %v418, %v1898
    %v1900 = vpop.f32.mrb[0].mxu0
    %1901 = vdwg.mxu0
    %v1902 = vxor.u32 %v1899, 2147483648
    %v1903 = vmul.f32 %v1902, 1.442695
    %v1904 = vpow.pop %v1903
    %v1905 = vadd.f32 %v1904, 1.0
    %v1906 = vrcp.pop %v1905
    %v1907 = vmul.f32 1.0, %v1906
    %v1908 = vmul.f32 %v1907, %v1827
    %1910 = vrot.lane.b32.xlu0 %v1908, 32
    %v1911 = vpop.permute.xlu0 %1910
    %v1913 = vadd.f32 %v1631, %v1911
    %v1914 = vtanh.pop %v1913
    %1916 = vrot.lane.b32.xlu0 %v1827, 32
    %v1917 = vpop.permute.xlu0 %1916
    %v1919 = vsub.f32 %v1914, %v1917
    %v1920 = vmul.f32 %v1907, %v1919
    %1922 = vrot.lane.b32.xlu0 %v1920, 96
    %v1923 = vpop.permute.xlu0 %1922
    %v1925 = vadd.f32 %v1827, %v1923
    %v1926 = vrot.slane %v1752, 7
    %vm1927 = vcmask 1046534
    %v1928 = vsel %vm1927, %v1926, %v1751
    %v1931 = vrot.slane %v1925, 3
    %1932 = vrot.lane.b32.xlu0 %v1931, 32
    %v1933 = vpop.permute.xlu0 %1932
    %v1935 = vsel %vm227, %v1928, %v1933
    %1936 = vmatprep.subr.mxu0 0.0
    %1937 = vmatpush1.msra.mxu0 %v114
    %1938 = vmatprep.subr.mxu0 0.0
    %1939 = vmatpush1.msra.mxu0 %v115
    %1940 = vmatprep.subr.mxu0 0.0
    %1941 = vmatpush1.msra.mxu0 %v116
    %1942 = vmatprep.subr.mxu0 0.0
    %1943 = vmatpush1.msra.mxu0 %v117
    %1944 = vmatprep.subr.mxu0 0.0
    %1945 = vmatpush1.msra.mxu0 0.0
    %1946 = vmatprep.subr.mxu0 0.0
    %1947 = vmatpush1.msra.mxu0 0.0
    %1948 = vmatprep.subr.mxu0 0.0
    %1949 = vmatpush1.msra.mxu0 0.0
    %1950 = vmatprep.subr.mxu0 0.0
    %1951 = vmatpush1.msra.mxu0 0.0
    %1952 = vmatprep.subr.mxu0 0.0
    %1953 = vmatpush1.msra.mxu0 0.0
    %1954 = vmatprep.subr.mxu0 0.0
    %1955 = vmatpush1.msra.mxu0 0.0
    %1956 = vmatprep.subr.mxu0 0.0
    %1957 = vmatpush1.msra.mxu0 0.0
    %1958 = vmatprep.subr.mxu0 0.0
    %1959 = vmatpush1.msra.mxu0 0.0
    %1960 = vmatprep.subr.mxu0 0.0
    %1961 = vmatpush1.msra.mxu0 0.0
    %1962 = vmatprep.subr.mxu0 0.0
    %1963 = vmatpush1.msra.mxu0 0.0
    %1964 = vmatprep.subr.mxu0 0.0
    %1965 = vmatpush1.msra.mxu0 0.0
    %1966 = vmatprep.subr.mxu0 0.0
    %1967 = vmatpush1.msra.mxu0 0.0
    %1968 = vmatprep.subr.mxu0 0.0
    %1969 = vmatpush1.msra.mxu0 0.0
    %1970 = vmatprep.subr.mxu0 0.0
    %1971 = vmatpush1.msra.mxu0 0.0
    %1972 = vmatprep.subr.mxu0 0.0
    %1973 = vmatpush1.msra.mxu0 0.0
    %1974 = vmatprep.subr.mxu0 0.0
    %1975 = vmatpush1.msra.mxu0 0.0
    %1976 = vmatprep.subr.mxu0 0.0
    %1977 = vmatpush1.msra.mxu0 0.0
    %1978 = vmatprep.subr.mxu0 0.0
    %1979 = vmatpush1.msra.mxu0 0.0
    %1980 = vmatprep.subr.mxu0 0.0
    %1981 = vmatpush1.msra.mxu0 0.0
    %1982 = vmatprep.subr.mxu0 0.0
    %1983 = vmatpush1.msra.mxu0 0.0
    %1984 = vmatprep.subr.mxu0 0.0
    %1985 = vmatpush1.msra.mxu0 0.0
    %1986 = vmatprep.subr.mxu0 0.0
    %1987 = vmatpush1.msra.mxu0 0.0
    %1988 = vmatprep.subr.mxu0 0.0
    %1989 = vmatpush1.msra.mxu0 0.0
    %1990 = vmatprep.subr.mxu0 0.0
    %1991 = vmatpush1.msra.mxu0 0.0
    %1992 = vmatprep.subr.mxu0 0.0
    %1993 = vmatpush1.msra.mxu0 0.0
    %1994 = vmatprep.subr.mxu0 0.0
    %1995 = vmatpush1.msra.mxu0 0.0
    %1996 = vmatprep.subr.mxu0 0.0
    %1997 = vmatpush1.msra.mxu0 0.0
    %1998 = vmatprep.subr.mxu0 0.0
    %1999 = vmatpush1.msra.mxu0 0.0
    %2000 = vmatprep.mubr.f32.mxu0 0.0
    %2001 = vmatmul.mubr.f32.gmra.mrb[0].mxu0 %v1758
    %v2002 = vpop.f32.mrb[0].mxu0
    %v2003 = vadd.f32 %v225, %v2002
    %v2004 = vpop.f32.mrb[0].mxu0
    %2005 = vdwg.mxu0
    %v2006 = vxor.u32 %v2003, 2147483648
    %v2007 = vmul.f32 %v2006, 1.442695
    %v2008 = vpow.pop %v2007
    %v2009 = vadd.f32 %v2008, 1.0
    %v2010 = vrcp.pop %v2009
    %v2011 = vmul.f32 1.0, %v2010
    %v2012 = vrot.slane %v213, 6
    %v2013 = vrot.slane %v218, 5
    %v2014 = vsel %vm310, %v2013, %v2012
    %v2016 = vmul.f32 %v2011, %v2014
    %v2017 = vadd.f32 %v1735, %v2016
    %v2018 = vtanh.pop %v2017
    %v2019 = vsub.f32 %v2018, %v2014
    %2021 = vrot.lane.b32.xlu0 %v2019, 32
    %v2022 = vpop.permute.xlu0 %2021
    %v2024 = vmul.f32 %v2011, %v2022
    %v2026 = vrot.slane %v2024, 2
    %v2027 = vrot.slane %v2024, 3
    %2028 = vrot.lane.b32.xlu0 %v2026, 96
    %v2029 = vpop.permute.xlu0 %2028
    %2030 = vrot.lane.b32.xlu0 %v2027, 96
    %v2031 = vpop.permute.xlu0 %2030
    %v2034 = vadd.f32 %v213, %v2029
    %v2035 = vadd.f32 %v218, %v2031
    %v2038 = vrot.slane %v2034, 6
    %v2039 = vrot.slane %v2035, 5
    %v2040 = vsel %vm310, %v2039, %v2038
    %v2041 = vsel %vm227, %v2040, 0
    %2043 = vmatprep.subr.mxu0 0.0
    %2044 = vmatpush1.msra.mxu0 %v119
    %2045 = vmatprep.subr.mxu0 0.0
    %2046 = vmatpush1.msra.mxu0 %v120
    %2047 = vmatprep.subr.mxu0 0.0
    %2048 = vmatpush1.msra.mxu0 %v121
    %2049 = vmatprep.subr.mxu0 0.0
    %2050 = vmatpush1.msra.mxu0 %v122
    %2051 = vmatprep.subr.mxu0 0.0
    %2052 = vmatpush1.msra.mxu0 0.0
    %2053 = vmatprep.subr.mxu0 0.0
    %2054 = vmatpush1.msra.mxu0 0.0
    %2055 = vmatprep.subr.mxu0 0.0
    %2056 = vmatpush1.msra.mxu0 0.0
    %2057 = vmatprep.subr.mxu0 0.0
    %2058 = vmatpush1.msra.mxu0 0.0
    %2059 = vmatprep.subr.mxu0 0.0
    %2060 = vmatpush1.msra.mxu0 0.0
    %2061 = vmatprep.subr.mxu0 0.0
    %2062 = vmatpush1.msra.mxu0 0.0
    %2063 = vmatprep.subr.mxu0 0.0
    %2064 = vmatpush1.msra.mxu0 0.0
    %2065 = vmatprep.subr.mxu0 0.0
    %2066 = vmatpush1.msra.mxu0 0.0
    %2067 = vmatprep.subr.mxu0 0.0
    %2068 = vmatpush1.msra.mxu0 0.0
    %2069 = vmatprep.subr.mxu0 0.0
    %2070 = vmatpush1.msra.mxu0 0.0
    %2071 = vmatprep.subr.mxu0 0.0
    %2072 = vmatpush1.msra.mxu0 0.0
    %2073 = vmatprep.subr.mxu0 0.0
    %2074 = vmatpush1.msra.mxu0 0.0
    %2075 = vmatprep.subr.mxu0 0.0
    %2076 = vmatpush1.msra.mxu0 0.0
    %2077 = vmatprep.subr.mxu0 0.0
    %2078 = vmatpush1.msra.mxu0 0.0
    %2079 = vmatprep.subr.mxu0 0.0
    %2080 = vmatpush1.msra.mxu0 0.0
    %2081 = vmatprep.subr.mxu0 0.0
    %2082 = vmatpush1.msra.mxu0 0.0
    %2083 = vmatprep.subr.mxu0 0.0
    %2084 = vmatpush1.msra.mxu0 0.0
    %2085 = vmatprep.subr.mxu0 0.0
    %2086 = vmatpush1.msra.mxu0 0.0
    %2087 = vmatprep.subr.mxu0 0.0
    %2088 = vmatpush1.msra.mxu0 0.0
    %2089 = vmatprep.subr.mxu0 0.0
    %2090 = vmatpush1.msra.mxu0 0.0
    %2091 = vmatprep.subr.mxu0 0.0
    %2092 = vmatpush1.msra.mxu0 0.0
    %2093 = vmatprep.subr.mxu0 0.0
    %2094 = vmatpush1.msra.mxu0 0.0
    %2095 = vmatprep.subr.mxu0 0.0
    %2096 = vmatpush1.msra.mxu0 0.0
    %2097 = vmatprep.subr.mxu0 0.0
    %2098 = vmatpush1.msra.mxu0 0.0
    %2099 = vmatprep.subr.mxu0 0.0
    %2100 = vmatpush1.msra.mxu0 0.0
    %2101 = vmatprep.subr.mxu0 0.0
    %2102 = vmatpush1.msra.mxu0 0.0
    %2103 = vmatprep.subr.mxu0 0.0
    %2104 = vmatpush1.msra.mxu0 0.0
    %2105 = vmatprep.subr.mxu0 0.0
    %2106 = vmatpush1.msra.mxu0 0.0
    %2107 = vmatprep.mubr.f32.mxu0 0.0
    %2108 = vmatmul.mubr.f32.gmra.mrb[0].mxu0 %v2041
    %v2109 = vpop.f32.mrb[0].mxu0
    %v2110 = vadd.f32 %v336, %v2109
    %v2111 = vpop.f32.mrb[0].mxu0
    %2112 = vdwg.mxu0
    %v2113 = vsel %vm227, %v1925, 0
    %2115 = vmatprep.subr.mxu0 0.0
    %2116 = vmatpush1.msra.mxu0 %v124
    %2117 = vmatprep.subr.mxu0 0.0
    %2118 = vmatpush1.msra.mxu0 %v125
    %2119 = vmatprep.subr.mxu0 0.0
    %2120 = vmatpush1.msra.mxu0 %v126
    %2121 = vmatprep.subr.mxu0 0.0
    %2122 = vmatpush1.msra.mxu0 %v127
    %2123 = vmatprep.subr.mxu0 0.0
    %2124 = vmatpush1.msra.mxu0 0.0
    %2125 = vmatprep.subr.mxu0 0.0
    %2126 = vmatpush1.msra.mxu0 0.0
    %2127 = vmatprep.subr.mxu0 0.0
    %2128 = vmatpush1.msra.mxu0 0.0
    %2129 = vmatprep.subr.mxu0 0.0
    %2130 = vmatpush1.msra.mxu0 0.0
    %2131 = vmatprep.subr.mxu0 0.0
    %2132 = vmatpush1.msra.mxu0 0.0
    %2133 = vmatprep.subr.mxu0 0.0
    %2134 = vmatpush1.msra.mxu0 0.0
    %2135 = vmatprep.subr.mxu0 0.0
    %2136 = vmatpush1.msra.mxu0 0.0
    %2137 = vmatprep.subr.mxu0 0.0
    %2138 = vmatpush1.msra.mxu0 0.0
    %2139 = vmatprep.subr.mxu0 0.0
    %2140 = vmatpush1.msra.mxu0 0.0
    %2141 = vmatprep.subr.mxu0 0.0
    %2142 = vmatpush1.msra.mxu0 0.0
    %2143 = vmatprep.subr.mxu0 0.0
    %2144 = vmatpush1.msra.mxu0 0.0
    %2145 = vmatprep.subr.mxu0 0.0
    %2146 = vmatpush1.msra.mxu0 0.0
    %2147 = vmatprep.subr.mxu0 0.0
    %2148 = vmatpush1.msra.mxu0 0.0
    %2149 = vmatprep.subr.mxu0 0.0
    %2150 = vmatpush1.msra.mxu0 0.0
    %2151 = vmatprep.subr.mxu0 0.0
    %2152 = vmatpush1.msra.mxu0 0.0
    %2153 = vmatprep.subr.mxu0 0.0
    %2154 = vmatpush1.msra.mxu0 0.0
    %2155 = vmatprep.subr.mxu0 0.0
    %2156 = vmatpush1.msra.mxu0 0.0
    %2157 = vmatprep.subr.mxu0 0.0
    %2158 = vmatpush1.msra.mxu0 0.0
    %2159 = vmatprep.subr.mxu0 0.0
    %2160 = vmatpush1.msra.mxu0 0.0
    %2161 = vmatprep.subr.mxu0 0.0
    %2162 = vmatpush1.msra.mxu0 0.0
    %2163 = vmatprep.subr.mxu0 0.0
    %2164 = vmatpush1.msra.mxu0 0.0
    %2165 = vmatprep.subr.mxu0 0.0
    %2166 = vmatpush1.msra.mxu0 0.0
    %2167 = vmatprep.subr.mxu0 0.0
    %2168 = vmatpush1.msra.mxu0 0.0
    %2169 = vmatprep.subr.mxu0 0.0
    %2170 = vmatpush1.msra.mxu0 0.0
    %2171 = vmatprep.subr.mxu0 0.0
    %2172 = vmatpush1.msra.mxu0 0.0
    %2173 = vmatprep.subr.mxu0 0.0
    %2174 = vmatpush1.msra.mxu0 0.0
    %2175 = vmatprep.subr.mxu0 0.0
    %2176 = vmatpush1.msra.mxu0 0.0
    %2177 = vmatprep.subr.mxu0 0.0
    %2178 = vmatpush1.msra.mxu0 0.0
    %2179 = vmatprep.mubr.f32.mxu0 0.0
    %2180 = vmatmul.mubr.f32.gmra.mrb[0].mxu0 %v2113
    %v2181 = vpop.f32.mrb[0].mxu0
    %v2182 = vadd.f32 %v418, %v2181
    %v2183 = vpop.f32.mrb[0].mxu0
    %2184 = vdwg.mxu0
    %v2185 = vxor.u32 %v2182, 2147483648
    %v2186 = vmul.f32 %v2185, 1.442695
    %v2187 = vpow.pop %v2186
    %v2188 = vadd.f32 %v2187, 1.0
    %v2189 = vrcp.pop %v2188
    %v2190 = vmul.f32 1.0, %v2189
    %v2191 = vmul.f32 %v2190, %v2110
    %2193 = vrot.lane.b32.xlu0 %v2191, 32
    %v2194 = vpop.permute.xlu0 %2193
    %v2196 = vadd.f32 %v1914, %v2194
    %v2197 = vtanh.pop %v2196
    %2199 = vrot.lane.b32.xlu0 %v2110, 32
    %v2200 = vpop.permute.xlu0 %2199
    %v2202 = vsub.f32 %v2197, %v2200
    %v2203 = vmul.f32 %v2190, %v2202
    %2205 = vrot.lane.b32.xlu0 %v2203, 96
    %v2206 = vpop.permute.xlu0 %2205
    %v2208 = vadd.f32 %v2110, %v2206
    %v2209 = vrot.slane %v2035, 7
    %vm2210 = vcmask 1047559
    %v2211 = vsel %vm2210, %v2209, %v2034
    %v2214 = vrot.slane %v2208, 2
    %2215 = vrot.lane.b32.xlu0 %v2214, 32
    %v2216 = vpop.permute.xlu0 %2215
    %v2218 = vsel %vm227, %v2211, %v2216
    %2219 = vmatprep.subr.mxu0 0.0
    %2220 = vmatpush1.msra.mxu0 %v114
    %2221 = vmatprep.subr.mxu0 0.0
    %2222 = vmatpush1.msra.mxu0 %v115
    %2223 = vmatprep.subr.mxu0 0.0
    %2224 = vmatpush1.msra.mxu0 %v116
    %2225 = vmatprep.subr.mxu0 0.0
    %2226 = vmatpush1.msra.mxu0 %v117
    %2227 = vmatprep.subr.mxu0 0.0
    %2228 = vmatpush1.msra.mxu0 0.0
    %2229 = vmatprep.subr.mxu0 0.0
    %2230 = vmatpush1.msra.mxu0 0.0
    %2231 = vmatprep.subr.mxu0 0.0
    %2232 = vmatpush1.msra.mxu0 0.0
    %2233 = vmatprep.subr.mxu0 0.0
    %2234 = vmatpush1.msra.mxu0 0.0
    %2235 = vmatprep.subr.mxu0 0.0
    %2236 = vmatpush1.msra.mxu0 0.0
    %2237 = vmatprep.subr.mxu0 0.0
    %2238 = vmatpush1.msra.mxu0 0.0
    %2239 = vmatprep.subr.mxu0 0.0
    %2240 = vmatpush1.msra.mxu0 0.0
    %2241 = vmatprep.subr.mxu0 0.0
    %2242 = vmatpush1.msra.mxu0 0.0
    %2243 = vmatprep.subr.mxu0 0.0
    %2244 = vmatpush1.msra.mxu0 0.0
    %2245 = vmatprep.subr.mxu0 0.0
    %2246 = vmatpush1.msra.mxu0 0.0
    %2247 = vmatprep.subr.mxu0 0.0
    %2248 = vmatpush1.msra.mxu0 0.0
    %2249 = vmatprep.subr.mxu0 0.0
    %2250 = vmatpush1.msra.mxu0 0.0
    %2251 = vmatprep.subr.mxu0 0.0
    %2252 = vmatpush1.msra.mxu0 0.0
    %2253 = vmatprep.subr.mxu0 0.0
    %2254 = vmatpush1.msra.mxu0 0.0
    %2255 = vmatprep.subr.mxu0 0.0
    %2256 = vmatpush1.msra.mxu0 0.0
    %2257 = vmatprep.subr.mxu0 0.0
    %2258 = vmatpush1.msra.mxu0 0.0
    %2259 = vmatprep.subr.mxu0 0.0
    %2260 = vmatpush1.msra.mxu0 0.0
    %2261 = vmatprep.subr.mxu0 0.0
    %2262 = vmatpush1.msra.mxu0 0.0
    %2263 = vmatprep.subr.mxu0 0.0
    %2264 = vmatpush1.msra.mxu0 0.0
    %2265 = vmatprep.subr.mxu0 0.0
    %2266 = vmatpush1.msra.mxu0 0.0
    %2267 = vmatprep.subr.mxu0 0.0
    %2268 = vmatpush1.msra.mxu0 0.0
    %2269 = vmatprep.subr.mxu0 0.0
    %2270 = vmatpush1.msra.mxu0 0.0
    %2271 = vmatprep.subr.mxu0 0.0
    %2272 = vmatpush1.msra.mxu0 0.0
    %2273 = vmatprep.subr.mxu0 0.0
    %2274 = vmatpush1.msra.mxu0 0.0
    %2275 = vmatprep.subr.mxu0 0.0
    %2276 = vmatpush1.msra.mxu0 0.0
    %2277 = vmatprep.subr.mxu0 0.0
    %2278 = vmatpush1.msra.mxu0 0.0
    %2279 = vmatprep.subr.mxu0 0.0
    %2280 = vmatpush1.msra.mxu0 0.0
    %2281 = vmatprep.subr.mxu0 0.0
    %2282 = vmatpush1.msra.mxu0 0.0
    %2283 = vmatprep.mubr.f32.mxu0 0.0
    %2284 = vmatmul.mubr.f32.gmra.mrb[0].mxu0 %v2041
    %v2285 = vpop.f32.mrb[0].mxu0
    %v2286 = vadd.f32 %v225, %v2285
    %v2287 = vpop.f32.mrb[0].mxu0
    %2288 = vdwg.mxu0
    %v2289 = vxor.u32 %v2286, 2147483648
    %v2290 = vmul.f32 %v2289, 1.442695
    %v2291 = vpow.pop %v2290
    %v2292 = vadd.f32 %v2291, 1.0
    %v2293 = vrcp.pop %v2292
    %v2294 = vmul.f32 1.0, %v2293
    %v2295 = vrot.slane %v213, 7
    %v2296 = vrot.slane %v218, 6
    %v2297 = vsel %vm310, %v2296, %v2295
    %v2299 = vmul.f32 %v2294, %v2297
    %v2300 = vadd.f32 %v2018, %v2299
    %v2301 = vtanh.pop %v2300
    %v2302 = vsub.f32 %v2301, %v2297
    %2304 = vrot.lane.b32.xlu0 %v2302, 32
    %v2305 = vpop.permute.xlu0 %2304
    %v2307 = vmul.f32 %v2294, %v2305
    %v2309 = vrot.slane %v2307, 1
    %v2310 = vrot.slane %v2307, 2
    %2311 = vrot.lane.b32.xlu0 %v2309, 96
    %v2312 = vpop.permute.xlu0 %2311
    %2313 = vrot.lane.b32.xlu0 %v2310, 96
    %v2314 = vpop.permute.xlu0 %2313
    %v2317 = vadd.f32 %v213, %v2312
    %v2318 = vadd.f32 %v218, %v2314
    %v2321 = vrot.slane %v2317, 7
    %v2322 = vrot.slane %v2318, 6
    %v2323 = vsel %vm310, %v2322, %v2321
    %v2324 = vsel %vm227, %v2323, 0
    %2326 = vmatprep.subr.mxu0 0.0
    %2327 = vmatpush1.msra.mxu0 %v119
    %2328 = vmatprep.subr.mxu0 0.0
    %2329 = vmatpush1.msra.mxu0 %v120
    %2330 = vmatprep.subr.mxu0 0.0
    %2331 = vmatpush1.msra.mxu0 %v121
    %2332 = vmatprep.subr.mxu0 0.0
    %2333 = vmatpush1.msra.mxu0 %v122
    %2334 = vmatprep.subr.mxu0 0.0
    %2335 = vmatpush1.msra.mxu0 0.0
    %2336 = vmatprep.subr.mxu0 0.0
    %2337 = vmatpush1.msra.mxu0 0.0
    %2338 = vmatprep.subr.mxu0 0.0
    %2339 = vmatpush1.msra.mxu0 0.0
    %2340 = vmatprep.subr.mxu0 0.0
    %2341 = vmatpush1.msra.mxu0 0.0
    %2342 = vmatprep.subr.mxu0 0.0
    %2343 = vmatpush1.msra.mxu0 0.0
    %2344 = vmatprep.subr.mxu0 0.0
    %2345 = vmatpush1.msra.mxu0 0.0
    %2346 = vmatprep.subr.mxu0 0.0
    %2347 = vmatpush1.msra.mxu0 0.0
    %2348 = vmatprep.subr.mxu0 0.0
    %2349 = vmatpush1.msra.mxu0 0.0
    %2350 = vmatprep.subr.mxu0 0.0
    %2351 = vmatpush1.msra.mxu0 0.0
    %2352 = vmatprep.subr.mxu0 0.0
    %2353 = vmatpush1.msra.mxu0 0.0
    %2354 = vmatprep.subr.mxu0 0.0
    %2355 = vmatpush1.msra.mxu0 0.0
    %2356 = vmatprep.subr.mxu0 0.0
    %2357 = vmatpush1.msra.mxu0 0.0
    %2358 = vmatprep.subr.mxu0 0.0
    %2359 = vmatpush1.msra.mxu0 0.0
    %2360 = vmatprep.subr.mxu0 0.0
    %2361 = vmatpush1.msra.mxu0 0.0
    %2362 = vmatprep.subr.mxu0 0.0
    %2363 = vmatpush1.msra.mxu0 0.0
    %2364 = vmatprep.subr.mxu0 0.0
    %2365 = vmatpush1.msra.mxu0 0.0
    %2366 = vmatprep.subr.mxu0 0.0
    %2367 = vmatpush1.msra.mxu0 0.0
    %2368 = vmatprep.subr.mxu0 0.0
    %2369 = vmatpush1.msra.mxu0 0.0
    %2370 = vmatprep.subr.mxu0 0.0
    %2371 = vmatpush1.msra.mxu0 0.0
    %2372 = vmatprep.subr.mxu0 0.0
    %2373 = vmatpush1.msra.mxu0 0.0
    %2374 = vmatprep.subr.mxu0 0.0
    %2375 = vmatpush1.msra.mxu0 0.0
    %2376 = vmatprep.subr.mxu0 0.0
    %2377 = vmatpush1.msra.mxu0 0.0
    %2378 = vmatprep.subr.mxu0 0.0
    %2379 = vmatpush1.msra.mxu0 0.0
    %2380 = vmatprep.subr.mxu0 0.0
    %2381 = vmatpush1.msra.mxu0 0.0
    %2382 = vmatprep.subr.mxu0 0.0
    %2383 = vmatpush1.msra.mxu0 0.0
    %2384 = vmatprep.subr.mxu0 0.0
    %2385 = vmatpush1.msra.mxu0 0.0
    %2386 = vmatprep.subr.mxu0 0.0
    %2387 = vmatpush1.msra.mxu0 0.0
    %2388 = vmatprep.subr.mxu0 0.0
    %2389 = vmatpush1.msra.mxu0 0.0
    %2390 = vmatprep.mubr.f32.mxu0 0.0
    %2391 = vmatmul.mubr.f32.gmra.mrb[0].mxu0 %v2324
    %v2392 = vpop.f32.mrb[0].mxu0
    %v2393 = vadd.f32 %v336, %v2392
    %v2394 = vpop.f32.mrb[0].mxu0
    %2395 = vdwg.mxu0
    %v2396 = vsel %vm227, %v2208, 0
    %2398 = vmatprep.subr.mxu0 0.0
    %2399 = vmatpush1.msra.mxu0 %v124
    %2400 = vmatprep.subr.mxu0 0.0
    %2401 = vmatpush1.msra.mxu0 %v125
    %2402 = vmatprep.subr.mxu0 0.0
    %2403 = vmatpush1.msra.mxu0 %v126
    %2404 = vmatprep.subr.mxu0 0.0
    %2405 = vmatpush1.msra.mxu0 %v127
    %2406 = vmatprep.subr.mxu0 0.0
    %2407 = vmatpush1.msra.mxu0 0.0
    %2408 = vmatprep.subr.mxu0 0.0
    %2409 = vmatpush1.msra.mxu0 0.0
    %2410 = vmatprep.subr.mxu0 0.0
    %2411 = vmatpush1.msra.mxu0 0.0
    %2412 = vmatprep.subr.mxu0 0.0
    %2413 = vmatpush1.msra.mxu0 0.0
    %2414 = vmatprep.subr.mxu0 0.0
    %2415 = vmatpush1.msra.mxu0 0.0
    %2416 = vmatprep.subr.mxu0 0.0
    %2417 = vmatpush1.msra.mxu0 0.0
    %2418 = vmatprep.subr.mxu0 0.0
    %2419 = vmatpush1.msra.mxu0 0.0
    %2420 = vmatprep.subr.mxu0 0.0
    %2421 = vmatpush1.msra.mxu0 0.0
    %2422 = vmatprep.subr.mxu0 0.0
    %2423 = vmatpush1.msra.mxu0 0.0
    %2424 = vmatprep.subr.mxu0 0.0
    %2425 = vmatpush1.msra.mxu0 0.0
    %2426 = vmatprep.subr.mxu0 0.0
    %2427 = vmatpush1.msra.mxu0 0.0
    %2428 = vmatprep.subr.mxu0 0.0
    %2429 = vmatpush1.msra.mxu0 0.0
    %2430 = vmatprep.subr.mxu0 0.0
    %2431 = vmatpush1.msra.mxu0 0.0
    %2432 = vmatprep.subr.mxu0 0.0
    %2433 = vmatpush1.msra.mxu0 0.0
    %2434 = vmatprep.subr.mxu0 0.0
    %2435 = vmatpush1.msra.mxu0 0.0
    %2436 = vmatprep.subr.mxu0 0.0
    %2437 = vmatpush1.msra.mxu0 0.0
    %2438 = vmatprep.subr.mxu0 0.0
    %2439 = vmatpush1.msra.mxu0 0.0
    %2440 = vmatprep.subr.mxu0 0.0
    %2441 = vmatpush1.msra.mxu0 0.0
    %2442 = vmatprep.subr.mxu0 0.0
    %2443 = vmatpush1.msra.mxu0 0.0
    %2444 = vmatprep.subr.mxu0 0.0
    %2445 = vmatpush1.msra.mxu0 0.0
    %2446 = vmatprep.subr.mxu0 0.0
    %2447 = vmatpush1.msra.mxu0 0.0
    %2448 = vmatprep.subr.mxu0 0.0
    %2449 = vmatpush1.msra.mxu0 0.0
    %2450 = vmatprep.subr.mxu0 0.0
    %2451 = vmatpush1.msra.mxu0 0.0
    %2452 = vmatprep.subr.mxu0 0.0
    %2453 = vmatpush1.msra.mxu0 0.0
    %2454 = vmatprep.subr.mxu0 0.0
    %2455 = vmatpush1.msra.mxu0 0.0
    %2456 = vmatprep.subr.mxu0 0.0
    %2457 = vmatpush1.msra.mxu0 0.0
    %2458 = vmatprep.subr.mxu0 0.0
    %2459 = vmatpush1.msra.mxu0 0.0
    %2460 = vmatprep.subr.mxu0 0.0
    %2461 = vmatpush1.msra.mxu0 0.0
    %2462 = vmatprep.mubr.f32.mxu0 0.0
    %2463 = vmatmul.mubr.f32.gmra.mrb[0].mxu0 %v2396
    %v2464 = vpop.f32.mrb[0].mxu0
    %v2465 = vadd.f32 %v418, %v2464
    %v2466 = vpop.f32.mrb[0].mxu0
    %2467 = vdwg.mxu0
    %v2468 = vxor.u32 %v2465, 2147483648
    %v2469 = vmul.f32 %v2468, 1.442695
    %v2470 = vpow.pop %v2469
    %v2471 = vadd.f32 %v2470, 1.0
    %v2472 = vrcp.pop %v2471
    %v2473 = vmul.f32 1.0, %v2472
    %v2474 = vmul.f32 %v2473, %v2393
    %2476 = vrot.lane.b32.xlu0 %v2474, 32
    %v2477 = vpop.permute.xlu0 %2476
    %v2479 = vadd.f32 %v2197, %v2477
    %v2480 = vtanh.pop %v2479
    %2482 = vrot.lane.b32.xlu0 %v2393, 32
    %v2483 = vpop.permute.xlu0 %2482
    %v2485 = vsub.f32 %v2480, %v2483
    %v2486 = vmul.f32 %v2473, %v2485
    %2488 = vrot.lane.b32.xlu0 %v2486, 96
    %v2489 = vpop.permute.xlu0 %2488
    %v2491 = vadd.f32 %v2393, %v2489
    %v2492 = vrot.slane %v2318, 7
    %v2496 = vrot.slane %v2491, 1
    %2497 = vrot.lane.b32.xlu0 %v2496, 32
    %v2498 = vpop.permute.xlu0 %2497
    %v2500 = vsel %vm227, %v2317, %v2498
    %v2501 = vsel %vm227, %v2492, %v2498
    %v2504 = vunpack.c.l.s4 1966171168
    %v2505 = vunpack.c.0.s8 %v2504
    %v2506 = vlaneseq
    %v2507 = vshrl.u32 %v2506, 7
    %v2508 = vsub.s32 %v2505, %v2507
    %v2509 = vrot.slane %v523, %v2508
    %v2510 = vcombine.high %v2509, %v2509
    %v2512 = vunpack.c.l.s4 1966171168
    %v2513 = vunpack.c.0.s8 %v2512
    %v2514 = vlaneseq
    %v2515 = vshrl.u32 %v2514, 7
    %v2516 = vsub.s32 %v2513, %v2515
    %v2517 = vrot.slane %v2509, %v2516
    %v2519 = vunpack.c.l.s4 1966171168
    %v2520 = vunpack.c.0.s8 %v2519
    %v2521 = vlaneseq
    %v2522 = vshrl.u32 %v2521, 7
    %v2523 = vsub.s32 %v2520, %v2522
    %v2524 = vrot.slane %v2510, %v2523
    %v2529 = vunpack.c.l.s4 1966171168
    %v2530 = vunpack.c.0.s8 %v2529
    %v2531 = vlaneseq
    %v2532 = vshrl.u32 %v2531, 7
    %v2533 = vsub.s32 %v2530, %v2532
    %v2534 = vrot.slane %v803, %v2533
    %v2535 = vcombine.high %v2534, %v2534
    %v2537 = vunpack.c.l.s4 1966171168
    %v2538 = vunpack.c.0.s8 %v2537
    %v2539 = vlaneseq
    %v2540 = vshrl.u32 %v2539, 7
    %v2541 = vsub.s32 %v2538, %v2540
    %v2542 = vrot.slane %v2534, %v2541
    %v2544 = vunpack.c.l.s4 1966171168
    %v2545 = vunpack.c.0.s8 %v2544
    %v2546 = vlaneseq
    %v2547 = vshrl.u32 %v2546, 7
    %v2548 = vsub.s32 %v2545, %v2547
    %v2549 = vrot.slane %v2535, %v2548
    %v2550 = vcombine.high %v2542, %v2542
    %v2553 = vunpack.c.l.s4 1966171168
    %v2554 = vunpack.c.0.s8 %v2553
    %v2555 = vlaneseq
    %v2556 = vshrl.u32 %v2555, 7
    %v2557 = vsub.s32 %v2554, %v2556
    %v2558 = vrot.slane %v1086, %v2557
    %v2559 = vcombine.high %v2558, %v2558
    %v2561 = vunpack.c.l.s4 1966171168
    %v2562 = vunpack.c.0.s8 %v2561
    %v2563 = vlaneseq
    %v2564 = vshrl.u32 %v2563, 7
    %v2565 = vsub.s32 %v2562, %v2564
    %v2566 = vrot.slane %v2558, %v2565
    %v2568 = vunpack.c.l.s4 1966171168
    %v2569 = vunpack.c.0.s8 %v2568
    %v2570 = vlaneseq
    %v2571 = vshrl.u32 %v2570, 7
    %v2572 = vsub.s32 %v2569, %v2571
    %v2573 = vrot.slane %v2559, %v2572
    %v2574 = vcombine.high %v2566, %v2566
    %v2575 = vcombine.high %v2573, %v2573
    %v2577 = vcombine.high %v1369, %v1369
    %v2579 = vunpack.c.l.s4 1966171168
    %v2580 = vunpack.c.0.s8 %v2579
    %v2581 = vlaneseq
    %v2582 = vshrl.u32 %v2581, 7
    %v2583 = vsub.s32 %v2580, %v2582
    %v2584 = vrot.slane %v1369, %v2583
    %v2586 = vunpack.c.l.s4 1966171168
    %v2587 = vunpack.c.0.s8 %v2586
    %v2588 = vlaneseq
    %v2589 = vshrl.u32 %v2588, 7
    %v2590 = vsub.s32 %v2587, %v2589
    %v2591 = vrot.slane %v2577, %v2590
    %v2592 = vcombine.high %v2584, %v2584
    %v2594 = vunpack.c.l.s4 1966171168
    %v2595 = vunpack.c.0.s8 %v2594
    %v2596 = vlaneseq
    %v2597 = vshrl.u32 %v2596, 7
    %v2598 = vsub.s32 %v2595, %v2597
    %v2599 = vrot.slane %v2591, %v2598
    %v2601 = vunpack.c.l.s4 1966171168
    %v2602 = vunpack.c.0.s8 %v2601
    %v2603 = vlaneseq
    %v2604 = vshrl.u32 %v2603, 7
    %v2605 = vsub.s32 %v2602, %v2604
    %v2606 = vrot.slane %v2592, %v2605
    %v2607 = vcombine.high %v2606, %v2606
    %v2609 = vcombine.high %v1652, %v1652
    %v2611 = vunpack.c.l.s4 1966171168
    %v2612 = vunpack.c.0.s8 %v2611
    %v2613 = vlaneseq
    %v2614 = vshrl.u32 %v2613, 7
    %v2615 = vsub.s32 %v2612, %v2614
    %v2616 = vrot.slane %v2609, %v2615
    %v2617 = vcombine.high %v2616, %v2616
    %v2619 = vunpack.c.l.s4 1966171168
    %v2620 = vunpack.c.0.s8 %v2619
    %v2621 = vlaneseq
    %v2622 = vshrl.u32 %v2621, 7
    %v2623 = vsub.s32 %v2620, %v2622
    %v2624 = vrot.slane %v2616, %v2623
    %v2626 = vunpack.c.l.s4 1966171168
    %v2627 = vunpack.c.0.s8 %v2626
    %v2628 = vlaneseq
    %v2629 = vshrl.u32 %v2628, 7
    %v2630 = vsub.s32 %v2627, %v2629
    %v2631 = vrot.slane %v2617, %v2630
    %v2633 = vcombine.high %v1935, %v1935
    %v2635 = vunpack.c.l.s4 1966171168
    %v2636 = vunpack.c.0.s8 %v2635
    %v2637 = vlaneseq
    %v2638 = vshrl.u32 %v2637, 7
    %v2639 = vsub.s32 %v2636, %v2638
    %v2640 = vrot.slane %v2633, %v2639
    %v2641 = vcombine.high %v2640, %v2640
    %v2643 = vunpack.c.l.s4 1966171168
    %v2644 = vunpack.c.0.s8 %v2643
    %v2645 = vlaneseq
    %v2646 = vshrl.u32 %v2645, 7
    %v2647 = vsub.s32 %v2644, %v2646
    %v2648 = vrot.slane %v2640, %v2647
    %v2650 = vunpack.c.l.s4 1966171168
    %v2651 = vunpack.c.0.s8 %v2650
    %v2652 = vlaneseq
    %v2653 = vshrl.u32 %v2652, 7
    %v2654 = vsub.s32 %v2651, %v2653
    %v2655 = vrot.slane %v2641, %v2654
    %v2656 = vcombine.high %v2648, %v2648
    %v2658 = vcombine.high %v2218, %v2218
    %v2660 = vunpack.c.l.s4 1966171168
    %v2661 = vunpack.c.0.s8 %v2660
    %v2662 = vlaneseq
    %v2663 = vshrl.u32 %v2662, 7
    %v2664 = vsub.s32 %v2661, %v2663
    %v2665 = vrot.slane %v2658, %v2664
    %v2666 = vcombine.high %v2665, %v2665
    %v2668 = vunpack.c.l.s4 1966171168
    %v2669 = vunpack.c.0.s8 %v2668
    %v2670 = vlaneseq
    %v2671 = vshrl.u32 %v2670, 7
    %v2672 = vsub.s32 %v2669, %v2671
    %v2673 = vrot.slane %v2665, %v2672
    %v2675 = vunpack.c.l.s4 1966171168
    %v2676 = vunpack.c.0.s8 %v2675
    %v2677 = vlaneseq
    %v2678 = vshrl.u32 %v2677, 7
    %v2679 = vsub.s32 %v2676, %v2678
    %v2680 = vrot.slane %v2666, %v2679
    %v2681 = vcombine.high %v2673, %v2673
    %v2682 = vcombine.high %v2680, %v2680
    %v2685 = vcombine.high %v2500, %v2500
    %v2687 = vunpack.c.l.s4 1966171168
    %v2688 = vunpack.c.0.s8 %v2687
    %v2689 = vlaneseq
    %v2690 = vshrl.u32 %v2689, 7
    %v2691 = vsub.s32 %v2688, %v2690
    %v2692 = vrot.slane %v2685, %v2691
    %v2693 = vcombine.high %v2692, %v2692
    %v2695 = vunpack.c.l.s4 1966171168
    %v2696 = vunpack.c.0.s8 %v2695
    %v2697 = vlaneseq
    %v2698 = vshrl.u32 %v2697, 7
    %v2699 = vsub.s32 %v2696, %v2698
    %v2700 = vrot.slane %v2693, %v2699
    %v2701 = vcombine.high %v2700, %v2700
    %v2703 = vunpack.c.l.s4 1966171168
    %v2704 = vunpack.c.0.s8 %v2703
    %v2705 = vlaneseq
    %v2706 = vshrl.u32 %v2705, 7
    %v2707 = vsub.s32 %v2704, %v2706
    %v2708 = vrot.slane %v2501, %v2707
    %v2710 = vunpack.c.l.s4 1966171168
    %v2711 = vunpack.c.0.s8 %v2710
    %v2712 = vlaneseq
    %v2713 = vshrl.u32 %v2712, 7
    %v2714 = vsub.s32 %v2711, %v2713
    %v2715 = vrot.slane %v2708, %v2714
    %v2716 = vlaneseq
    %v2717 = vshrl.u32 %v2716, 7
    %v2718 = vsub.s32 0, %v2717
    %v2719 = vrot.slane %v2549, %v2718
    %v2720 = vlaneseq
    %v2721 = vshrl.u32 %v2720, 7
    %v2722 = vsub.s32 0, %v2721
    %v2723 = vrot.slane %v2550, %v2722
    %v2726 = vlaneseq
    %v2727 = vshrl.u32 %v2726, 7
    %v2728 = vsub.s32 0, %v2727
    %v2729 = vrot.slane %v2574, %v2728
    %v2730 = vlaneseq
    %v2731 = vshrl.u32 %v2730, 7
    %v2732 = vsub.s32 0, %v2731
    %v2733 = vrot.slane %v2575, %v2732
    %v2736 = vlaneseq
    %v2737 = vshrl.u32 %v2736, 7
    %v2738 = vsub.s32 0, %v2737
    %v2739 = vrot.slane %v2607, %v2738
    %v2740 = vlaneseq
    %v2741 = vshrl.u32 %v2740, 7
    %v2742 = vsub.s32 0, %v2741
    %v2743 = vrot.slane %v2599, %v2742
    %v2746 = vlaneseq
    %v2747 = vshrl.u32 %v2746, 7
    %v2748 = vsub.s32 0, %v2747
    %v2749 = vrot.slane %v2624, %v2748
    %v2750 = vlaneseq
    %v2751 = vshrl.u32 %v2750, 7
    %v2752 = vsub.s32 0, %v2751
    %v2753 = vrot.slane %v2631, %v2752
    %v2756 = vlaneseq
    %v2757 = vshrl.u32 %v2756, 7
    %v2758 = vsub.s32 0, %v2757
    %v2759 = vrot.slane %v2655, %v2758
    %v2760 = vlaneseq
    %v2761 = vshrl.u32 %v2760, 7
    %v2762 = vsub.s32 0, %v2761
    %v2763 = vrot.slane %v2656, %v2762
    %v2766 = vlaneseq
    %v2767 = vshrl.u32 %v2766, 7
    %v2768 = vsub.s32 0, %v2767
    %v2769 = vrot.slane %v2681, %v2768
    %v2770 = vlaneseq
    %v2771 = vshrl.u32 %v2770, 7
    %v2772 = vsub.s32 0, %v2771
    %v2773 = vrot.slane %v2682, %v2772
    %v2776 = vlaneseq
    %v2777 = vshrl.u32 %v2776, 7
    %v2778 = vsub.s32 0, %v2777
    %v2779 = vrot.slane %v2701, %v2778
    %v2780 = vlaneseq
    %v2781 = vshrl.u32 %v2780, 7
    %v2782 = vsub.s32 0, %v2781
    %v2783 = vrot.slane %v2715, %v2782
    %vm2786 = vcmask 1040384
    %v2787 = vsel %vm2786, %v2517, %v2719
    %v2788 = vsel %vm2786, %v2524, %v2723
    %vm2789 = vcmask 1041408
    %v2790 = vsel %vm2789, %v2787, %v2729
    %v2791 = vsel %vm2789, %v2788, %v2733
    %vm2792 = vcmask 1042432
    %v2793 = vsel %vm2792, %v2790, %v2739
    %v2794 = vsel %vm2792, %v2791, %v2743
    %vm2795 = vcmask 1043456
    %v2796 = vsel %vm2795, %v2793, %v2749
    %v2797 = vsel %vm2795, %v2794, %v2753
    %vm2798 = vcmask 1044480
    %v2799 = vsel %vm2798, %v2796, %v2759
    %v2800 = vsel %vm2798, %v2797, %v2763
    %vm2801 = vcmask 1045504
    %v2802 = vsel %vm2801, %v2799, %v2769
    %v2803 = vsel %vm2801, %v2800, %v2773
    %vm2804 = vcmask 1046528
    %v2805 = vsel %vm2804, %v2802, %v2779
    %v2806 = vsel %vm2804, %v2803, %v2783
    %vm2807 = vcmask 523264
    %2808 = vst.msk [vmem:[#allocation13] sm:$0xff] %vm2807, %v2805
    %2809 = vst.msk [vmem:[#allocation13 + $0x8] sm:$0xff] %vm2807, %v2806
    %vm2810 = vcmask 523271
    %2811 = vst.msk [vmem:[#allocation2 - $0x7] sm:$0x80] %vm2810, %v2500
    %vm2812 = vcmask 516096
    %2813 = vst.msk [vmem:[#allocation2 + $0x1] sm:$0x1] %vm2812, %v2501
    %v2814 = vsel %vm227, %v2301, %v2480
    %vm2815 = vcmask 517120
    %2816 = vst.msk [vmem:[#allocation3] sm:$0x3] %vm2815, %v2814
    // Predicated region
    $region62: #{tpu_custom_call.1} parent=1 // pred_check
      %p2817 = pneg %p104
    $region63: #{tpu_custom_call.1} parent=1 // pred_check_branch
      %2819 = sbr.rel (%p2817) target = $region65
    $region64: #{tpu_custom_call.1} parent=1 // pred_region
      %v2820 = vld [vmem:[#allocation3] sm:$0x3]
      %2821 = vst.msk [vmem:[#allocation14] sm:$0x3] %vm2815, %v2820
    $region65: #{tpu_custom_call.1} parent=1 // pred_fallthru
      _
    // Predicated region
    $region66: #{tpu_custom_call.1} parent=1 // pred_check
      _
    $region67: #{tpu_custom_call.1} parent=1 // pred_check_branch
      %2823 = sbr.rel (0) target = $region69
    $region68: #{tpu_custom_call.1} parent=1 // pred_region
      %s2825 = ssub.s32 256, 256
      %2826 = vsyncadd [#allocation6], %s2825
      %s2827 = sshll.u32 [#allocation13], 4
      %s2828 = int_to_ptr.vmem [resolvable:$true] %s2827
      %2833 = dma.vmem_to_hbm [thread:$0]  %s2828, 256, %s9, [#allocation6], 128, 128, 8
    $region69: #{tpu_custom_call.1} parent=1 // pred_fallthru
      _
    // Predicated region
    $region70: #{tpu_custom_call.1} parent=1 // pred_check
      _
    $region71: #{tpu_custom_call.1} parent=1 // pred_check_branch
      %2835 = sbr.rel (0) target = $region73
    $region72: #{tpu_custom_call.1} parent=1 // pred_region
      %s2837 = ssub.s32 32, 32
      %2838 = vsyncadd [#allocation15], %s2837
      %s2840 = sshll.u32 [#allocation14], 4
      %s2841 = int_to_ptr.vmem [resolvable:$true] %s2840
      %2843 = dma.vmem_to_hbm [thread:$0]  %s2841, 32, %s10, [#allocation15]
    $region73: #{tpu_custom_call.1} parent=1 // pred_fallthru
      _
    // Predicated region
    $region74: #{tpu_custom_call.1} parent=1 // pred_check
      _
    $region75: #{tpu_custom_call.1} parent=1 // pred_check_branch
      %2845 = sbr.rel (0) target = $region77
    $region76: #{tpu_custom_call.1} parent=1 // pred_region
      %2846 = dma.done [#allocation6], 256
    $region77: #{tpu_custom_call.1} parent=1 // pred_fallthru
      _
    // Predicated region
    $region78: #{tpu_custom_call.1} parent=1 // pred_check
      _
    $region79: #{tpu_custom_call.1} parent=1 // pred_check_branch
      %2848 = sbr.rel (0) target = $region81
    $region80: #{tpu_custom_call.1} parent=1 // pred_region
      %2849 = dma.done [#allocation15], 32
    $region81: #{tpu_custom_call.1} parent=1 // pred_fallthru
      _
    %2850 = vsyncpa [#allocation5], 1
    %2851 = vsyncpa [#allocation8], 1
    %2852 = vsyncpa [#allocation11], 1
    %2853 = vsyncpa [#allocation6], 1
    %2854 = vsyncpa [#allocation15], 1

</llo_original>
